<compile_context>
chip_gen: v7x
topology: tpu7x:2x2x1
jax: 0.10.0
libtpu: 0.0.40
codegen_flags: <defaults>
</compile_context>

<pallas_src>
import functools

import jax
import jax.numpy as jnp
from jax.experimental import pallas as pl
from jax.experimental.pallas import tpu as pltpu


# -----------------------------------------------------------------------------
# Kernel 1: Conv3d (3x3x3, pad 1) + folded BatchNorm + ReLU, flat-shift im2col
# done in VMEM.  Inputs/weights bf16, f32 MXU accumulation, bf16 store.
# -----------------------------------------------------------------------------
def _conv3d_bn_relu_kernel(x_ref, xh_ref, w_ref, b_ref, o_ref, *, taps):
    # x_ref/xh_ref: (Cin, tn) current + halo tile; w_ref: (Cout, 27*Cin) bf16
    tn = o_ref.shape[1]
    win = jnp.concatenate([x_ref[...], xh_ref[...]], axis=1)          # (Cin, 2*tn)
    patches = jnp.concatenate([win[:, d:d + tn] for d in taps], axis=0)  # (27*Cin, tn)
    acc = jnp.dot(w_ref[...], patches, preferred_element_type=jnp.float32)  # (Cout, tn)
    o_ref[...] = jnp.maximum(acc + b_ref[...], 0.0).astype(o_ref.dtype)


def _conv3d_bn_relu_layer(x, w_flat, bias, *, tile_n=1024):
    """x: (Cin, B, T, H, W) bf16; w_flat: (Cout, 27*Cin) bf16 (BN scale folded);
    bias: (Cout, 1) f32."""
    Cin, B, T, H, W = x.shape
    Cout, K = w_flat.shape
    Tp, Hp, Wp = T + 2, H + 2, W + 2
    L = Tp * Hp * Wp
    N = B * L

    # Pad once; in the flattened (t, h, w) axis every tap is a contiguous shift.
    xp = jnp.pad(x, ((0, 0), (0, 0), (1, 1), (1, 1), (1, 1))).reshape(Cin, N)

    d_max = 2 * Hp * Wp + 2 * Wp + 2          # largest tap shift
    # TODO(synk): for very large H*W (tn >= 2*Hp*Wp blows VMEM) switch to 2-D
    # spatial tiling with manual halo DMA instead of the flat-shift trick.
    tn = max(tile_n, d_max)
    tn = ((tn + 127) // 128) * 128            # lane-aligned tile
    n_tiles = pl.cdiv(N, tn)
    Np = n_tiles * tn
    # one extra zero tile so the halo block (i+1) is always in range
    xp = jnp.pad(xp, ((0, 0), (0, Np + tn - N)))

    taps = tuple(kt * Hp * Wp + kh * Wp + kw
                 for kt in range(3) for kh in range(3) for kw in range(3))
    kernel = functools.partial(_conv3d_bn_relu_kernel, taps=taps)

    out = pl.pallas_call(
        kernel,
        out_shape=jax.ShapeDtypeStruct((Cout, Np), jnp.bfloat16),
        grid_spec=pltpu.PrefetchScalarGridSpec(
            num_scalar_prefetch=0,
            grid=(n_tiles,),
            in_specs=[
                pl.BlockSpec((Cin, tn), lambda i: (0, i)),       # current tile
                pl.BlockSpec((Cin, tn), lambda i: (0, i + 1)),   # halo tile
                pl.BlockSpec((Cout, K), lambda i: (0, 0)),       # weights (resident)
                pl.BlockSpec((Cout, 1), lambda i: (0, 0)),       # folded BN bias
            ],
            out_specs=pl.BlockSpec((Cout, tn), lambda i: (0, i)),
        ),
        compiler_params=pltpu.CompilerParams(dimension_semantics=("parallel",)),
    )(xp, xp, w_flat, bias)

    # Outputs are laid out with padded strides; crop the valid region.
    out = out[:, :N].reshape(Cout, B, Tp, Hp, Wp)[:, :, :T, :H, :W]
    return out


# -----------------------------------------------------------------------------
# Kernel 2: temporal head = MHA + bi-GRU + temporal-attention MLP + weighted sum.
# Input is the already-pooled (B, T, C) tensor (HW mean hoisted to the wrapper).
# -----------------------------------------------------------------------------
def _temporal_head_kernel(
    x_ref, wqkv_ref, bqkv_ref, wo_ref, bo_ref,
    wih_ref, bih_ref, whh_ref, bhh_ref,
    tw1_ref, tb1_ref, tw2_ref, tb2_ref,
    out_ref, *, num_heads,
):
    B, T, C = x_ref.shape
    dh = C // num_heads
    x2d = x_ref[...].reshape(B * T, C)

    # ---- multi-head self-attention: fused QKV projection, one matmul ----
    qkv = (jnp.dot(x2d, wqkv_ref[...], preferred_element_type=jnp.float32)
           + bqkv_ref[...])                                            # (B*T, 3C)
    q = qkv[:, :C].reshape(B, T, C)
    k = qkv[:, C:2 * C].reshape(B, T, C)
    v = qkv[:, 2 * C:].reshape(B, T, C)
    scale = 1.0 / (float(dh) ** 0.5)

    # TODO(synk): per-head loop kept (dh is tiny); a single (B*nh)-batched einsum
    # needs a non-minor transpose / multi-batch dot_general that is riskier to lower.
    head_outs = []
    for h in range(num_heads):
        sl = slice(h * dh, (h + 1) * dh)
        s = jnp.einsum("bqd,bkd->bqk", q[:, :, sl] * scale, k[:, :, sl],
                       preferred_element_type=jnp.float32)             # (B, T, T)
        p = jax.nn.softmax(s, axis=-1)
        head_outs.append(jnp.einsum("bqk,bkd->bqd", p, v[:, :, sl],
                                    preferred_element_type=jnp.float32))
    attn2d = jnp.concatenate(head_outs, axis=-1).reshape(B * T, C)
    attn2d = (jnp.dot(attn2d, wo_ref[...], preferred_element_type=jnp.float32)
              + bo_ref[...])                                            # (B*T, C)

    # ---- bidirectional GRU, both directions in one unrolled loop ----
    # input-gate projections for fwd|bwd hoisted into one (B*T, C) x (C, 6C) matmul
    xg = (jnp.dot(attn2d, wih_ref[...], preferred_element_type=jnp.float32)
          + bih_ref[...])                                               # (B*T, 6C)
    xg_f = xg[:, :3 * C].reshape(B, T, 3 * C)
    xg_b = xg[:, 3 * C:].reshape(B, T, 3 * C)

    h = jnp.zeros((2, B, C), jnp.float32)                               # [fwd, bwd]
    fwd_outs = [None] * T
    bwd_outs = [None] * T
    for step in range(T):
        tb = T - 1 - step
        xt = jnp.stack([xg_f[:, step, :], xg_b[:, tb, :]], axis=0)      # (2, B, 3C)
        # fused recurrent gate projection for both directions (r|z|n)
        hg = (jnp.einsum("dbc,dcg->dbg", h, whh_ref[...],
                         preferred_element_type=jnp.float32)
              + bhh_ref[...])                                           # (2, B, 3C)
        r = jax.nn.sigmoid(xt[..., :C] + hg[..., :C])
        z = jax.nn.sigmoid(xt[..., C:2 * C] + hg[..., C:2 * C])
        n = jnp.tanh(xt[..., 2 * C:] + r * hg[..., 2 * C:])
        h = (1.0 - z) * n + z * h
        fwd_outs[step] = h[0]
        bwd_outs[tb] = h[1]

    gru_out = jnp.concatenate(
        [jnp.concatenate([fwd_outs[t], bwd_outs[t]], axis=-1)[:, None, :]
         for t in range(T)],
        axis=1)                                                         # (B, T, 2C)

    # ---- temporal attention MLP + weighted sum over T ----
    g2d = gru_out.reshape(B * T, 2 * C)
    hid = jnp.maximum(
        jnp.dot(g2d, tw1_ref[...], preferred_element_type=jnp.float32) + tb1_ref[...],
        0.0)
    logit = jnp.dot(hid, tw2_ref[...], preferred_element_type=jnp.float32) + tb2_ref[...]
    tw = jax.nn.sigmoid(logit).reshape(B, T, 1)
    out_ref[...] = jnp.sum(gru_out * tw, axis=1)                        # (B, 2C)


def _temporal_head(pooled, mha, gru, tattn, num_heads):
    B, T, C = pooled.shape
    kernel = functools.partial(_temporal_head_kernel, num_heads=num_heads)
    return pl.pallas_call(
        kernel,
        out_shape=jax.ShapeDtypeStruct((B, 2 * C), jnp.float32),
    )(pooled, *mha, *gru, *tattn)


# -----------------------------------------------------------------------------
# Kernel 3: spatial attention (two 1x1 convs) + final fusion in (B, C, HW)
# layout.  Grid = (B, HW tiles); one lane-dense matmul per step; x streamed bf16.
# -----------------------------------------------------------------------------
def _spatial_fusion_kernel(x_ref, w1_ref, b1_ref, w2_ref, b2_ref, att_ref, o_ref):
    xb = x_ref[...].astype(jnp.float32)                                 # (C, thw)
    hm = jnp.maximum(
        jnp.dot(w1_ref[...], xb, preferred_element_type=jnp.float32) + b1_ref[...], 0.0)
    sw = jax.nn.sigmoid(
        jnp.dot(w2_ref[...], hm, preferred_element_type=jnp.float32) + b2_ref[...])  # (1, thw)
    o_ref[...] = (xb * sw + att_ref[...]).astype(o_ref.dtype)


def _spatial_fusion(x_bchw, w1, b1, w2, b2, att03, *, tile_hw=2048):
    B, C, H, W = x_bchw.shape
    HW = H * W
    x = x_bchw.reshape(B, C, HW).astype(jnp.bfloat16)                   # bf16 streaming

    if HW > tile_hw:
        thw = tile_hw                                                   # multiple of 128
        n_tiles = pl.cdiv(HW, thw)
        HWp = n_tiles * thw
        x = jnp.pad(x, ((0, 0), (0, 0), (0, HWp - HW)))
    else:
        thw, n_tiles, HWp = HW, 1, HW

    out = pl.pallas_call(
        _spatial_fusion_kernel,
        out_shape=jax.ShapeDtypeStruct((B, C, HWp), jnp.float32),
        grid_spec=pltpu.PrefetchScalarGridSpec(
            num_scalar_prefetch=0,
            grid=(B, n_tiles),
            in_specs=[
                pl.BlockSpec((None, C, thw), lambda b, i: (b, 0, i)),
                pl.BlockSpec(w1.shape, lambda b, i: (0, 0)),
                pl.BlockSpec(b1.shape, lambda b, i: (0, 0)),
                pl.BlockSpec(w2.shape, lambda b, i: (0, 0)),
                pl.BlockSpec(b2.shape, lambda b, i: (0, 0)),
                pl.BlockSpec((None, C, 1), lambda b, i: (b, 0, 0)),
            ],
            out_specs=pl.BlockSpec((None, C, thw), lambda b, i: (b, 0, i)),
        ),
        compiler_params=pltpu.CompilerParams(
            dimension_semantics=("parallel", "parallel")),
    )(x, w1, b1, w2, b2, att03)
    return out[:, :, :HW].reshape(B, C, H, W)


# -----------------------------------------------------------------------------
# Parameter initialization (deterministic; PyTorch layouts converted here).
# -----------------------------------------------------------------------------
def init_params(key, C, num_heads=8):
    keys = iter(jax.random.split(key, 64))

    def nrm(shape, s=0.05):
        return (s * jax.random.normal(next(keys), shape)).astype(jnp.float32)

    def conv_bn_layer(cin, cout):
        w = nrm((cout, cin, 3, 3, 3))          # torch Conv3d weight layout
        cb = nrm((cout,))
        gamma = 1.0 + nrm((cout,), 0.1)
        beta = nrm((cout,), 0.1)
        mean = nrm((cout,), 0.1)
        var = 1.0 + jnp.abs(nrm((cout,), 0.1))
        scale = gamma / jnp.sqrt(var + 1e-5)
        bias = (cb - mean) * scale + beta      # BN (eval) folded with conv bias
        # (Cout,Cin,kt,kh,kw) -> (Cout,kt,kh,kw,Cin) -> (Cout, 27*Cin), tap-major
        # to match the in-kernel patch ordering; fold BN scale into the rows.
        w_flat = jnp.transpose(w, (0, 2, 3, 4, 1)).reshape(cout, 27 * cin)
        w_flat = (w_flat * scale[:, None]).astype(jnp.bfloat16)
        return w_flat, bias.reshape(cout, 1)

    conv3d = [conv_bn_layer(C, C // 2), conv_bn_layer(C // 2, C), conv_bn_layer(C, C)]

    # nn.MultiheadAttention(C, num_heads, batch_first=True): fused QKV weight
    in_w = nrm((3 * C, C))
    in_b = nrm((3 * C,))
    wqkv = in_w.T                                   # (C, 3C), columns [q|k|v]
    bqkv = in_b.reshape(1, 3 * C)
    wo = nrm((C, C)).T
    bo = nrm((C,)).reshape(1, C)
    mha = (wqkv, bqkv, wo, bo)

    # nn.GRU(C, C, bidirectional=True); gate order r, z, n (column blocks after .T)
    def gru_dir():
        return (nrm((3 * C, C)), nrm((3 * C, C)), nrm((3 * C,)), nrm((3 * C,)))

    wih_f, whh_f, bih_f, bhh_f = gru_dir()
    wih_b, whh_b, bih_b, bhh_b = gru_dir()
    wih_fb = jnp.concatenate([wih_f.T, wih_b.T], axis=1)        # (C, 6C) [fwd|bwd]
    bih_fb = jnp.concatenate([bih_f, bih_b]).reshape(1, 6 * C)
    whh_st = jnp.stack([whh_f.T, whh_b.T], axis=0)              # (2, C, 3C)
    bhh_st = jnp.stack([bhh_f, bhh_b], axis=0).reshape(2, 1, 3 * C)
    gru = (wih_fb, bih_fb, whh_st, bhh_st)

    # temporal attention MLP: Linear(2C, C//4) -> ReLU -> Linear(C//4, 1) -> Sigmoid
    tw1 = nrm((C // 4, 2 * C)).T
    tb1 = nrm((C // 4,)).reshape(1, C // 4)
    tw2 = nrm((1, C // 4)).T
    tb2 = nrm((1,)).reshape(1, 1)
    tattn = (tw1, tb1, tw2, tb2)

    # spatial attention: Conv2d(C, C//16, 1) -> ReLU -> Conv2d(C//16, 1, 1) -> Sigmoid
    sw1 = nrm((C // 16, C, 1, 1)).reshape(C // 16, C)
    sb1 = nrm((C // 16,)).reshape(C // 16, 1)
    sw2 = nrm((1, C // 16, 1, 1)).reshape(1, C // 16)
    sb2 = nrm((1,)).reshape(1, 1)
    sattn = (sw1, sb1, sw2, sb2)

    return dict(conv3d=conv3d, mha=mha, gru=gru, tattn=tattn, sattn=sattn,
                num_heads=num_heads)


# -----------------------------------------------------------------------------
# Forward wrapper (mirrors EnhancedTemporalSpatialFusion.forward).
# -----------------------------------------------------------------------------
def enhanced_temporal_spatial_fusion(features_sequence, params, seq_len=5):
    seq = list(features_sequence)
    while len(seq) < seq_len:            # repeat last frame, like the reference
        seq.append(seq[-1])
    seq = seq[-seq_len:]

    B, C, H, W = seq[0].shape

    # torch.stack(..., dim=2) -> (B, C, T, H, W); move C to front for the
    # channels-on-sublanes conv layout, cast activations to bf16.
    x = jnp.stack(seq, axis=2)                                   # (B, C, T, H, W)
    x = jnp.transpose(x, (1, 0, 2, 3, 4)).astype(jnp.bfloat16)   # (C, B, T, H, W)

    feat = x
    for w_flat, bias in params["conv3d"]:
        feat = _conv3d_bn_relu_layer(feat, w_flat, bias)         # (C*, B, T, H, W)

    # adaptive_avg_pool3d(., (T,1,1)) hoisted out of the kernel: mean over HxW.
    pooled = jnp.transpose(jnp.mean(feat.astype(jnp.float32), axis=(3, 4)),
                           (1, 2, 0))                            # (B, T, C)

    attended = _temporal_head(pooled, params["mha"], params["gru"],
                              params["tattn"], params["num_heads"])   # (B, 2C)

    # TODO(synk): reference broadcasts (B,2C,H,W) against (B,C,H,W) (shape error
    # in PyTorch); use the forward-direction C channels instead.
    att03 = (0.3 * attended[:, :C]).reshape(B, C, 1).astype(jnp.float32)

    sw1, sb1, sw2, sb2 = params["sattn"]
    out = _spatial_fusion(seq[-1], sw1, sb1, sw2, sb2, att03)    # (B, C, H, W)
    return out


# -----------------------------------------------------------------------------
if __name__ == "__main__":
    key = jax.random.PRNGKey(0)
    B, C, H, W = 2, 32, 16, 16
    seq_len, num_heads = 5, 8

    pkey, xkey = jax.random.split(key)
    params = init_params(pkey, C, num_heads=num_heads)

    # 4 frames < seq_len=5 to exercise the repeat-last-frame padding path.
    fkeys = jax.random.split(xkey, 4)
    frames = [jax.random.normal(k, (B, C, H, W), jnp.float32) for k in fkeys]

    out = enhanced_temporal_spatial_fusion(frames, params, seq_len=seq_len)
    out = jax.block_until_ready(out)

    assert out.shape == (B, C, H, W), out.shape
    assert bool(jnp.all(jnp.isfinite(out)))
    print("KERNEL_OK")
</pallas_src>

<mosaic_0001>
module attributes {stable_mosaic.version = 11 : i64} {
  func.func @_conv3d_bn_relu_kernel(%arg0: i32, %arg1: memref<32x1024xbf16, #tpu.memory_space<vmem>>, %arg2: memref<32x1024xbf16, #tpu.memory_space<vmem>>, %arg3: memref<16x864xbf16, #tpu.memory_space<vmem>>, %arg4: memref<16x1xf32, #tpu.memory_space<vmem>>, %arg5: memref<16x1024xbf16, #tpu.memory_space<vmem>>) attributes {dimension_semantics = [#tpu.dimension_semantics<parallel>], iteration_bounds = array<i64: 5>, scalar_prefetch = 0 : i64, scratch_operands = 0 : i64, tpu.core_type = #tpu.core_type<tc>, window_params = [{transform_indices = @transform_0, window_bounds = array<i64: 32, 1024>}, {transform_indices = @transform_1, window_bounds = array<i64: 32, 1024>}, {pipeline_mode = #tpu.pipeline_mode<synchronous>, transform_indices = @transform_2, window_bounds = array<i64: 16, 864>}, {pipeline_mode = #tpu.pipeline_mode<synchronous>, transform_indices = @transform_3, window_bounds = array<i64: 16, 1>}, {transform_indices = @transform_4, window_bounds = array<i64: 16, 1024>}]} {
    %c0 = arith.constant 0 : index
    %c0_0 = arith.constant 0 : index
    %0 = vector.load %arg1[%c0, %c0_0] : memref<32x1024xbf16, #tpu.memory_space<vmem>>, vector<32x1024xbf16>
    %c0_1 = arith.constant 0 : index
    %c0_2 = arith.constant 0 : index
    %1 = vector.load %arg2[%c0_1, %c0_2] : memref<32x1024xbf16, #tpu.memory_space<vmem>>, vector<32x1024xbf16>
    %2 = tpu.concatenate %0, %1 in 1 : vector<32x1024xbf16>, vector<32x1024xbf16> -> vector<32x2048xbf16>
    %3 = vector.extract_strided_slice %2 {offsets = [0, 0], sizes = [32, 1024], strides = [1, 1]} : vector<32x2048xbf16> to vector<32x1024xbf16>
    %4 = vector.extract_strided_slice %2 {offsets = [0, 1], sizes = [32, 1024], strides = [1, 1]} : vector<32x2048xbf16> to vector<32x1024xbf16>
    %5 = vector.extract_strided_slice %2 {offsets = [0, 2], sizes = [32, 1024], strides = [1, 1]} : vector<32x2048xbf16> to vector<32x1024xbf16>
    %6 = vector.extract_strided_slice %2 {offsets = [0, 18], sizes = [32, 1024], strides = [1, 1]} : vector<32x2048xbf16> to vector<32x1024xbf16>
    %7 = vector.extract_strided_slice %2 {offsets = [0, 19], sizes = [32, 1024], strides = [1, 1]} : vector<32x2048xbf16> to vector<32x1024xbf16>
    %8 = vector.extract_strided_slice %2 {offsets = [0, 20], sizes = [32, 1024], strides = [1, 1]} : vector<32x2048xbf16> to vector<32x1024xbf16>
    %9 = vector.extract_strided_slice %2 {offsets = [0, 36], sizes = [32, 1024], strides = [1, 1]} : vector<32x2048xbf16> to vector<32x1024xbf16>
    %10 = vector.extract_strided_slice %2 {offsets = [0, 37], sizes = [32, 1024], strides = [1, 1]} : vector<32x2048xbf16> to vector<32x1024xbf16>
    %11 = vector.extract_strided_slice %2 {offsets = [0, 38], sizes = [32, 1024], strides = [1, 1]} : vector<32x2048xbf16> to vector<32x1024xbf16>
    %12 = vector.extract_strided_slice %2 {offsets = [0, 324], sizes = [32, 1024], strides = [1, 1]} : vector<32x2048xbf16> to vector<32x1024xbf16>
    %13 = vector.extract_strided_slice %2 {offsets = [0, 325], sizes = [32, 1024], strides = [1, 1]} : vector<32x2048xbf16> to vector<32x1024xbf16>
    %14 = vector.extract_strided_slice %2 {offsets = [0, 326], sizes = [32, 1024], strides = [1, 1]} : vector<32x2048xbf16> to vector<32x1024xbf16>
    %15 = vector.extract_strided_slice %2 {offsets = [0, 342], sizes = [32, 1024], strides = [1, 1]} : vector<32x2048xbf16> to vector<32x1024xbf16>
    %16 = vector.extract_strided_slice %2 {offsets = [0, 343], sizes = [32, 1024], strides = [1, 1]} : vector<32x2048xbf16> to vector<32x1024xbf16>
    %17 = vector.extract_strided_slice %2 {offsets = [0, 344], sizes = [32, 1024], strides = [1, 1]} : vector<32x2048xbf16> to vector<32x1024xbf16>
    %18 = vector.extract_strided_slice %2 {offsets = [0, 360], sizes = [32, 1024], strides = [1, 1]} : vector<32x2048xbf16> to vector<32x1024xbf16>
    %19 = vector.extract_strided_slice %2 {offsets = [0, 361], sizes = [32, 1024], strides = [1, 1]} : vector<32x2048xbf16> to vector<32x1024xbf16>
    %20 = vector.extract_strided_slice %2 {offsets = [0, 362], sizes = [32, 1024], strides = [1, 1]} : vector<32x2048xbf16> to vector<32x1024xbf16>
    %21 = vector.extract_strided_slice %2 {offsets = [0, 648], sizes = [32, 1024], strides = [1, 1]} : vector<32x2048xbf16> to vector<32x1024xbf16>
    %22 = vector.extract_strided_slice %2 {offsets = [0, 649], sizes = [32, 1024], strides = [1, 1]} : vector<32x2048xbf16> to vector<32x1024xbf16>
    %23 = vector.extract_strided_slice %2 {offsets = [0, 650], sizes = [32, 1024], strides = [1, 1]} : vector<32x2048xbf16> to vector<32x1024xbf16>
    %24 = vector.extract_strided_slice %2 {offsets = [0, 666], sizes = [32, 1024], strides = [1, 1]} : vector<32x2048xbf16> to vector<32x1024xbf16>
    %25 = vector.extract_strided_slice %2 {offsets = [0, 667], sizes = [32, 1024], strides = [1, 1]} : vector<32x2048xbf16> to vector<32x1024xbf16>
    %26 = vector.extract_strided_slice %2 {offsets = [0, 668], sizes = [32, 1024], strides = [1, 1]} : vector<32x2048xbf16> to vector<32x1024xbf16>
    %27 = vector.extract_strided_slice %2 {offsets = [0, 684], sizes = [32, 1024], strides = [1, 1]} : vector<32x2048xbf16> to vector<32x1024xbf16>
    %28 = vector.extract_strided_slice %2 {offsets = [0, 685], sizes = [32, 1024], strides = [1, 1]} : vector<32x2048xbf16> to vector<32x1024xbf16>
    %29 = vector.extract_strided_slice %2 {offsets = [0, 686], sizes = [32, 1024], strides = [1, 1]} : vector<32x2048xbf16> to vector<32x1024xbf16>
    %30 = tpu.concatenate %3, %4, %5, %6, %7, %8, %9, %10, %11, %12, %13, %14, %15, %16, %17, %18 in 0 : vector<32x1024xbf16>, vector<32x1024xbf16>, vector<32x1024xbf16>, vector<32x1024xbf16>, vector<32x1024xbf16>, vector<32x1024xbf16>, vector<32x1024xbf16>, vector<32x1024xbf16>, vector<32x1024xbf16>, vector<32x1024xbf16>, vector<32x1024xbf16>, vector<32x1024xbf16>, vector<32x1024xbf16>, vector<32x1024xbf16>, vector<32x1024xbf16>, vector<32x1024xbf16> -> vector<512x1024xbf16>
    %31 = tpu.concatenate %19, %20, %21, %22, %23, %24, %25, %26, %27, %28, %29 in 0 : vector<32x1024xbf16>, vector<32x1024xbf16>, vector<32x1024xbf16>, vector<32x1024xbf16>, vector<32x1024xbf16>, vector<32x1024xbf16>, vector<32x1024xbf16>, vector<32x1024xbf16>, vector<32x1024xbf16>, vector<32x1024xbf16>, vector<32x1024xbf16> -> vector<352x1024xbf16>
    %32 = tpu.concatenate %30, %31 in 0 : vector<512x1024xbf16>, vector<352x1024xbf16> -> vector<864x1024xbf16>
    %c0_3 = arith.constant 0 : index
    %c0_4 = arith.constant 0 : index
    %33 = vector.load %arg3[%c0_3, %c0_4] : memref<16x864xbf16, #tpu.memory_space<vmem>>, vector<16x864xbf16>
    %cst = arith.constant dense<0.000000e+00> : vector<16x1024xf32>
    %34 = tpu.matmul %33, %32, %cst {dimension_numbers = #tpu.dot_dimension_numbers<[1], [0], [0], [1], [0, 0, 1, 1], [], []>} : vector<16x864xbf16>, vector<864x1024xbf16>, vector<16x1024xf32> -> vector<16x1024xf32>
    %c0_5 = arith.constant 0 : index
    %c0_6 = arith.constant 0 : index
    %35 = vector.load %arg4[%c0_5, %c0_6] : memref<16x1xf32, #tpu.memory_space<vmem>>, vector<16x1xf32>
    %36 = vector.broadcast %35 : vector<16x1xf32> to vector<16x1024xf32>
    %37 = arith.addf %34, %36 : vector<16x1024xf32>
    %cst_7 = arith.constant 0.000000e+00 : f32
    %38 = vector.broadcast %cst_7 : f32 to vector<16x1024xf32>
    %39 = arith.maximumf %37, %38 : vector<16x1024xf32>
    %40 = arith.truncf %39 : vector<16x1024xf32> to vector<16x1024xbf16>
    %c0_8 = arith.constant 0 : index
    %c0_9 = arith.constant 0 : index
    %41 = vector.load %arg5[%c0_8, %c0_9] : memref<16x1024xbf16, #tpu.memory_space<vmem>>, vector<16x1024xbf16>
    tpu.vector_store %arg5[%c0_8, %c0_9], %40 {strides = array<i32>} : memref<16x1024xbf16, #tpu.memory_space<vmem>>, vector<16x1024xbf16>,
    return
  }
  func.func @transform_0(%arg0: i32) -> (i32, i32) {
    %c0_i32 = arith.constant 0 : i32
    %c0_i32_0 = arith.constant 0 : i32
    return %c0_i32, %arg0 : i32, i32
  }
  func.func @transform_1(%arg0: i32) -> (i32, i32) {
    %c1_i32 = arith.constant 1 : i32
    %0 = arith.addi %arg0, %c1_i32 : i32
    %c0_i32 = arith.constant 0 : i32
    %c0_i32_0 = arith.constant 0 : i32
    return %c0_i32, %0 : i32, i32
  }
  func.func @transform_2(%arg0: i32) -> (i32, i32) {
    %c0_i32 = arith.constant 0 : i32
    %c0_i32_0 = arith.constant 0 : i32
    %c0_i32_1 = arith.constant 0 : i32
    return %c0_i32, %c0_i32_0 : i32, i32
  }
  func.func @transform_3(%arg0: i32) -> (i32, i32) {
    %c0_i32 = arith.constant 0 : i32
    %c0_i32_0 = arith.constant 0 : i32
    %c0_i32_1 = arith.constant 0 : i32
    return %c0_i32, %c0_i32_0 : i32, i32
  }
  func.func @transform_4(%arg0: i32) -> (i32, i32) {
    %c0_i32 = arith.constant 0 : i32
    %c0_i32_0 = arith.constant 0 : i32
    return %c0_i32, %arg0 : i32, i32
  }
}

</mosaic_0001>

<llo_original>
// kernel: tpu_custom_call.1
$region0: #{tpu_custom_call.1}
  #allocation0 [shape = 'u32[]', space=smem, size = 0x4, offset = 0x4, fixed_abs, tag = 'smem constant byte address 0x4 - core index']
  #allocation1 [shape = 'u32[144,128]{1,0:T(1,128)}', space=vmem, size = 0x12000, scoped, tag = 'internal scratch']
  %s0 = inlined_call_operand.hbm [shape: bf16[32,6144], index: 0, kind: input, shape index: {}]
  %s1 = inlined_call_operand.hbm [shape: bf16[32,6144], index: 1, kind: input, shape index: {}]
  %s2 = inlined_call_operand.hbm [shape: bf16[16,864], index: 2, kind: input, shape index: {}]
  %s3 = inlined_call_operand.vmem [shape: f32[16,1], index: 3, kind: input, shape index: {}]
  %s4 = inlined_call_operand.hbm [shape: bf16[16,5120], index: 4, kind: output, shape index: {}]
  %s5 = sld [smem:[#allocation0]]
  $region61: #{tpu_custom_call.1} parent=0
    _
  %s7 = ssub.s32 1, %s5
  %s8 = scalar_select 0, %s7, %s5
  $region1: #{tpu_custom_call.1} parent=0
    #allocation2 [shape = 'u8[131072]{0}', space=vmem, size = 0x20000, scoped, tag = 'input window, operand 0']
    #allocation3 [shape = 's32[2]{0}', space=sflag, size = 0x8, scoped, tag = 'scoped memory for tpu_custom_call.1']
    #allocation4 [shape = 's32[2]{0}', space=sflag, size = 0x8, scoped, tag = 'scoped memory for tpu_custom_call.1']
    #allocation5 [shape = 'u8[131072]{0}', space=vmem, size = 0x20000, scoped, tag = 'input window, operand 1']
    #allocation6 [shape = 's32[2]{0}', space=sflag, size = 0x8, scoped, tag = 'scoped memory for tpu_custom_call.1']
    #allocation7 [shape = 'u8[28672]{0}', space=vmem, size = 0x7000, scoped, tag = 'input window, operand 2, single buffered']
    #allocation8 [shape = 'u8[65536]{0}', space=vmem, size = 0x10000, scoped, tag = 'output window, operand 0']
    %9 = vsyncpa [#allocation3], 0
    %s10 = scalar_lea.sflag [#allocation3], 1
    %11 = vsyncpa %s10, 0
    %12 = vsyncpa [#allocation6], 0
    %s13 = scalar_lea.sflag [#allocation6], 1
    %14 = vsyncpa %s13, 0
    %15 = vsyncpa [#allocation4], 0
    %s16 = scalar_lea.sflag [#allocation4], 1
    %17 = vsyncpa %s16, 0
    loop: start=0, step=1, limit=7
    $region2: #{tpu_custom_call.1} parent=1 // loop_pre_header
      _
    $region3: #{tpu_custom_call.1} parent=1 // loop_header
      %s19 = sphi 0, %s23
      %p20 = scmp.ge.s32.totalorder %s19, 7
      %s29 = sphi 0, %s31
      %s32 = sphi 0, %s29
      %s33 = sphi 0, %s32
      %s49 = sphi 0, %s33
      %s57 = sphi 0, %s59
      %s60 = sphi 0, %s57
      %s61 = sphi 0, %s60
      %s77 = sphi 0, %s61
      %s81 = sphi 0, %s81
      %s83 = sphi 0, %s81
      %s84 = sphi 0, %s83
      %s98 = sphi 0, %s84
      %s102 = sphi 0, %s102
      %s104 = sphi 0, %s102
      %s105 = sphi 0, %s104
      %s119 = sphi 0, %s105
      %s125 = sphi 0, %s127
      %s128 = sphi 0, %s125
      %s129 = sphi 0, %s128
      %s145 = sphi 0, %s129
    $region4: #{tpu_custom_call.1} parent=1 // loop_header_branch
      %22 = sbr.rel (%p20) target = $region8
    $region5: #{tpu_custom_call.1} parent=1 // loop_body
      %s24 = ssub.s32 %s19, 1
      %s25 = ssub.s32 %s19, 2
      %s26 = sadd.s32 %s19, 1
      %s27 = ssub.s32 %s19, %s26
      %p28 = scmp.eq.s32.totalorder %s27, 0
      %s30 = sadd.s32 %s29, 1
      %s31 = scalar_select %p28, %s29, %s30
      %p34 = pneg %p28
      %p35 = scmp.eq.s32.totalorder %s19, 4
      %p36 = por %p34, %p35
      %p37 = scmp.ne.s32.totalorder %s29, %s32
      %p38 = scmp.eq.s32.totalorder %s19, 0
      %p39 = por %p37, %p38
      %p40 = scmp.ne.s32.totalorder %s29, %s32
      %p41 = scmp.eq.s32.totalorder %s24, 4
      %p42 = por %p40, %p41
      %p43 = scmp.ne.s32.totalorder %s32, %s33
      %p44 = scmp.eq.s32.totalorder %s24, 0
      %p45 = por %p43, %p44
      %p46 = scmp.ne.s32.totalorder %s32, %s33
      %p47 = scmp.eq.s32.totalorder %s25, 4
      %p48 = por %p46, %p47
      %p50 = scmp.ne.s32.totalorder %s33, %s49
      %p51 = scmp.eq.s32.totalorder %s25, 0
      %p52 = por %p50, %p51
      %s53 = sadd.s32 %s19, 1
      %s54 = sadd.s32 %s26, 1
      %s55 = ssub.s32 %s53, %s54
      %p56 = scmp.eq.s32.totalorder %s55, 0
      %s58 = sadd.s32 %s57, 1
      %s59 = scalar_select %p56, %s57, %s58
      %p62 = pneg %p56
      %p63 = scmp.eq.s32.totalorder %s19, 4
      %p64 = por %p62, %p63
      %p65 = scmp.ne.s32.totalorder %s57, %s60
      %p66 = scmp.eq.s32.totalorder %s19, 0
      %p67 = por %p65, %p66
      %p68 = scmp.ne.s32.totalorder %s57, %s60
      %p69 = scmp.eq.s32.totalorder %s24, 4
      %p70 = por %p68, %p69
      %p71 = scmp.ne.s32.totalorder %s60, %s61
      %p72 = scmp.eq.s32.totalorder %s24, 0
      %p73 = por %p71, %p72
      %p74 = scmp.ne.s32.totalorder %s60, %s61
      %p75 = scmp.eq.s32.totalorder %s25, 4
      %p76 = por %p74, %p75
      %p78 = scmp.ne.s32.totalorder %s61, %s77
      %p79 = scmp.eq.s32.totalorder %s25, 0
      %p80 = por %p78, %p79
      %s82 = sadd.s32 %s81, 1
      %p85 = scmp.eq.s32.totalorder %s19, 4
      %p86 = scmp.ne.s32.totalorder %s81, %s83
      %p87 = scmp.eq.s32.totalorder %s19, 0
      %p88 = por %p86, %p87
      %p89 = scmp.ne.s32.totalorder %s81, %s83
      %p90 = scmp.eq.s32.totalorder %s24, 4
      %p91 = por %p89, %p90
      %p92 = scmp.ne.s32.totalorder %s83, %s84
      %p93 = scmp.eq.s32.totalorder %s24, 0
      %p94 = por %p92, %p93
      %p95 = scmp.ne.s32.totalorder %s83, %s84
      %p96 = scmp.eq.s32.totalorder %s25, 4
      %p97 = por %p95, %p96
      %p99 = scmp.ne.s32.totalorder %s84, %s98
      %p100 = scmp.eq.s32.totalorder %s25, 0
      %p101 = por %p99, %p100
      %s103 = sadd.s32 %s102, 1
      %p106 = scmp.eq.s32.totalorder %s19, 4
      %p107 = scmp.ne.s32.totalorder %s102, %s104
      %p108 = scmp.eq.s32.totalorder %s19, 0
      %p109 = por %p107, %p108
      %p110 = scmp.ne.s32.totalorder %s102, %s104
      %p111 = scmp.eq.s32.totalorder %s24, 4
      %p112 = por %p110, %p111
      %p113 = scmp.ne.s32.totalorder %s104, %s105
      %p114 = scmp.eq.s32.totalorder %s24, 0
      %p115 = por %p113, %p114
      %p116 = scmp.ne.s32.totalorder %s104, %s105
      %p117 = scmp.eq.s32.totalorder %s25, 4
      %p118 = por %p116, %p117
      %p120 = scmp.ne.s32.totalorder %s105, %s119
      %p121 = scmp.eq.s32.totalorder %s25, 0
      %p122 = por %p120, %p121
      %s123 = ssub.s32 %s19, %s26
      %p124 = scmp.eq.s32.totalorder %s123, 0
      %s126 = sadd.s32 %s125, 1
      %s127 = scalar_select %p124, %s125, %s126
      %p130 = pneg %p124
      %p131 = scmp.eq.s32.totalorder %s19, 4
      %p132 = por %p130, %p131
      %p133 = scmp.ne.s32.totalorder %s125, %s128
      %p134 = scmp.eq.s32.totalorder %s19, 0
      %p135 = por %p133, %p134
      %p136 = scmp.ne.s32.totalorder %s125, %s128
      %p137 = scmp.eq.s32.totalorder %s24, 4
      %p138 = por %p136, %p137
      %p139 = scmp.ne.s32.totalorder %s128, %s129
      %p140 = scmp.eq.s32.totalorder %s24, 0
      %p141 = por %p139, %p140
      %p142 = scmp.ne.s32.totalorder %s128, %s129
      %p143 = scmp.eq.s32.totalorder %s25, 4
      %p144 = por %p142, %p143
      %p146 = scmp.ne.s32.totalorder %s129, %s145
      %p147 = scmp.eq.s32.totalorder %s25, 0
      %p148 = por %p146, %p147
      %p149 = scmp.le.s32.totalorder 1, %s19
      %p150 = scmp.lt.s32.totalorder %s19, 6
      %p151 = pnand %p149, %p150
      %p152 = pneg %p151
      // Predicated region
      $region9: #{tpu_custom_call.1} parent=5 // pred_check
        _
      $region10: #{tpu_custom_call.1} parent=5 // pred_check_branch
        %154 = sbr.rel (%p151) target = $region12
      $region11: #{tpu_custom_call.1} parent=5 // pred_region
        %s155 = ssub.s32 %s19, 1
        // Predicated region
        $region13: #{tpu_custom_call.1} parent=11 // pred_check
          %p156 = pneg %p94
        $region14: #{tpu_custom_call.1} parent=11 // pred_check_branch
          %158 = sbr.rel (%p156) target = $region16
        $region15: #{tpu_custom_call.1} parent=11 // pred_region
          %s160 = ssub.s32 896, 896
          %161 = vsyncadd [#allocation6], %s160
          %s162 = sshll.u32 [#allocation7], 4
          %s163 = int_to_ptr.vmem [resolvable:$true] %s162
          %168 = dma.hbm_to_vmem [thread:$0]  %s2, 896, %s163, [#allocation6], 448, 448, 28
        $region16: #{tpu_custom_call.1} parent=11 // pred_fallthru
          _
        // Predicated region
        $region17: #{tpu_custom_call.1} parent=11 // pred_check
          %p169 = pneg %p115
        $region18: #{tpu_custom_call.1} parent=11 // pred_check_branch
          %171 = sbr.rel (%p169) target = $region20
        $region19: #{tpu_custom_call.1} parent=11 // pred_region
          _
        $region20: #{tpu_custom_call.1} parent=11 // pred_fallthru
          _
      $region12: #{tpu_custom_call.1} parent=5 // pred_fallthru
        _
      %p172 = scmp.lt.s32.totalorder %s19, 5
      // Predicated region
      $region21: #{tpu_custom_call.1} parent=5 // pred_check
        %p173 = pneg %p172
      $region22: #{tpu_custom_call.1} parent=5 // pred_check_branch
        %175 = sbr.rel (%p173) target = $region24
      $region23: #{tpu_custom_call.1} parent=5 // pred_region
        // Predicated region
        $region25: #{tpu_custom_call.1} parent=23 // pred_check
          %p176 = pneg %p39
        $region26: #{tpu_custom_call.1} parent=23 // pred_check_branch
          %178 = sbr.rel (%p176) target = $region28
        $region27: #{tpu_custom_call.1} parent=23 // pred_region
          %s179 = sand.u32 %s29, 1
          %s180 = scalar_lea.sflag [#allocation3], %s179
          %s181 = sand.u32 %s29, 1
          %s182 = smul.addr %s181, 128
          %s183 = scalar_lea.vmem [#allocation2], %s182
          %s184 = smul.u32 8, %s19
          %s186 = ssub.s32 2048, 2048
          %187 = vsyncadd %s180, %s186
          %s188 = smul.addr %s184, 64
          %s189 = scalar_lea.hbm %s0, %s188
          %s190 = sshll.u32 %s183, 4
          %s191 = int_to_ptr.vmem [resolvable:$true] %s190
          %196 = dma.hbm_to_vmem [thread:$0]  %s189, 2048, %s191, %s180, 3072, 512, 32
        $region28: #{tpu_custom_call.1} parent=23 // pred_fallthru
          _
        // Predicated region
        $region29: #{tpu_custom_call.1} parent=23 // pred_check
          %p197 = pneg %p67
        $region30: #{tpu_custom_call.1} parent=23 // pred_check_branch
          %199 = sbr.rel (%p197) target = $region32
        $region31: #{tpu_custom_call.1} parent=23 // pred_region
          %s200 = sand.u32 %s19, 1
          %s201 = scalar_lea.sflag [#allocation6], %s200
          %s202 = sand.u32 %s57, 1
          %s203 = smul.addr %s202, 128
          %s204 = scalar_lea.vmem [#allocation5], %s203
          %s205 = sadd.s32 %s19, 1
          %s206 = smul.u32 8, %s205
          %s208 = ssub.s32 2048, 2048
          %209 = vsyncadd %s201, %s208
          %s210 = smul.addr %s206, 64
          %s211 = scalar_lea.hbm %s1, %s210
          %s212 = sshll.u32 %s204, 4
          %s213 = int_to_ptr.vmem [resolvable:$true] %s212
          %218 = dma.hbm_to_vmem [thread:$0]  %s211, 2048, %s213, %s201, 3072, 512, 32
        $region32: #{tpu_custom_call.1} parent=23 // pred_fallthru
          _
      $region24: #{tpu_custom_call.1} parent=5 // pred_fallthru
        _
      %p219 = scmp.le.s32.totalorder 1, %s19
      %p220 = scmp.lt.s32.totalorder %s19, 6
      %p221 = pnand %p219, %p220
      %p222 = pneg %p221
      // Predicated region
      $region33: #{tpu_custom_call.1} parent=5 // pred_check
        _
      $region34: #{tpu_custom_call.1} parent=5 // pred_check_branch
        %224 = sbr.rel (%p221) target = $region36
      $region35: #{tpu_custom_call.1} parent=5 // pred_region
        %s225 = ssub.s32 %s19, 1
        %s226 = sand.u32 %s32, 1
        %s227 = scalar_lea.sflag [#allocation3], %s226
        %s228 = sand.u32 %s32, 1
        %s229 = smul.addr %s228, 128
        %s230 = scalar_lea.vmem [#allocation2], %s229
        // Predicated region
        $region37: #{tpu_custom_call.1} parent=35 // pred_check
          %p231 = pneg %p45
        $region38: #{tpu_custom_call.1} parent=35 // pred_check_branch
          %233 = sbr.rel (%p231) target = $region40
        $region39: #{tpu_custom_call.1} parent=35 // pred_region
          %234 = dma.done %s227, 2048
        $region40: #{tpu_custom_call.1} parent=35 // pred_fallthru
          _
        %s235 = sand.u32 %s24, 1
        %s236 = scalar_lea.sflag [#allocation6], %s235
        %s237 = sand.u32 %s60, 1
        %s238 = smul.addr %s237, 128
        %s239 = scalar_lea.vmem [#allocation5], %s238
        // Predicated region
        $region41: #{tpu_custom_call.1} parent=35 // pred_check
          %p240 = pneg %p73
        $region42: #{tpu_custom_call.1} parent=35 // pred_check_branch
          %242 = sbr.rel (%p240) target = $region44
        $region43: #{tpu_custom_call.1} parent=35 // pred_region
          %243 = dma.done %s236, 2048
        $region44: #{tpu_custom_call.1} parent=35 // pred_fallthru
          _
        // Predicated region
        $region45: #{tpu_custom_call.1} parent=35 // pred_check
          %p244 = pneg %p94
        $region46: #{tpu_custom_call.1} parent=35 // pred_check_branch
          %246 = sbr.rel (%p244) target = $region48
        $region47: #{tpu_custom_call.1} parent=35 // pred_region
          %247 = dma.done [#allocation6], 896
        $region48: #{tpu_custom_call.1} parent=35 // pred_fallthru
          _
        %s248 = sand.u32 %s32, 1
        %s249 = scalar_lea.sflag [#allocation3], %s248
        %s250 = sand.u32 %s32, 1
        %s251 = smul.addr %s250, 128
        %s252 = scalar_lea.vmem [#allocation2], %s251
        %p253 = pneg %p45
        %p254 = pneg %p42
        %s255 = sand.u32 %s24, 1
        %s256 = scalar_lea.sflag [#allocation6], %s255
        %s257 = sand.u32 %s60, 1
        %s258 = smul.addr %s257, 128
        %s259 = scalar_lea.vmem [#allocation5], %s258
        %p260 = pneg %p73
        %p261 = pneg %p70
        %p262 = pneg %p94
        %p263 = pneg %p91
        %p264 = pneg %p115
        %p265 = pneg %p112
        %p266 = pneg %p141
        %p267 = pneg %p138
        %s268 = sand.u32 %s128, 1
        %s269 = scalar_lea.sflag [#allocation4], %s268
        %s270 = sand.u32 %s128, 1
        %s271 = smul.addr %s270, 64
        %s272 = scalar_lea.vmem [#allocation8], %s271
        %s273 = smul.u32 8, %s24
        %s274 = sadd.s32 %s24, 1
        %s275 = smul.u32 8, %s274
        %s276 = smul.u32 8, %s24
        %v278 = vld [vmem:[%s230] sm:$0xff]
        %v279 = vld [vmem:[%s230 + $0x8] sm:$0xff]
        %v280 = vld [vmem:[%s230 + $0x10] sm:$0xff]
        %v281 = vld [vmem:[%s230 + $0x18] sm:$0xff]
        %v282 = vld [vmem:[%s230 + $0x20] sm:$0xff]
        %v283 = vld [vmem:[%s230 + $0x28] sm:$0xff]
        %v284 = vld [vmem:[%s230 + $0x30] sm:$0xff]
        %v285 = vld [vmem:[%s230 + $0x38] sm:$0xff]
        %v286 = vld [vmem:[%s230 + $0x40] sm:$0xff]
        %v287 = vld [vmem:[%s230 + $0x48] sm:$0xff]
        %v288 = vld [vmem:[%s230 + $0x50] sm:$0xff]
        %v289 = vld [vmem:[%s230 + $0x58] sm:$0xff]
        %v290 = vld [vmem:[%s230 + $0x60] sm:$0xff]
        %v291 = vld [vmem:[%s230 + $0x68] sm:$0xff]
        %v292 = vld [vmem:[%s230 + $0x70] sm:$0xff]
        %v293 = vld [vmem:[%s230 + $0x78] sm:$0xff]
        %v294 = vld [vmem:[%s239] sm:$0xff]
        %v295 = vld [vmem:[%s239 + $0x8] sm:$0xff]
        %v296 = vld [vmem:[%s239 + $0x10] sm:$0xff]
        %v297 = vld [vmem:[%s239 + $0x20] sm:$0xff]
        %v298 = vld [vmem:[%s239 + $0x28] sm:$0xff]
        %v299 = vld [vmem:[%s239 + $0x30] sm:$0xff]
        %v300 = vld [vmem:[%s239 + $0x40] sm:$0xff]
        %v301 = vld [vmem:[%s239 + $0x48] sm:$0xff]
        %v302 = vld [vmem:[%s239 + $0x50] sm:$0xff]
        %v303 = vld [vmem:[%s239 + $0x60] sm:$0xff]
        %v304 = vld [vmem:[%s239 + $0x68] sm:$0xff]
        %v305 = vld [vmem:[%s239 + $0x70] sm:$0xff]
        %v322 = vunpack.c.l.b16 %v278
        %v323 = vunpack.c.h.b16 %v278
        %v324 = vunpack.c.l.b16 %v279
        %v325 = vunpack.c.h.b16 %v279
        %v326 = vunpack.c.l.b16 %v280
        %v327 = vunpack.c.h.b16 %v280
        %v328 = vunpack.c.l.b16 %v281
        %v329 = vunpack.c.h.b16 %v281
        %v330 = vunpack.c.l.b16 %v282
        %v331 = vunpack.c.h.b16 %v282
        %v332 = vunpack.c.l.b16 %v283
        %v333 = vunpack.c.h.b16 %v283
        %v334 = vunpack.c.l.b16 %v284
        %v335 = vunpack.c.h.b16 %v284
        %v336 = vunpack.c.l.b16 %v285
        %v337 = vunpack.c.h.b16 %v285
        %v338 = vunpack.c.l.b16 %v286
        %v339 = vunpack.c.h.b16 %v286
        %v340 = vunpack.c.l.b16 %v287
        %v341 = vunpack.c.h.b16 %v287
        %v342 = vunpack.c.l.b16 %v288
        %v343 = vunpack.c.h.b16 %v288
        %v344 = vunpack.c.l.b16 %v289
        %v345 = vunpack.c.h.b16 %v289
        %v346 = vunpack.c.l.b16 %v290
        %v347 = vunpack.c.h.b16 %v290
        %v348 = vunpack.c.l.b16 %v291
        %v349 = vunpack.c.h.b16 %v291
        %v350 = vunpack.c.l.b16 %v292
        %v351 = vunpack.c.h.b16 %v292
        %v352 = vunpack.c.l.b16 %v293
        %v353 = vunpack.c.h.b16 %v293
        %v354 = vpack.c.b16 %v330, %v322
        %v355 = vpack.c.b16 %v331, %v323
        %v356 = vpack.c.b16 %v332, %v324
        %v357 = vpack.c.b16 %v333, %v325
        %v358 = vpack.c.b16 %v334, %v326
        %v359 = vpack.c.b16 %v335, %v327
        %v360 = vpack.c.b16 %v336, %v328
        %v361 = vpack.c.b16 %v337, %v329
        %v362 = vpack.c.b16 %v346, %v338
        %v363 = vpack.c.b16 %v347, %v339
        %v364 = vpack.c.b16 %v348, %v340
        %v365 = vpack.c.b16 %v349, %v341
        %v366 = vpack.c.b16 %v350, %v342
        %v367 = vpack.c.b16 %v351, %v343
        %v368 = vpack.c.b16 %v352, %v344
        %v369 = vpack.c.b16 %v353, %v345
        %v398 = vunpack.c.l.b16 %v294
        %v399 = vunpack.c.h.b16 %v294
        %v400 = vunpack.c.l.b16 %v295
        %v401 = vunpack.c.h.b16 %v295
        %v402 = vunpack.c.l.b16 %v296
        %v403 = vunpack.c.h.b16 %v296
        %v404 = vunpack.c.l.b16 %v297
        %v405 = vunpack.c.h.b16 %v297
        %v406 = vunpack.c.l.b16 %v298
        %v407 = vunpack.c.h.b16 %v298
        %v408 = vunpack.c.l.b16 %v299
        %v409 = vunpack.c.h.b16 %v299
        %v410 = vunpack.c.l.b16 %v300
        %v411 = vunpack.c.h.b16 %v300
        %v412 = vunpack.c.l.b16 %v301
        %v413 = vunpack.c.h.b16 %v301
        %v414 = vunpack.c.l.b16 %v302
        %v415 = vunpack.c.h.b16 %v302
        %v416 = vunpack.c.l.b16 %v303
        %v417 = vunpack.c.h.b16 %v303
        %v418 = vunpack.c.l.b16 %v304
        %v419 = vunpack.c.h.b16 %v304
        %v420 = vunpack.c.l.b16 %v305
        %v421 = vunpack.c.h.b16 %v305
        %v422 = vpack.c.b16 %v404, %v398
        %v423 = vpack.c.b16 %v405, %v399
        %v424 = vpack.c.b16 %v406, %v400
        %v425 = vpack.c.b16 %v407, %v401
        %v426 = vpack.c.b16 %v408, %v402
        %v427 = vpack.c.b16 %v409, %v403
        %v428 = vpack.c.b16 %v416, %v410
        %v429 = vpack.c.b16 %v417, %v411
        %v430 = vpack.c.b16 %v418, %v412
        %v431 = vpack.c.b16 %v419, %v413
        %v432 = vpack.c.b16 %v420, %v414
        %v433 = vpack.c.b16 %v421, %v415
        %434 = vrot.lane.b32.xlu0 %v354, 127
        %v435 = vpop.permute.xlu0 %434
        %436 = vrot.lane.b32.xlu0 %v355, 127
        %v437 = vpop.permute.xlu0 %436
        %438 = vrot.lane.b32.xlu0 %v356, 127
        %v439 = vpop.permute.xlu0 %438
        %440 = vrot.lane.b32.xlu0 %v357, 127
        %v441 = vpop.permute.xlu0 %440
        %442 = vrot.lane.b32.xlu0 %v358, 127
        %v443 = vpop.permute.xlu0 %442
        %444 = vrot.lane.b32.xlu0 %v359, 127
        %v445 = vpop.permute.xlu0 %444
        %446 = vrot.lane.b32.xlu0 %v360, 127
        %v447 = vpop.permute.xlu0 %446
        %448 = vrot.lane.b32.xlu0 %v361, 127
        %v449 = vpop.permute.xlu0 %448
        %450 = vrot.lane.b32.xlu0 %v422, 127
        %v451 = vpop.permute.xlu0 %450
        %452 = vrot.lane.b32.xlu0 %v362, 127
        %v453 = vpop.permute.xlu0 %452
        %454 = vrot.lane.b32.xlu0 %v363, 127
        %v455 = vpop.permute.xlu0 %454
        %456 = vrot.lane.b32.xlu0 %v364, 127
        %v457 = vpop.permute.xlu0 %456
        %458 = vrot.lane.b32.xlu0 %v365, 127
        %v459 = vpop.permute.xlu0 %458
        %460 = vrot.lane.b32.xlu0 %v366, 127
        %v461 = vpop.permute.xlu0 %460
        %462 = vrot.lane.b32.xlu0 %v367, 127
        %v463 = vpop.permute.xlu0 %462
        %464 = vrot.lane.b32.xlu0 %v368, 127
        %v465 = vpop.permute.xlu0 %464
        %466 = vrot.lane.b32.xlu0 %v369, 127
        %v467 = vpop.permute.xlu0 %466
        %468 = vrot.lane.b32.xlu0 %v428, 127
        %v469 = vpop.permute.xlu0 %468
        %vm470 = vcmask 1039360
        %v471 = vsel %vm470, %v435, %v437
        %v472 = vsel %vm470, %v437, %v439
        %v473 = vsel %vm470, %v439, %v441
        %v474 = vsel %vm470, %v441, %v443
        %v475 = vsel %vm470, %v443, %v445
        %v476 = vsel %vm470, %v445, %v447
        %v477 = vsel %vm470, %v447, %v449
        %v478 = vsel %vm470, %v449, %v451
        %v479 = vsel %vm470, %v453, %v455
        %v480 = vsel %vm470, %v455, %v457
        %v481 = vsel %vm470, %v457, %v459
        %v482 = vsel %vm470, %v459, %v461
        %v483 = vsel %vm470, %v461, %v463
        %v484 = vsel %vm470, %v463, %v465
        %v485 = vsel %vm470, %v465, %v467
        %v486 = vsel %vm470, %v467, %v469
        %503 = vrot.lane.b32.xlu0 %v354, 126
        %v504 = vpop.permute.xlu0 %503
        %505 = vrot.lane.b32.xlu0 %v355, 126
        %v506 = vpop.permute.xlu0 %505
        %507 = vrot.lane.b32.xlu0 %v356, 126
        %v508 = vpop.permute.xlu0 %507
        %509 = vrot.lane.b32.xlu0 %v357, 126
        %v510 = vpop.permute.xlu0 %509
        %511 = vrot.lane.b32.xlu0 %v358, 126
        %v512 = vpop.permute.xlu0 %511
        %513 = vrot.lane.b32.xlu0 %v359, 126
        %v514 = vpop.permute.xlu0 %513
        %515 = vrot.lane.b32.xlu0 %v360, 126
        %v516 = vpop.permute.xlu0 %515
        %517 = vrot.lane.b32.xlu0 %v361, 126
        %v518 = vpop.permute.xlu0 %517
        %519 = vrot.lane.b32.xlu0 %v422, 126
        %v520 = vpop.permute.xlu0 %519
        %521 = vrot.lane.b32.xlu0 %v362, 126
        %v522 = vpop.permute.xlu0 %521
        %523 = vrot.lane.b32.xlu0 %v363, 126
        %v524 = vpop.permute.xlu0 %523
        %525 = vrot.lane.b32.xlu0 %v364, 126
        %v526 = vpop.permute.xlu0 %525
        %527 = vrot.lane.b32.xlu0 %v365, 126
        %v528 = vpop.permute.xlu0 %527
        %529 = vrot.lane.b32.xlu0 %v366, 126
        %v530 = vpop.permute.xlu0 %529
        %531 = vrot.lane.b32.xlu0 %v367, 126
        %v532 = vpop.permute.xlu0 %531
        %533 = vrot.lane.b32.xlu0 %v368, 126
        %v534 = vpop.permute.xlu0 %533
        %535 = vrot.lane.b32.xlu0 %v369, 126
        %v536 = vpop.permute.xlu0 %535
        %537 = vrot.lane.b32.xlu0 %v428, 126
        %v538 = vpop.permute.xlu0 %537
        %vm539 = vcmask 1031168
        %v540 = vsel %vm539, %v504, %v506
        %v541 = vsel %vm539, %v506, %v508
        %v542 = vsel %vm539, %v508, %v510
        %v543 = vsel %vm539, %v510, %v512
        %v544 = vsel %vm539, %v512, %v514
        %v545 = vsel %vm539, %v514, %v516
        %v546 = vsel %vm539, %v516, %v518
        %v547 = vsel %vm539, %v518, %v520
        %v548 = vsel %vm539, %v522, %v524
        %v549 = vsel %vm539, %v524, %v526
        %v550 = vsel %vm539, %v526, %v528
        %v551 = vsel %vm539, %v528, %v530
        %v552 = vsel %vm539, %v530, %v532
        %v553 = vsel %vm539, %v532, %v534
        %v554 = vsel %vm539, %v534, %v536
        %v555 = vsel %vm539, %v536, %v538
        %572 = vrot.lane.b32.xlu0 %v354, 110
        %v573 = vpop.permute.xlu0 %572
        %574 = vrot.lane.b32.xlu0 %v355, 110
        %v575 = vpop.permute.xlu0 %574
        %576 = vrot.lane.b32.xlu0 %v356, 110
        %v577 = vpop.permute.xlu0 %576
        %578 = vrot.lane.b32.xlu0 %v357, 110
        %v579 = vpop.permute.xlu0 %578
        %580 = vrot.lane.b32.xlu0 %v358, 110
        %v581 = vpop.permute.xlu0 %580
        %582 = vrot.lane.b32.xlu0 %v359, 110
        %v583 = vpop.permute.xlu0 %582
        %584 = vrot.lane.b32.xlu0 %v360, 110
        %v585 = vpop.permute.xlu0 %584
        %586 = vrot.lane.b32.xlu0 %v361, 110
        %v587 = vpop.permute.xlu0 %586
        %588 = vrot.lane.b32.xlu0 %v422, 110
        %v589 = vpop.permute.xlu0 %588
        %590 = vrot.lane.b32.xlu0 %v362, 110
        %v591 = vpop.permute.xlu0 %590
        %592 = vrot.lane.b32.xlu0 %v363, 110
        %v593 = vpop.permute.xlu0 %592
        %594 = vrot.lane.b32.xlu0 %v364, 110
        %v595 = vpop.permute.xlu0 %594
        %596 = vrot.lane.b32.xlu0 %v365, 110
        %v597 = vpop.permute.xlu0 %596
        %598 = vrot.lane.b32.xlu0 %v366, 110
        %v599 = vpop.permute.xlu0 %598
        %600 = vrot.lane.b32.xlu0 %v367, 110
        %v601 = vpop.permute.xlu0 %600
        %602 = vrot.lane.b32.xlu0 %v368, 110
        %v603 = vpop.permute.xlu0 %602
        %604 = vrot.lane.b32.xlu0 %v369, 110
        %v605 = vpop.permute.xlu0 %604
        %606 = vrot.lane.b32.xlu0 %v428, 110
        %v607 = vpop.permute.xlu0 %606
        %vm608 = vcmask 900096
        %v609 = vsel %vm608, %v573, %v575
        %v610 = vsel %vm608, %v575, %v577
        %v611 = vsel %vm608, %v577, %v579
        %v612 = vsel %vm608, %v579, %v581
        %v613 = vsel %vm608, %v581, %v583
        %v614 = vsel %vm608, %v583, %v585
        %v615 = vsel %vm608, %v585, %v587
        %v616 = vsel %vm608, %v587, %v589
        %v617 = vsel %vm608, %v591, %v593
        %v618 = vsel %vm608, %v593, %v595
        %v619 = vsel %vm608, %v595, %v597
        %v620 = vsel %vm608, %v597, %v599
        %v621 = vsel %vm608, %v599, %v601
        %v622 = vsel %vm608, %v601, %v603
        %v623 = vsel %vm608, %v603, %v605
        %v624 = vsel %vm608, %v605, %v607
        %641 = vrot.lane.b32.xlu0 %v354, 109
        %v642 = vpop.permute.xlu0 %641
        %643 = vrot.lane.b32.xlu0 %v355, 109
        %v644 = vpop.permute.xlu0 %643
        %645 = vrot.lane.b32.xlu0 %v356, 109
        %v646 = vpop.permute.xlu0 %645
        %647 = vrot.lane.b32.xlu0 %v357, 109
        %v648 = vpop.permute.xlu0 %647
        %649 = vrot.lane.b32.xlu0 %v358, 109
        %v650 = vpop.permute.xlu0 %649
        %651 = vrot.lane.b32.xlu0 %v359, 109
        %v652 = vpop.permute.xlu0 %651
        %653 = vrot.lane.b32.xlu0 %v360, 109
        %v654 = vpop.permute.xlu0 %653
        %655 = vrot.lane.b32.xlu0 %v361, 109
        %v656 = vpop.permute.xlu0 %655
        %657 = vrot.lane.b32.xlu0 %v422, 109
        %v658 = vpop.permute.xlu0 %657
        %659 = vrot.lane.b32.xlu0 %v362, 109
        %v660 = vpop.permute.xlu0 %659
        %661 = vrot.lane.b32.xlu0 %v363, 109
        %v662 = vpop.permute.xlu0 %661
        %663 = vrot.lane.b32.xlu0 %v364, 109
        %v664 = vpop.permute.xlu0 %663
        %665 = vrot.lane.b32.xlu0 %v365, 109
        %v666 = vpop.permute.xlu0 %665
        %667 = vrot.lane.b32.xlu0 %v366, 109
        %v668 = vpop.permute.xlu0 %667
        %669 = vrot.lane.b32.xlu0 %v367, 109
        %v670 = vpop.permute.xlu0 %669
        %671 = vrot.lane.b32.xlu0 %v368, 109
        %v672 = vpop.permute.xlu0 %671
        %673 = vrot.lane.b32.xlu0 %v369, 109
        %v674 = vpop.permute.xlu0 %673
        %675 = vrot.lane.b32.xlu0 %v428, 109
        %v676 = vpop.permute.xlu0 %675
        %vm677 = vcmask 891904
        %v678 = vsel %vm677, %v642, %v644
        %v679 = vsel %vm677, %v644, %v646
        %v680 = vsel %vm677, %v646, %v648
        %v681 = vsel %vm677, %v648, %v650
        %v682 = vsel %vm677, %v650, %v652
        %v683 = vsel %vm677, %v652, %v654
        %v684 = vsel %vm677, %v654, %v656
        %v685 = vsel %vm677, %v656, %v658
        %v686 = vsel %vm677, %v660, %v662
        %v687 = vsel %vm677, %v662, %v664
        %v688 = vsel %vm677, %v664, %v666
        %v689 = vsel %vm677, %v666, %v668
        %v690 = vsel %vm677, %v668, %v670
        %v691 = vsel %vm677, %v670, %v672
        %v692 = vsel %vm677, %v672, %v674
        %v693 = vsel %vm677, %v674, %v676
        %710 = vrot.lane.b32.xlu0 %v354, 108
        %v711 = vpop.permute.xlu0 %710
        %712 = vrot.lane.b32.xlu0 %v355, 108
        %v713 = vpop.permute.xlu0 %712
        %714 = vrot.lane.b32.xlu0 %v356, 108
        %v715 = vpop.permute.xlu0 %714
        %716 = vrot.lane.b32.xlu0 %v357, 108
        %v717 = vpop.permute.xlu0 %716
        %718 = vrot.lane.b32.xlu0 %v358, 108
        %v719 = vpop.permute.xlu0 %718
        %720 = vrot.lane.b32.xlu0 %v359, 108
        %v721 = vpop.permute.xlu0 %720
        %722 = vrot.lane.b32.xlu0 %v360, 108
        %v723 = vpop.permute.xlu0 %722
        %724 = vrot.lane.b32.xlu0 %v361, 108
        %v725 = vpop.permute.xlu0 %724
        %726 = vrot.lane.b32.xlu0 %v422, 108
        %v727 = vpop.permute.xlu0 %726
        %728 = vrot.lane.b32.xlu0 %v362, 108
        %v729 = vpop.permute.xlu0 %728
        %730 = vrot.lane.b32.xlu0 %v363, 108
        %v731 = vpop.permute.xlu0 %730
        %732 = vrot.lane.b32.xlu0 %v364, 108
        %v733 = vpop.permute.xlu0 %732
        %734 = vrot.lane.b32.xlu0 %v365, 108
        %v735 = vpop.permute.xlu0 %734
        %736 = vrot.lane.b32.xlu0 %v366, 108
        %v737 = vpop.permute.xlu0 %736
        %738 = vrot.lane.b32.xlu0 %v367, 108
        %v739 = vpop.permute.xlu0 %738
        %740 = vrot.lane.b32.xlu0 %v368, 108
        %v741 = vpop.permute.xlu0 %740
        %742 = vrot.lane.b32.xlu0 %v369, 108
        %v743 = vpop.permute.xlu0 %742
        %744 = vrot.lane.b32.xlu0 %v428, 108
        %v745 = vpop.permute.xlu0 %744
        %vm746 = vcmask 883712
        %v747 = vsel %vm746, %v711, %v713
        %v748 = vsel %vm746, %v713, %v715
        %v749 = vsel %vm746, %v715, %v717
        %v750 = vsel %vm746, %v717, %v719
        %v751 = vsel %vm746, %v719, %v721
        %v752 = vsel %vm746, %v721, %v723
        %v753 = vsel %vm746, %v723, %v725
        %v754 = vsel %vm746, %v725, %v727
        %v755 = vsel %vm746, %v729, %v731
        %v756 = vsel %vm746, %v731, %v733
        %v757 = vsel %vm746, %v733, %v735
        %v758 = vsel %vm746, %v735, %v737
        %v759 = vsel %vm746, %v737, %v739
        %v760 = vsel %vm746, %v739, %v741
        %v761 = vsel %vm746, %v741, %v743
        %v762 = vsel %vm746, %v743, %v745
        %779 = vrot.lane.b32.xlu0 %v354, 92
        %v780 = vpop.permute.xlu0 %779
        %781 = vrot.lane.b32.xlu0 %v355, 92
        %v782 = vpop.permute.xlu0 %781
        %783 = vrot.lane.b32.xlu0 %v356, 92
        %v784 = vpop.permute.xlu0 %783
        %785 = vrot.lane.b32.xlu0 %v357, 92
        %v786 = vpop.permute.xlu0 %785
        %787 = vrot.lane.b32.xlu0 %v358, 92
        %v788 = vpop.permute.xlu0 %787
        %789 = vrot.lane.b32.xlu0 %v359, 92
        %v790 = vpop.permute.xlu0 %789
        %791 = vrot.lane.b32.xlu0 %v360, 92
        %v792 = vpop.permute.xlu0 %791
        %793 = vrot.lane.b32.xlu0 %v361, 92
        %v794 = vpop.permute.xlu0 %793
        %795 = vrot.lane.b32.xlu0 %v422, 92
        %v796 = vpop.permute.xlu0 %795
        %797 = vrot.lane.b32.xlu0 %v362, 92
        %v798 = vpop.permute.xlu0 %797
        %799 = vrot.lane.b32.xlu0 %v363, 92
        %v800 = vpop.permute.xlu0 %799
        %801 = vrot.lane.b32.xlu0 %v364, 92
        %v802 = vpop.permute.xlu0 %801
        %803 = vrot.lane.b32.xlu0 %v365, 92
        %v804 = vpop.permute.xlu0 %803
        %805 = vrot.lane.b32.xlu0 %v366, 92
        %v806 = vpop.permute.xlu0 %805
        %807 = vrot.lane.b32.xlu0 %v367, 92
        %v808 = vpop.permute.xlu0 %807
        %809 = vrot.lane.b32.xlu0 %v368, 92
        %v810 = vpop.permute.xlu0 %809
        %811 = vrot.lane.b32.xlu0 %v369, 92
        %v812 = vpop.permute.xlu0 %811
        %813 = vrot.lane.b32.xlu0 %v428, 92
        %v814 = vpop.permute.xlu0 %813
        %vm815 = vcmask 752640
        %v816 = vsel %vm815, %v780, %v782
        %v817 = vsel %vm815, %v782, %v784
        %v818 = vsel %vm815, %v784, %v786
        %v819 = vsel %vm815, %v786, %v788
        %v820 = vsel %vm815, %v788, %v790
        %v821 = vsel %vm815, %v790, %v792
        %v822 = vsel %vm815, %v792, %v794
        %v823 = vsel %vm815, %v794, %v796
        %v824 = vsel %vm815, %v798, %v800
        %v825 = vsel %vm815, %v800, %v802
        %v826 = vsel %vm815, %v802, %v804
        %v827 = vsel %vm815, %v804, %v806
        %v828 = vsel %vm815, %v806, %v808
        %v829 = vsel %vm815, %v808, %v810
        %v830 = vsel %vm815, %v810, %v812
        %v831 = vsel %vm815, %v812, %v814
        %848 = vrot.lane.b32.xlu0 %v354, 91
        %v849 = vpop.permute.xlu0 %848
        %850 = vrot.lane.b32.xlu0 %v355, 91
        %v851 = vpop.permute.xlu0 %850
        %852 = vrot.lane.b32.xlu0 %v356, 91
        %v853 = vpop.permute.xlu0 %852
        %854 = vrot.lane.b32.xlu0 %v357, 91
        %v855 = vpop.permute.xlu0 %854
        %856 = vrot.lane.b32.xlu0 %v358, 91
        %v857 = vpop.permute.xlu0 %856
        %858 = vrot.lane.b32.xlu0 %v359, 91
        %v859 = vpop.permute.xlu0 %858
        %860 = vrot.lane.b32.xlu0 %v360, 91
        %v861 = vpop.permute.xlu0 %860
        %862 = vrot.lane.b32.xlu0 %v361, 91
        %v863 = vpop.permute.xlu0 %862
        %864 = vrot.lane.b32.xlu0 %v422, 91
        %v865 = vpop.permute.xlu0 %864
        %866 = vrot.lane.b32.xlu0 %v362, 91
        %v867 = vpop.permute.xlu0 %866
        %868 = vrot.lane.b32.xlu0 %v363, 91
        %v869 = vpop.permute.xlu0 %868
        %870 = vrot.lane.b32.xlu0 %v364, 91
        %v871 = vpop.permute.xlu0 %870
        %872 = vrot.lane.b32.xlu0 %v365, 91
        %v873 = vpop.permute.xlu0 %872
        %874 = vrot.lane.b32.xlu0 %v366, 91
        %v875 = vpop.permute.xlu0 %874
        %876 = vrot.lane.b32.xlu0 %v367, 91
        %v877 = vpop.permute.xlu0 %876
        %878 = vrot.lane.b32.xlu0 %v368, 91
        %v879 = vpop.permute.xlu0 %878
        %880 = vrot.lane.b32.xlu0 %v369, 91
        %v881 = vpop.permute.xlu0 %880
        %882 = vrot.lane.b32.xlu0 %v428, 91
        %v883 = vpop.permute.xlu0 %882
        %vm884 = vcmask 744448
        %v885 = vsel %vm884, %v849, %v851
        %v886 = vsel %vm884, %v851, %v853
        %v887 = vsel %vm884, %v853, %v855
        %v888 = vsel %vm884, %v855, %v857
        %v889 = vsel %vm884, %v857, %v859
        %v890 = vsel %vm884, %v859, %v861
        %v891 = vsel %vm884, %v861, %v863
        %v892 = vsel %vm884, %v863, %v865
        %v893 = vsel %vm884, %v867, %v869
        %v894 = vsel %vm884, %v869, %v871
        %v895 = vsel %vm884, %v871, %v873
        %v896 = vsel %vm884, %v873, %v875
        %v897 = vsel %vm884, %v875, %v877
        %v898 = vsel %vm884, %v877, %v879
        %v899 = vsel %vm884, %v879, %v881
        %v900 = vsel %vm884, %v881, %v883
        %917 = vrot.lane.b32.xlu0 %v354, 90
        %v918 = vpop.permute.xlu0 %917
        %919 = vrot.lane.b32.xlu0 %v355, 90
        %v920 = vpop.permute.xlu0 %919
        %921 = vrot.lane.b32.xlu0 %v356, 90
        %v922 = vpop.permute.xlu0 %921
        %923 = vrot.lane.b32.xlu0 %v357, 90
        %v924 = vpop.permute.xlu0 %923
        %925 = vrot.lane.b32.xlu0 %v358, 90
        %v926 = vpop.permute.xlu0 %925
        %927 = vrot.lane.b32.xlu0 %v359, 90
        %v928 = vpop.permute.xlu0 %927
        %929 = vrot.lane.b32.xlu0 %v360, 90
        %v930 = vpop.permute.xlu0 %929
        %931 = vrot.lane.b32.xlu0 %v361, 90
        %v932 = vpop.permute.xlu0 %931
        %933 = vrot.lane.b32.xlu0 %v422, 90
        %v934 = vpop.permute.xlu0 %933
        %935 = vrot.lane.b32.xlu0 %v362, 90
        %v936 = vpop.permute.xlu0 %935
        %937 = vrot.lane.b32.xlu0 %v363, 90
        %v938 = vpop.permute.xlu0 %937
        %939 = vrot.lane.b32.xlu0 %v364, 90
        %v940 = vpop.permute.xlu0 %939
        %941 = vrot.lane.b32.xlu0 %v365, 90
        %v942 = vpop.permute.xlu0 %941
        %943 = vrot.lane.b32.xlu0 %v366, 90
        %v944 = vpop.permute.xlu0 %943
        %945 = vrot.lane.b32.xlu0 %v367, 90
        %v946 = vpop.permute.xlu0 %945
        %947 = vrot.lane.b32.xlu0 %v368, 90
        %v948 = vpop.permute.xlu0 %947
        %949 = vrot.lane.b32.xlu0 %v369, 90
        %v950 = vpop.permute.xlu0 %949
        %951 = vrot.lane.b32.xlu0 %v428, 90
        %v952 = vpop.permute.xlu0 %951
        %vm953 = vcmask 736256
        %v954 = vsel %vm953, %v918, %v920
        %v955 = vsel %vm953, %v920, %v922
        %v956 = vsel %vm953, %v922, %v924
        %v957 = vsel %vm953, %v924, %v926
        %v958 = vsel %vm953, %v926, %v928
        %v959 = vsel %vm953, %v928, %v930
        %v960 = vsel %vm953, %v930, %v932
        %v961 = vsel %vm953, %v932, %v934
        %v962 = vsel %vm953, %v936, %v938
        %v963 = vsel %vm953, %v938, %v940
        %v964 = vsel %vm953, %v940, %v942
        %v965 = vsel %vm953, %v942, %v944
        %v966 = vsel %vm953, %v944, %v946
        %v967 = vsel %vm953, %v946, %v948
        %v968 = vsel %vm953, %v948, %v950
        %v969 = vsel %vm953, %v950, %v952
        %986 = vrot.lane.b32.xlu0 %v356, 60
        %v987 = vpop.permute.xlu0 %986
        %988 = vrot.lane.b32.xlu0 %v357, 60
        %v989 = vpop.permute.xlu0 %988
        %990 = vrot.lane.b32.xlu0 %v358, 60
        %v991 = vpop.permute.xlu0 %990
        %992 = vrot.lane.b32.xlu0 %v359, 60
        %v993 = vpop.permute.xlu0 %992
        %994 = vrot.lane.b32.xlu0 %v360, 60
        %v995 = vpop.permute.xlu0 %994
        %996 = vrot.lane.b32.xlu0 %v361, 60
        %v997 = vpop.permute.xlu0 %996
        %998 = vrot.lane.b32.xlu0 %v422, 60
        %v999 = vpop.permute.xlu0 %998
        %1000 = vrot.lane.b32.xlu0 %v423, 60
        %v1001 = vpop.permute.xlu0 %1000
        %1002 = vrot.lane.b32.xlu0 %v424, 60
        %v1003 = vpop.permute.xlu0 %1002
        %1004 = vrot.lane.b32.xlu0 %v364, 60
        %v1005 = vpop.permute.xlu0 %1004
        %1006 = vrot.lane.b32.xlu0 %v365, 60
        %v1007 = vpop.permute.xlu0 %1006
        %1008 = vrot.lane.b32.xlu0 %v366, 60
        %v1009 = vpop.permute.xlu0 %1008
        %1010 = vrot.lane.b32.xlu0 %v367, 60
        %v1011 = vpop.permute.xlu0 %1010
        %1012 = vrot.lane.b32.xlu0 %v368, 60
        %v1013 = vpop.permute.xlu0 %1012
        %1014 = vrot.lane.b32.xlu0 %v369, 60
        %v1015 = vpop.permute.xlu0 %1014
        %1016 = vrot.lane.b32.xlu0 %v428, 60
        %v1017 = vpop.permute.xlu0 %1016
        %1018 = vrot.lane.b32.xlu0 %v429, 60
        %v1019 = vpop.permute.xlu0 %1018
        %1020 = vrot.lane.b32.xlu0 %v430, 60
        %v1021 = vpop.permute.xlu0 %1020
        %vm1022 = vcmask 490496
        %v1023 = vsel %vm1022, %v987, %v989
        %v1024 = vsel %vm1022, %v989, %v991
        %v1025 = vsel %vm1022, %v991, %v993
        %v1026 = vsel %vm1022, %v993, %v995
        %v1027 = vsel %vm1022, %v995, %v997
        %v1028 = vsel %vm1022, %v997, %v999
        %v1029 = vsel %vm1022, %v999, %v1001
        %v1030 = vsel %vm1022, %v1001, %v1003
        %v1031 = vsel %vm1022, %v1005, %v1007
        %v1032 = vsel %vm1022, %v1007, %v1009
        %v1033 = vsel %vm1022, %v1009, %v1011
        %v1034 = vsel %vm1022, %v1011, %v1013
        %v1035 = vsel %vm1022, %v1013, %v1015
        %v1036 = vsel %vm1022, %v1015, %v1017
        %v1037 = vsel %vm1022, %v1017, %v1019
        %v1038 = vsel %vm1022, %v1019, %v1021
        %1055 = vrot.lane.b32.xlu0 %v356, 59
        %v1056 = vpop.permute.xlu0 %1055
        %1057 = vrot.lane.b32.xlu0 %v357, 59
        %v1058 = vpop.permute.xlu0 %1057
        %1059 = vrot.lane.b32.xlu0 %v358, 59
        %v1060 = vpop.permute.xlu0 %1059
        %1061 = vrot.lane.b32.xlu0 %v359, 59
        %v1062 = vpop.permute.xlu0 %1061
        %1063 = vrot.lane.b32.xlu0 %v360, 59
        %v1064 = vpop.permute.xlu0 %1063
        %1065 = vrot.lane.b32.xlu0 %v361, 59
        %v1066 = vpop.permute.xlu0 %1065
        %1067 = vrot.lane.b32.xlu0 %v422, 59
        %v1068 = vpop.permute.xlu0 %1067
        %1069 = vrot.lane.b32.xlu0 %v423, 59
        %v1070 = vpop.permute.xlu0 %1069
        %1071 = vrot.lane.b32.xlu0 %v424, 59
        %v1072 = vpop.permute.xlu0 %1071
        %1073 = vrot.lane.b32.xlu0 %v364, 59
        %v1074 = vpop.permute.xlu0 %1073
        %1075 = vrot.lane.b32.xlu0 %v365, 59
        %v1076 = vpop.permute.xlu0 %1075
        %1077 = vrot.lane.b32.xlu0 %v366, 59
        %v1078 = vpop.permute.xlu0 %1077
        %1079 = vrot.lane.b32.xlu0 %v367, 59
        %v1080 = vpop.permute.xlu0 %1079
        %1081 = vrot.lane.b32.xlu0 %v368, 59
        %v1082 = vpop.permute.xlu0 %1081
        %1083 = vrot.lane.b32.xlu0 %v369, 59
        %v1084 = vpop.permute.xlu0 %1083
        %1085 = vrot.lane.b32.xlu0 %v428, 59
        %v1086 = vpop.permute.xlu0 %1085
        %1087 = vrot.lane.b32.xlu0 %v429, 59
        %v1088 = vpop.permute.xlu0 %1087
        %1089 = vrot.lane.b32.xlu0 %v430, 59
        %v1090 = vpop.permute.xlu0 %1089
        %vm1091 = vcmask 482304
        %v1092 = vsel %vm1091, %v1056, %v1058
        %v1093 = vsel %vm1091, %v1058, %v1060
        %v1094 = vsel %vm1091, %v1060, %v1062
        %v1095 = vsel %vm1091, %v1062, %v1064
        %v1096 = vsel %vm1091, %v1064, %v1066
        %v1097 = vsel %vm1091, %v1066, %v1068
        %v1098 = vsel %vm1091, %v1068, %v1070
        %v1099 = vsel %vm1091, %v1070, %v1072
        %v1100 = vsel %vm1091, %v1074, %v1076
        %v1101 = vsel %vm1091, %v1076, %v1078
        %v1102 = vsel %vm1091, %v1078, %v1080
        %v1103 = vsel %vm1091, %v1080, %v1082
        %v1104 = vsel %vm1091, %v1082, %v1084
        %v1105 = vsel %vm1091, %v1084, %v1086
        %v1106 = vsel %vm1091, %v1086, %v1088
        %v1107 = vsel %vm1091, %v1088, %v1090
        %1124 = vrot.lane.b32.xlu0 %v356, 58
        %v1125 = vpop.permute.xlu0 %1124
        %1126 = vrot.lane.b32.xlu0 %v357, 58
        %v1127 = vpop.permute.xlu0 %1126
        %1128 = vrot.lane.b32.xlu0 %v358, 58
        %v1129 = vpop.permute.xlu0 %1128
        %1130 = vrot.lane.b32.xlu0 %v359, 58
        %v1131 = vpop.permute.xlu0 %1130
        %1132 = vrot.lane.b32.xlu0 %v360, 58
        %v1133 = vpop.permute.xlu0 %1132
        %1134 = vrot.lane.b32.xlu0 %v361, 58
        %v1135 = vpop.permute.xlu0 %1134
        %1136 = vrot.lane.b32.xlu0 %v422, 58
        %v1137 = vpop.permute.xlu0 %1136
        %1138 = vrot.lane.b32.xlu0 %v423, 58
        %v1139 = vpop.permute.xlu0 %1138
        %1140 = vrot.lane.b32.xlu0 %v424, 58
        %v1141 = vpop.permute.xlu0 %1140
        %1142 = vrot.lane.b32.xlu0 %v364, 58
        %v1143 = vpop.permute.xlu0 %1142
        %1144 = vrot.lane.b32.xlu0 %v365, 58
        %v1145 = vpop.permute.xlu0 %1144
        %1146 = vrot.lane.b32.xlu0 %v366, 58
        %v1147 = vpop.permute.xlu0 %1146
        %1148 = vrot.lane.b32.xlu0 %v367, 58
        %v1149 = vpop.permute.xlu0 %1148
        %1150 = vrot.lane.b32.xlu0 %v368, 58
        %v1151 = vpop.permute.xlu0 %1150
        %1152 = vrot.lane.b32.xlu0 %v369, 58
        %v1153 = vpop.permute.xlu0 %1152
        %1154 = vrot.lane.b32.xlu0 %v428, 58
        %v1155 = vpop.permute.xlu0 %1154
        %1156 = vrot.lane.b32.xlu0 %v429, 58
        %v1157 = vpop.permute.xlu0 %1156
        %1158 = vrot.lane.b32.xlu0 %v430, 58
        %v1159 = vpop.permute.xlu0 %1158
        %vm1160 = vcmask 474112
        %v1161 = vsel %vm1160, %v1125, %v1127
        %v1162 = vsel %vm1160, %v1127, %v1129
        %v1163 = vsel %vm1160, %v1129, %v1131
        %v1164 = vsel %vm1160, %v1131, %v1133
        %v1165 = vsel %vm1160, %v1133, %v1135
        %v1166 = vsel %vm1160, %v1135, %v1137
        %v1167 = vsel %vm1160, %v1137, %v1139
        %v1168 = vsel %vm1160, %v1139, %v1141
        %v1169 = vsel %vm1160, %v1143, %v1145
        %v1170 = vsel %vm1160, %v1145, %v1147
        %v1171 = vsel %vm1160, %v1147, %v1149
        %v1172 = vsel %vm1160, %v1149, %v1151
        %v1173 = vsel %vm1160, %v1151, %v1153
        %v1174 = vsel %vm1160, %v1153, %v1155
        %v1175 = vsel %vm1160, %v1155, %v1157
        %v1176 = vsel %vm1160, %v1157, %v1159
        %1193 = vrot.lane.b32.xlu0 %v356, 42
        %v1194 = vpop.permute.xlu0 %1193
        %1195 = vrot.lane.b32.xlu0 %v357, 42
        %v1196 = vpop.permute.xlu0 %1195
        %1197 = vrot.lane.b32.xlu0 %v358, 42
        %v1198 = vpop.permute.xlu0 %1197
        %1199 = vrot.lane.b32.xlu0 %v359, 42
        %v1200 = vpop.permute.xlu0 %1199
        %1201 = vrot.lane.b32.xlu0 %v360, 42
        %v1202 = vpop.permute.xlu0 %1201
        %1203 = vrot.lane.b32.xlu0 %v361, 42
        %v1204 = vpop.permute.xlu0 %1203
        %1205 = vrot.lane.b32.xlu0 %v422, 42
        %v1206 = vpop.permute.xlu0 %1205
        %1207 = vrot.lane.b32.xlu0 %v423, 42
        %v1208 = vpop.permute.xlu0 %1207
        %1209 = vrot.lane.b32.xlu0 %v424, 42
        %v1210 = vpop.permute.xlu0 %1209
        %1211 = vrot.lane.b32.xlu0 %v364, 42
        %v1212 = vpop.permute.xlu0 %1211
        %1213 = vrot.lane.b32.xlu0 %v365, 42
        %v1214 = vpop.permute.xlu0 %1213
        %1215 = vrot.lane.b32.xlu0 %v366, 42
        %v1216 = vpop.permute.xlu0 %1215
        %1217 = vrot.lane.b32.xlu0 %v367, 42
        %v1218 = vpop.permute.xlu0 %1217
        %1219 = vrot.lane.b32.xlu0 %v368, 42
        %v1220 = vpop.permute.xlu0 %1219
        %1221 = vrot.lane.b32.xlu0 %v369, 42
        %v1222 = vpop.permute.xlu0 %1221
        %1223 = vrot.lane.b32.xlu0 %v428, 42
        %v1224 = vpop.permute.xlu0 %1223
        %1225 = vrot.lane.b32.xlu0 %v429, 42
        %v1226 = vpop.permute.xlu0 %1225
        %1227 = vrot.lane.b32.xlu0 %v430, 42
        %v1228 = vpop.permute.xlu0 %1227
        %vm1229 = vcmask 343040
        %v1230 = vsel %vm1229, %v1194, %v1196
        %v1231 = vsel %vm1229, %v1196, %v1198
        %v1232 = vsel %vm1229, %v1198, %v1200
        %v1233 = vsel %vm1229, %v1200, %v1202
        %v1234 = vsel %vm1229, %v1202, %v1204
        %v1235 = vsel %vm1229, %v1204, %v1206
        %v1236 = vsel %vm1229, %v1206, %v1208
        %v1237 = vsel %vm1229, %v1208, %v1210
        %v1238 = vsel %vm1229, %v1212, %v1214
        %v1239 = vsel %vm1229, %v1214, %v1216
        %v1240 = vsel %vm1229, %v1216, %v1218
        %v1241 = vsel %vm1229, %v1218, %v1220
        %v1242 = vsel %vm1229, %v1220, %v1222
        %v1243 = vsel %vm1229, %v1222, %v1224
        %v1244 = vsel %vm1229, %v1224, %v1226
        %v1245 = vsel %vm1229, %v1226, %v1228
        %1262 = vrot.lane.b32.xlu0 %v356, 41
        %v1263 = vpop.permute.xlu0 %1262
        %1264 = vrot.lane.b32.xlu0 %v357, 41
        %v1265 = vpop.permute.xlu0 %1264
        %1266 = vrot.lane.b32.xlu0 %v358, 41
        %v1267 = vpop.permute.xlu0 %1266
        %1268 = vrot.lane.b32.xlu0 %v359, 41
        %v1269 = vpop.permute.xlu0 %1268
        %1270 = vrot.lane.b32.xlu0 %v360, 41
        %v1271 = vpop.permute.xlu0 %1270
        %1272 = vrot.lane.b32.xlu0 %v361, 41
        %v1273 = vpop.permute.xlu0 %1272
        %1274 = vrot.lane.b32.xlu0 %v422, 41
        %v1275 = vpop.permute.xlu0 %1274
        %1276 = vrot.lane.b32.xlu0 %v423, 41
        %v1277 = vpop.permute.xlu0 %1276
        %1278 = vrot.lane.b32.xlu0 %v424, 41
        %v1279 = vpop.permute.xlu0 %1278
        %1280 = vrot.lane.b32.xlu0 %v364, 41
        %v1281 = vpop.permute.xlu0 %1280
        %1282 = vrot.lane.b32.xlu0 %v365, 41
        %v1283 = vpop.permute.xlu0 %1282
        %1284 = vrot.lane.b32.xlu0 %v366, 41
        %v1285 = vpop.permute.xlu0 %1284
        %1286 = vrot.lane.b32.xlu0 %v367, 41
        %v1287 = vpop.permute.xlu0 %1286
        %1288 = vrot.lane.b32.xlu0 %v368, 41
        %v1289 = vpop.permute.xlu0 %1288
        %1290 = vrot.lane.b32.xlu0 %v369, 41
        %v1291 = vpop.permute.xlu0 %1290
        %1292 = vrot.lane.b32.xlu0 %v428, 41
        %v1293 = vpop.permute.xlu0 %1292
        %1294 = vrot.lane.b32.xlu0 %v429, 41
        %v1295 = vpop.permute.xlu0 %1294
        %1296 = vrot.lane.b32.xlu0 %v430, 41
        %v1297 = vpop.permute.xlu0 %1296
        %vm1298 = vcmask 334848
        %v1299 = vsel %vm1298, %v1263, %v1265
        %v1300 = vsel %vm1298, %v1265, %v1267
        %v1301 = vsel %vm1298, %v1267, %v1269
        %v1302 = vsel %vm1298, %v1269, %v1271
        %v1303 = vsel %vm1298, %v1271, %v1273
        %v1304 = vsel %vm1298, %v1273, %v1275
        %v1305 = vsel %vm1298, %v1275, %v1277
        %v1306 = vsel %vm1298, %v1277, %v1279
        %v1307 = vsel %vm1298, %v1281, %v1283
        %v1308 = vsel %vm1298, %v1283, %v1285
        %v1309 = vsel %vm1298, %v1285, %v1287
        %v1310 = vsel %vm1298, %v1287, %v1289
        %v1311 = vsel %vm1298, %v1289, %v1291
        %v1312 = vsel %vm1298, %v1291, %v1293
        %v1313 = vsel %vm1298, %v1293, %v1295
        %v1314 = vsel %vm1298, %v1295, %v1297
        %1331 = vrot.lane.b32.xlu0 %v356, 40
        %v1332 = vpop.permute.xlu0 %1331
        %1333 = vrot.lane.b32.xlu0 %v357, 40
        %v1334 = vpop.permute.xlu0 %1333
        %1335 = vrot.lane.b32.xlu0 %v358, 40
        %v1336 = vpop.permute.xlu0 %1335
        %1337 = vrot.lane.b32.xlu0 %v359, 40
        %v1338 = vpop.permute.xlu0 %1337
        %1339 = vrot.lane.b32.xlu0 %v360, 40
        %v1340 = vpop.permute.xlu0 %1339
        %1341 = vrot.lane.b32.xlu0 %v361, 40
        %v1342 = vpop.permute.xlu0 %1341
        %1343 = vrot.lane.b32.xlu0 %v422, 40
        %v1344 = vpop.permute.xlu0 %1343
        %1345 = vrot.lane.b32.xlu0 %v423, 40
        %v1346 = vpop.permute.xlu0 %1345
        %1347 = vrot.lane.b32.xlu0 %v424, 40
        %v1348 = vpop.permute.xlu0 %1347
        %1349 = vrot.lane.b32.xlu0 %v364, 40
        %v1350 = vpop.permute.xlu0 %1349
        %1351 = vrot.lane.b32.xlu0 %v365, 40
        %v1352 = vpop.permute.xlu0 %1351
        %1353 = vrot.lane.b32.xlu0 %v366, 40
        %v1354 = vpop.permute.xlu0 %1353
        %1355 = vrot.lane.b32.xlu0 %v367, 40
        %v1356 = vpop.permute.xlu0 %1355
        %1357 = vrot.lane.b32.xlu0 %v368, 40
        %v1358 = vpop.permute.xlu0 %1357
        %1359 = vrot.lane.b32.xlu0 %v369, 40
        %v1360 = vpop.permute.xlu0 %1359
        %1361 = vrot.lane.b32.xlu0 %v428, 40
        %v1362 = vpop.permute.xlu0 %1361
        %1363 = vrot.lane.b32.xlu0 %v429, 40
        %v1364 = vpop.permute.xlu0 %1363
        %1365 = vrot.lane.b32.xlu0 %v430, 40
        %v1366 = vpop.permute.xlu0 %1365
        %vm1367 = vcmask 326656
        %v1368 = vsel %vm1367, %v1332, %v1334
        %v1369 = vsel %vm1367, %v1334, %v1336
        %v1370 = vsel %vm1367, %v1336, %v1338
        %v1371 = vsel %vm1367, %v1338, %v1340
        %v1372 = vsel %vm1367, %v1340, %v1342
        %v1373 = vsel %vm1367, %v1342, %v1344
        %v1374 = vsel %vm1367, %v1344, %v1346
        %v1375 = vsel %vm1367, %v1346, %v1348
        %v1376 = vsel %vm1367, %v1350, %v1352
        %v1377 = vsel %vm1367, %v1352, %v1354
        %v1378 = vsel %vm1367, %v1354, %v1356
        %v1379 = vsel %vm1367, %v1356, %v1358
        %v1380 = vsel %vm1367, %v1358, %v1360
        %v1381 = vsel %vm1367, %v1360, %v1362
        %v1382 = vsel %vm1367, %v1362, %v1364
        %v1383 = vsel %vm1367, %v1364, %v1366
        %1400 = vrot.lane.b32.xlu0 %v356, 24
        %v1401 = vpop.permute.xlu0 %1400
        %1402 = vrot.lane.b32.xlu0 %v357, 24
        %v1403 = vpop.permute.xlu0 %1402
        %1404 = vrot.lane.b32.xlu0 %v358, 24
        %v1405 = vpop.permute.xlu0 %1404
        %1406 = vrot.lane.b32.xlu0 %v359, 24
        %v1407 = vpop.permute.xlu0 %1406
        %1408 = vrot.lane.b32.xlu0 %v360, 24
        %v1409 = vpop.permute.xlu0 %1408
        %1410 = vrot.lane.b32.xlu0 %v361, 24
        %v1411 = vpop.permute.xlu0 %1410
        %1412 = vrot.lane.b32.xlu0 %v422, 24
        %v1413 = vpop.permute.xlu0 %1412
        %1414 = vrot.lane.b32.xlu0 %v423, 24
        %v1415 = vpop.permute.xlu0 %1414
        %1416 = vrot.lane.b32.xlu0 %v424, 24
        %v1417 = vpop.permute.xlu0 %1416
        %1418 = vrot.lane.b32.xlu0 %v364, 24
        %v1419 = vpop.permute.xlu0 %1418
        %1420 = vrot.lane.b32.xlu0 %v365, 24
        %v1421 = vpop.permute.xlu0 %1420
        %1422 = vrot.lane.b32.xlu0 %v366, 24
        %v1423 = vpop.permute.xlu0 %1422
        %1424 = vrot.lane.b32.xlu0 %v367, 24
        %v1425 = vpop.permute.xlu0 %1424
        %1426 = vrot.lane.b32.xlu0 %v368, 24
        %v1427 = vpop.permute.xlu0 %1426
        %1428 = vrot.lane.b32.xlu0 %v369, 24
        %v1429 = vpop.permute.xlu0 %1428
        %1430 = vrot.lane.b32.xlu0 %v428, 24
        %v1431 = vpop.permute.xlu0 %1430
        %1432 = vrot.lane.b32.xlu0 %v429, 24
        %v1433 = vpop.permute.xlu0 %1432
        %1434 = vrot.lane.b32.xlu0 %v430, 24
        %v1435 = vpop.permute.xlu0 %1434
        %vm1436 = vcmask 195584
        %v1437 = vsel %vm1436, %v1401, %v1403
        %v1438 = vsel %vm1436, %v1403, %v1405
        %v1439 = vsel %vm1436, %v1405, %v1407
        %v1440 = vsel %vm1436, %v1407, %v1409
        %v1441 = vsel %vm1436, %v1409, %v1411
        %v1442 = vsel %vm1436, %v1411, %v1413
        %v1443 = vsel %vm1436, %v1413, %v1415
        %v1444 = vsel %vm1436, %v1415, %v1417
        %v1445 = vsel %vm1436, %v1419, %v1421
        %v1446 = vsel %vm1436, %v1421, %v1423
        %v1447 = vsel %vm1436, %v1423, %v1425
        %v1448 = vsel %vm1436, %v1425, %v1427
        %v1449 = vsel %vm1436, %v1427, %v1429
        %v1450 = vsel %vm1436, %v1429, %v1431
        %v1451 = vsel %vm1436, %v1431, %v1433
        %v1452 = vsel %vm1436, %v1433, %v1435
        %1469 = vrot.lane.b32.xlu0 %v423, 127
        %v1470 = vpop.permute.xlu0 %1469
        %1471 = vrot.lane.b32.xlu0 %v424, 127
        %v1472 = vpop.permute.xlu0 %1471
        %1473 = vrot.lane.b32.xlu0 %v429, 127
        %v1474 = vpop.permute.xlu0 %1473
        %1475 = vrot.lane.b32.xlu0 %v430, 127
        %v1476 = vpop.permute.xlu0 %1475
        %v1477 = vsel %vm470, %v451, %v1470
        %v1478 = vsel %vm470, %v1470, %v1472
        %v1479 = vsel %vm470, %v469, %v1474
        %v1480 = vsel %vm470, %v1474, %v1476
        %1481 = vrot.lane.b32.xlu0 %v359, 97
        %v1482 = vpop.permute.xlu0 %1481
        %1483 = vrot.lane.b32.xlu0 %v360, 97
        %v1484 = vpop.permute.xlu0 %1483
        %1485 = vrot.lane.b32.xlu0 %v361, 97
        %v1486 = vpop.permute.xlu0 %1485
        %1487 = vrot.lane.b32.xlu0 %v422, 97
        %v1488 = vpop.permute.xlu0 %1487
        %1489 = vrot.lane.b32.xlu0 %v423, 97
        %v1490 = vpop.permute.xlu0 %1489
        %1491 = vrot.lane.b32.xlu0 %v424, 97
        %v1492 = vpop.permute.xlu0 %1491
        %1493 = vrot.lane.b32.xlu0 %v425, 97
        %v1494 = vpop.permute.xlu0 %1493
        %1495 = vrot.lane.b32.xlu0 %v426, 97
        %v1496 = vpop.permute.xlu0 %1495
        %1497 = vrot.lane.b32.xlu0 %v427, 97
        %v1498 = vpop.permute.xlu0 %1497
        %1499 = vrot.lane.b32.xlu0 %v367, 97
        %v1500 = vpop.permute.xlu0 %1499
        %1501 = vrot.lane.b32.xlu0 %v368, 97
        %v1502 = vpop.permute.xlu0 %1501
        %1503 = vrot.lane.b32.xlu0 %v369, 97
        %v1504 = vpop.permute.xlu0 %1503
        %1505 = vrot.lane.b32.xlu0 %v428, 97
        %v1506 = vpop.permute.xlu0 %1505
        %1507 = vrot.lane.b32.xlu0 %v429, 97
        %v1508 = vpop.permute.xlu0 %1507
        %1509 = vrot.lane.b32.xlu0 %v430, 97
        %v1510 = vpop.permute.xlu0 %1509
        %1511 = vrot.lane.b32.xlu0 %v431, 97
        %v1512 = vpop.permute.xlu0 %1511
        %1513 = vrot.lane.b32.xlu0 %v432, 97
        %v1514 = vpop.permute.xlu0 %1513
        %1515 = vrot.lane.b32.xlu0 %v433, 97
        %v1516 = vpop.permute.xlu0 %1515
        %vm1517 = vcmask 793600
        %v1518 = vsel %vm1517, %v1482, %v1484
        %v1519 = vsel %vm1517, %v1484, %v1486
        %v1520 = vsel %vm1517, %v1486, %v1488
        %v1521 = vsel %vm1517, %v1488, %v1490
        %v1522 = vsel %vm1517, %v1490, %v1492
        %v1523 = vsel %vm1517, %v1492, %v1494
        %v1524 = vsel %vm1517, %v1494, %v1496
        %v1525 = vsel %vm1517, %v1496, %v1498
        %v1526 = vsel %vm1517, %v1500, %v1502
        %v1527 = vsel %vm1517, %v1502, %v1504
        %v1528 = vsel %vm1517, %v1504, %v1506
        %v1529 = vsel %vm1517, %v1506, %v1508
        %v1530 = vsel %vm1517, %v1508, %v1510
        %v1531 = vsel %vm1517, %v1510, %v1512
        %v1532 = vsel %vm1517, %v1512, %v1514
        %v1533 = vsel %vm1517, %v1514, %v1516
        %1534 = vrot.lane.b32.xlu0 %v359, 96
        %v1535 = vpop.permute.xlu0 %1534
        %1536 = vrot.lane.b32.xlu0 %v360, 96
        %v1537 = vpop.permute.xlu0 %1536
        %1538 = vrot.lane.b32.xlu0 %v361, 96
        %v1539 = vpop.permute.xlu0 %1538
        %1540 = vrot.lane.b32.xlu0 %v422, 96
        %v1541 = vpop.permute.xlu0 %1540
        %1542 = vrot.lane.b32.xlu0 %v423, 96
        %v1543 = vpop.permute.xlu0 %1542
        %1544 = vrot.lane.b32.xlu0 %v424, 96
        %v1545 = vpop.permute.xlu0 %1544
        %1546 = vrot.lane.b32.xlu0 %v425, 96
        %v1547 = vpop.permute.xlu0 %1546
        %1548 = vrot.lane.b32.xlu0 %v426, 96
        %v1549 = vpop.permute.xlu0 %1548
        %1550 = vrot.lane.b32.xlu0 %v427, 96
        %v1551 = vpop.permute.xlu0 %1550
        %1552 = vrot.lane.b32.xlu0 %v367, 96
        %v1553 = vpop.permute.xlu0 %1552
        %1554 = vrot.lane.b32.xlu0 %v368, 96
        %v1555 = vpop.permute.xlu0 %1554
        %1556 = vrot.lane.b32.xlu0 %v369, 96
        %v1557 = vpop.permute.xlu0 %1556
        %1558 = vrot.lane.b32.xlu0 %v428, 96
        %v1559 = vpop.permute.xlu0 %1558
        %1560 = vrot.lane.b32.xlu0 %v429, 96
        %v1561 = vpop.permute.xlu0 %1560
        %1562 = vrot.lane.b32.xlu0 %v430, 96
        %v1563 = vpop.permute.xlu0 %1562
        %1564 = vrot.lane.b32.xlu0 %v431, 96
        %v1565 = vpop.permute.xlu0 %1564
        %1566 = vrot.lane.b32.xlu0 %v432, 96
        %v1567 = vpop.permute.xlu0 %1566
        %1568 = vrot.lane.b32.xlu0 %v433, 96
        %v1569 = vpop.permute.xlu0 %1568
        %vm1570 = vcmask 785408
        %v1571 = vsel %vm1570, %v1535, %v1537
        %v1572 = vsel %vm1570, %v1537, %v1539
        %v1573 = vsel %vm1570, %v1539, %v1541
        %v1574 = vsel %vm1570, %v1541, %v1543
        %v1575 = vsel %vm1570, %v1543, %v1545
        %v1576 = vsel %vm1570, %v1545, %v1547
        %v1577 = vsel %vm1570, %v1547, %v1549
        %v1578 = vsel %vm1570, %v1549, %v1551
        %v1579 = vsel %vm1570, %v1553, %v1555
        %v1580 = vsel %vm1570, %v1555, %v1557
        %v1581 = vsel %vm1570, %v1557, %v1559
        %v1582 = vsel %vm1570, %v1559, %v1561
        %v1583 = vsel %vm1570, %v1561, %v1563
        %v1584 = vsel %vm1570, %v1563, %v1565
        %v1585 = vsel %vm1570, %v1565, %v1567
        %v1586 = vsel %vm1570, %v1567, %v1569
        %1587 = vrot.lane.b32.xlu0 %v359, 95
        %v1588 = vpop.permute.xlu0 %1587
        %1589 = vrot.lane.b32.xlu0 %v360, 95
        %v1590 = vpop.permute.xlu0 %1589
        %1591 = vrot.lane.b32.xlu0 %v361, 95
        %v1592 = vpop.permute.xlu0 %1591
        %1593 = vrot.lane.b32.xlu0 %v422, 95
        %v1594 = vpop.permute.xlu0 %1593
        %1595 = vrot.lane.b32.xlu0 %v423, 95
        %v1596 = vpop.permute.xlu0 %1595
        %1597 = vrot.lane.b32.xlu0 %v424, 95
        %v1598 = vpop.permute.xlu0 %1597
        %1599 = vrot.lane.b32.xlu0 %v425, 95
        %v1600 = vpop.permute.xlu0 %1599
        %1601 = vrot.lane.b32.xlu0 %v426, 95
        %v1602 = vpop.permute.xlu0 %1601
        %1603 = vrot.lane.b32.xlu0 %v427, 95
        %v1604 = vpop.permute.xlu0 %1603
        %1605 = vrot.lane.b32.xlu0 %v367, 95
        %v1606 = vpop.permute.xlu0 %1605
        %1607 = vrot.lane.b32.xlu0 %v368, 95
        %v1608 = vpop.permute.xlu0 %1607
        %1609 = vrot.lane.b32.xlu0 %v369, 95
        %v1610 = vpop.permute.xlu0 %1609
        %1611 = vrot.lane.b32.xlu0 %v428, 95
        %v1612 = vpop.permute.xlu0 %1611
        %1613 = vrot.lane.b32.xlu0 %v429, 95
        %v1614 = vpop.permute.xlu0 %1613
        %1615 = vrot.lane.b32.xlu0 %v430, 95
        %v1616 = vpop.permute.xlu0 %1615
        %1617 = vrot.lane.b32.xlu0 %v431, 95
        %v1618 = vpop.permute.xlu0 %1617
        %1619 = vrot.lane.b32.xlu0 %v432, 95
        %v1620 = vpop.permute.xlu0 %1619
        %1621 = vrot.lane.b32.xlu0 %v433, 95
        %v1622 = vpop.permute.xlu0 %1621
        %vm1623 = vcmask 777216
        %v1624 = vsel %vm1623, %v1588, %v1590
        %v1625 = vsel %vm1623, %v1590, %v1592
        %v1626 = vsel %vm1623, %v1592, %v1594
        %v1627 = vsel %vm1623, %v1594, %v1596
        %v1628 = vsel %vm1623, %v1596, %v1598
        %v1629 = vsel %vm1623, %v1598, %v1600
        %v1630 = vsel %vm1623, %v1600, %v1602
        %v1631 = vsel %vm1623, %v1602, %v1604
        %v1632 = vsel %vm1623, %v1606, %v1608
        %v1633 = vsel %vm1623, %v1608, %v1610
        %v1634 = vsel %vm1623, %v1610, %v1612
        %v1635 = vsel %vm1623, %v1612, %v1614
        %v1636 = vsel %vm1623, %v1614, %v1616
        %v1637 = vsel %vm1623, %v1616, %v1618
        %v1638 = vsel %vm1623, %v1618, %v1620
        %v1639 = vsel %vm1623, %v1620, %v1622
        %1640 = vrot.lane.b32.xlu0 %v359, 79
        %v1641 = vpop.permute.xlu0 %1640
        %1642 = vrot.lane.b32.xlu0 %v360, 79
        %v1643 = vpop.permute.xlu0 %1642
        %1644 = vrot.lane.b32.xlu0 %v361, 79
        %v1645 = vpop.permute.xlu0 %1644
        %1646 = vrot.lane.b32.xlu0 %v422, 79
        %v1647 = vpop.permute.xlu0 %1646
        %1648 = vrot.lane.b32.xlu0 %v423, 79
        %v1649 = vpop.permute.xlu0 %1648
        %1650 = vrot.lane.b32.xlu0 %v424, 79
        %v1651 = vpop.permute.xlu0 %1650
        %1652 = vrot.lane.b32.xlu0 %v425, 79
        %v1653 = vpop.permute.xlu0 %1652
        %1654 = vrot.lane.b32.xlu0 %v426, 79
        %v1655 = vpop.permute.xlu0 %1654
        %1656 = vrot.lane.b32.xlu0 %v427, 79
        %v1657 = vpop.permute.xlu0 %1656
        %1658 = vrot.lane.b32.xlu0 %v367, 79
        %v1659 = vpop.permute.xlu0 %1658
        %1660 = vrot.lane.b32.xlu0 %v368, 79
        %v1661 = vpop.permute.xlu0 %1660
        %1662 = vrot.lane.b32.xlu0 %v369, 79
        %v1663 = vpop.permute.xlu0 %1662
        %1664 = vrot.lane.b32.xlu0 %v428, 79
        %v1665 = vpop.permute.xlu0 %1664
        %1666 = vrot.lane.b32.xlu0 %v429, 79
        %v1667 = vpop.permute.xlu0 %1666
        %1668 = vrot.lane.b32.xlu0 %v430, 79
        %v1669 = vpop.permute.xlu0 %1668
        %1670 = vrot.lane.b32.xlu0 %v431, 79
        %v1671 = vpop.permute.xlu0 %1670
        %1672 = vrot.lane.b32.xlu0 %v432, 79
        %v1673 = vpop.permute.xlu0 %1672
        %1674 = vrot.lane.b32.xlu0 %v433, 79
        %v1675 = vpop.permute.xlu0 %1674
        %vm1676 = vcmask 646144
        %v1677 = vsel %vm1676, %v1641, %v1643
        %v1678 = vsel %vm1676, %v1643, %v1645
        %v1679 = vsel %vm1676, %v1645, %v1647
        %v1680 = vsel %vm1676, %v1647, %v1649
        %v1681 = vsel %vm1676, %v1649, %v1651
        %v1682 = vsel %vm1676, %v1651, %v1653
        %v1683 = vsel %vm1676, %v1653, %v1655
        %v1684 = vsel %vm1676, %v1655, %v1657
        %v1685 = vsel %vm1676, %v1659, %v1661
        %v1686 = vsel %vm1676, %v1661, %v1663
        %v1687 = vsel %vm1676, %v1663, %v1665
        %v1688 = vsel %vm1676, %v1665, %v1667
        %v1689 = vsel %vm1676, %v1667, %v1669
        %v1690 = vsel %vm1676, %v1669, %v1671
        %v1691 = vsel %vm1676, %v1671, %v1673
        %v1692 = vsel %vm1676, %v1673, %v1675
        %1693 = vrot.lane.b32.xlu0 %v359, 78
        %v1694 = vpop.permute.xlu0 %1693
        %1695 = vrot.lane.b32.xlu0 %v360, 78
        %v1696 = vpop.permute.xlu0 %1695
        %1697 = vrot.lane.b32.xlu0 %v361, 78
        %v1698 = vpop.permute.xlu0 %1697
        %1699 = vrot.lane.b32.xlu0 %v422, 78
        %v1700 = vpop.permute.xlu0 %1699
        %1701 = vrot.lane.b32.xlu0 %v423, 78
        %v1702 = vpop.permute.xlu0 %1701
        %1703 = vrot.lane.b32.xlu0 %v424, 78
        %v1704 = vpop.permute.xlu0 %1703
        %1705 = vrot.lane.b32.xlu0 %v425, 78
        %v1706 = vpop.permute.xlu0 %1705
        %1707 = vrot.lane.b32.xlu0 %v426, 78
        %v1708 = vpop.permute.xlu0 %1707
        %1709 = vrot.lane.b32.xlu0 %v427, 78
        %v1710 = vpop.permute.xlu0 %1709
        %1711 = vrot.lane.b32.xlu0 %v367, 78
        %v1712 = vpop.permute.xlu0 %1711
        %1713 = vrot.lane.b32.xlu0 %v368, 78
        %v1714 = vpop.permute.xlu0 %1713
        %1715 = vrot.lane.b32.xlu0 %v369, 78
        %v1716 = vpop.permute.xlu0 %1715
        %1717 = vrot.lane.b32.xlu0 %v428, 78
        %v1718 = vpop.permute.xlu0 %1717
        %1719 = vrot.lane.b32.xlu0 %v429, 78
        %v1720 = vpop.permute.xlu0 %1719
        %1721 = vrot.lane.b32.xlu0 %v430, 78
        %v1722 = vpop.permute.xlu0 %1721
        %1723 = vrot.lane.b32.xlu0 %v431, 78
        %v1724 = vpop.permute.xlu0 %1723
        %1725 = vrot.lane.b32.xlu0 %v432, 78
        %v1726 = vpop.permute.xlu0 %1725
        %1727 = vrot.lane.b32.xlu0 %v433, 78
        %v1728 = vpop.permute.xlu0 %1727
        %vm1729 = vcmask 637952
        %v1730 = vsel %vm1729, %v1694, %v1696
        %v1731 = vsel %vm1729, %v1696, %v1698
        %v1732 = vsel %vm1729, %v1698, %v1700
        %v1733 = vsel %vm1729, %v1700, %v1702
        %v1734 = vsel %vm1729, %v1702, %v1704
        %v1735 = vsel %vm1729, %v1704, %v1706
        %v1736 = vsel %vm1729, %v1706, %v1708
        %v1737 = vsel %vm1729, %v1708, %v1710
        %v1738 = vsel %vm1729, %v1712, %v1714
        %v1739 = vsel %vm1729, %v1714, %v1716
        %v1740 = vsel %vm1729, %v1716, %v1718
        %v1741 = vsel %vm1729, %v1718, %v1720
        %v1742 = vsel %vm1729, %v1720, %v1722
        %v1743 = vsel %vm1729, %v1722, %v1724
        %v1744 = vsel %vm1729, %v1724, %v1726
        %v1745 = vsel %vm1729, %v1726, %v1728
        %1746 = vrot.lane.b32.xlu0 %v359, 77
        %v1747 = vpop.permute.xlu0 %1746
        %1748 = vrot.lane.b32.xlu0 %v360, 77
        %v1749 = vpop.permute.xlu0 %1748
        %1750 = vrot.lane.b32.xlu0 %v361, 77
        %v1751 = vpop.permute.xlu0 %1750
        %1752 = vrot.lane.b32.xlu0 %v422, 77
        %v1753 = vpop.permute.xlu0 %1752
        %1754 = vrot.lane.b32.xlu0 %v423, 77
        %v1755 = vpop.permute.xlu0 %1754
        %1756 = vrot.lane.b32.xlu0 %v424, 77
        %v1757 = vpop.permute.xlu0 %1756
        %1758 = vrot.lane.b32.xlu0 %v425, 77
        %v1759 = vpop.permute.xlu0 %1758
        %1760 = vrot.lane.b32.xlu0 %v426, 77
        %v1761 = vpop.permute.xlu0 %1760
        %1762 = vrot.lane.b32.xlu0 %v427, 77
        %v1763 = vpop.permute.xlu0 %1762
        %1764 = vrot.lane.b32.xlu0 %v367, 77
        %v1765 = vpop.permute.xlu0 %1764
        %1766 = vrot.lane.b32.xlu0 %v368, 77
        %v1767 = vpop.permute.xlu0 %1766
        %1768 = vrot.lane.b32.xlu0 %v369, 77
        %v1769 = vpop.permute.xlu0 %1768
        %1770 = vrot.lane.b32.xlu0 %v428, 77
        %v1771 = vpop.permute.xlu0 %1770
        %1772 = vrot.lane.b32.xlu0 %v429, 77
        %v1773 = vpop.permute.xlu0 %1772
        %1774 = vrot.lane.b32.xlu0 %v430, 77
        %v1775 = vpop.permute.xlu0 %1774
        %1776 = vrot.lane.b32.xlu0 %v431, 77
        %v1777 = vpop.permute.xlu0 %1776
        %1778 = vrot.lane.b32.xlu0 %v432, 77
        %v1779 = vpop.permute.xlu0 %1778
        %1780 = vrot.lane.b32.xlu0 %v433, 77
        %v1781 = vpop.permute.xlu0 %1780
        %vm1782 = vcmask 629760
        %v1783 = vsel %vm1782, %v1747, %v1749
        %v1784 = vsel %vm1782, %v1749, %v1751
        %v1785 = vsel %vm1782, %v1751, %v1753
        %v1786 = vsel %vm1782, %v1753, %v1755
        %v1787 = vsel %vm1782, %v1755, %v1757
        %v1788 = vsel %vm1782, %v1757, %v1759
        %v1789 = vsel %vm1782, %v1759, %v1761
        %v1790 = vsel %vm1782, %v1761, %v1763
        %v1791 = vsel %vm1782, %v1765, %v1767
        %v1792 = vsel %vm1782, %v1767, %v1769
        %v1793 = vsel %vm1782, %v1769, %v1771
        %v1794 = vsel %vm1782, %v1771, %v1773
        %v1795 = vsel %vm1782, %v1773, %v1775
        %v1796 = vsel %vm1782, %v1775, %v1777
        %v1797 = vsel %vm1782, %v1777, %v1779
        %v1798 = vsel %vm1782, %v1779, %v1781
        %1799 = vrot.lane.b32.xlu0 %v359, 61
        %v1800 = vpop.permute.xlu0 %1799
        %1801 = vrot.lane.b32.xlu0 %v360, 61
        %v1802 = vpop.permute.xlu0 %1801
        %1803 = vrot.lane.b32.xlu0 %v361, 61
        %v1804 = vpop.permute.xlu0 %1803
        %1805 = vrot.lane.b32.xlu0 %v422, 61
        %v1806 = vpop.permute.xlu0 %1805
        %1807 = vrot.lane.b32.xlu0 %v423, 61
        %v1808 = vpop.permute.xlu0 %1807
        %1809 = vrot.lane.b32.xlu0 %v424, 61
        %v1810 = vpop.permute.xlu0 %1809
        %1811 = vrot.lane.b32.xlu0 %v425, 61
        %v1812 = vpop.permute.xlu0 %1811
        %1813 = vrot.lane.b32.xlu0 %v426, 61
        %v1814 = vpop.permute.xlu0 %1813
        %1815 = vrot.lane.b32.xlu0 %v427, 61
        %v1816 = vpop.permute.xlu0 %1815
        %1817 = vrot.lane.b32.xlu0 %v367, 61
        %v1818 = vpop.permute.xlu0 %1817
        %1819 = vrot.lane.b32.xlu0 %v368, 61
        %v1820 = vpop.permute.xlu0 %1819
        %1821 = vrot.lane.b32.xlu0 %v369, 61
        %v1822 = vpop.permute.xlu0 %1821
        %1823 = vrot.lane.b32.xlu0 %v428, 61
        %v1824 = vpop.permute.xlu0 %1823
        %1825 = vrot.lane.b32.xlu0 %v429, 61
        %v1826 = vpop.permute.xlu0 %1825
        %1827 = vrot.lane.b32.xlu0 %v430, 61
        %v1828 = vpop.permute.xlu0 %1827
        %1829 = vrot.lane.b32.xlu0 %v431, 61
        %v1830 = vpop.permute.xlu0 %1829
        %1831 = vrot.lane.b32.xlu0 %v432, 61
        %v1832 = vpop.permute.xlu0 %1831
        %1833 = vrot.lane.b32.xlu0 %v433, 61
        %v1834 = vpop.permute.xlu0 %1833
        %vm1835 = vcmask 498688
        %v1836 = vsel %vm1835, %v1800, %v1802
        %v1837 = vsel %vm1835, %v1802, %v1804
        %v1838 = vsel %vm1835, %v1804, %v1806
        %v1839 = vsel %vm1835, %v1806, %v1808
        %v1840 = vsel %vm1835, %v1808, %v1810
        %v1841 = vsel %vm1835, %v1810, %v1812
        %v1842 = vsel %vm1835, %v1812, %v1814
        %v1843 = vsel %vm1835, %v1814, %v1816
        %v1844 = vsel %vm1835, %v1818, %v1820
        %v1845 = vsel %vm1835, %v1820, %v1822
        %v1846 = vsel %vm1835, %v1822, %v1824
        %v1847 = vsel %vm1835, %v1824, %v1826
        %v1848 = vsel %vm1835, %v1826, %v1828
        %v1849 = vsel %vm1835, %v1828, %v1830
        %v1850 = vsel %vm1835, %v1830, %v1832
        %v1851 = vsel %vm1835, %v1832, %v1834
        %1852 = vrot.lane.b32.xlu0 %v425, 60
        %v1853 = vpop.permute.xlu0 %1852
        %1854 = vrot.lane.b32.xlu0 %v426, 60
        %v1855 = vpop.permute.xlu0 %1854
        %1856 = vrot.lane.b32.xlu0 %v427, 60
        %v1857 = vpop.permute.xlu0 %1856
        %1858 = vrot.lane.b32.xlu0 %v431, 60
        %v1859 = vpop.permute.xlu0 %1858
        %1860 = vrot.lane.b32.xlu0 %v432, 60
        %v1861 = vpop.permute.xlu0 %1860
        %1862 = vrot.lane.b32.xlu0 %v433, 60
        %v1863 = vpop.permute.xlu0 %1862
        %v1864 = vsel %vm1022, %v1003, %v1853
        %v1865 = vsel %vm1022, %v1853, %v1855
        %v1866 = vsel %vm1022, %v1855, %v1857
        %v1867 = vsel %vm1022, %v1021, %v1859
        %v1868 = vsel %vm1022, %v1859, %v1861
        %v1869 = vsel %vm1022, %v1861, %v1863
        %1870 = vrot.lane.b32.xlu0 %v425, 59
        %v1871 = vpop.permute.xlu0 %1870
        %1872 = vrot.lane.b32.xlu0 %v426, 59
        %v1873 = vpop.permute.xlu0 %1872
        %1874 = vrot.lane.b32.xlu0 %v427, 59
        %v1875 = vpop.permute.xlu0 %1874
        %1876 = vrot.lane.b32.xlu0 %v431, 59
        %v1877 = vpop.permute.xlu0 %1876
        %1878 = vrot.lane.b32.xlu0 %v432, 59
        %v1879 = vpop.permute.xlu0 %1878
        %1880 = vrot.lane.b32.xlu0 %v433, 59
        %v1881 = vpop.permute.xlu0 %1880
        %v1882 = vsel %vm1091, %v1072, %v1871
        %v1883 = vsel %vm1091, %v1871, %v1873
        %v1884 = vsel %vm1091, %v1873, %v1875
        %v1885 = vsel %vm1091, %v1090, %v1877
        %v1886 = vsel %vm1091, %v1877, %v1879
        %v1887 = vsel %vm1091, %v1879, %v1881
        %1888 = vrot.lane.b32.xlu0 %v356, 23
        %v1889 = vpop.permute.xlu0 %1888
        %1890 = vrot.lane.b32.xlu0 %v357, 23
        %v1891 = vpop.permute.xlu0 %1890
        %1892 = vrot.lane.b32.xlu0 %v358, 23
        %v1893 = vpop.permute.xlu0 %1892
        %1894 = vrot.lane.b32.xlu0 %v359, 23
        %v1895 = vpop.permute.xlu0 %1894
        %1896 = vrot.lane.b32.xlu0 %v360, 23
        %v1897 = vpop.permute.xlu0 %1896
        %1898 = vrot.lane.b32.xlu0 %v361, 23
        %v1899 = vpop.permute.xlu0 %1898
        %1900 = vrot.lane.b32.xlu0 %v422, 23
        %v1901 = vpop.permute.xlu0 %1900
        %1902 = vrot.lane.b32.xlu0 %v423, 23
        %v1903 = vpop.permute.xlu0 %1902
        %1904 = vrot.lane.b32.xlu0 %v424, 23
        %v1905 = vpop.permute.xlu0 %1904
        %1906 = vrot.lane.b32.xlu0 %v364, 23
        %v1907 = vpop.permute.xlu0 %1906
        %1908 = vrot.lane.b32.xlu0 %v365, 23
        %v1909 = vpop.permute.xlu0 %1908
        %1910 = vrot.lane.b32.xlu0 %v366, 23
        %v1911 = vpop.permute.xlu0 %1910
        %1912 = vrot.lane.b32.xlu0 %v367, 23
        %v1913 = vpop.permute.xlu0 %1912
        %1914 = vrot.lane.b32.xlu0 %v368, 23
        %v1915 = vpop.permute.xlu0 %1914
        %1916 = vrot.lane.b32.xlu0 %v369, 23
        %v1917 = vpop.permute.xlu0 %1916
        %1918 = vrot.lane.b32.xlu0 %v428, 23
        %v1919 = vpop.permute.xlu0 %1918
        %1920 = vrot.lane.b32.xlu0 %v429, 23
        %v1921 = vpop.permute.xlu0 %1920
        %1922 = vrot.lane.b32.xlu0 %v430, 23
        %v1923 = vpop.permute.xlu0 %1922
        %1924 = vrot.lane.b32.xlu0 %v473, 23
        %v1925 = vpop.permute.xlu0 %1924
        %1926 = vrot.lane.b32.xlu0 %v474, 23
        %v1927 = vpop.permute.xlu0 %1926
        %1928 = vrot.lane.b32.xlu0 %v475, 23
        %v1929 = vpop.permute.xlu0 %1928
        %1930 = vrot.lane.b32.xlu0 %v476, 23
        %v1931 = vpop.permute.xlu0 %1930
        %1932 = vrot.lane.b32.xlu0 %v477, 23
        %v1933 = vpop.permute.xlu0 %1932
        %1934 = vrot.lane.b32.xlu0 %v478, 23
        %v1935 = vpop.permute.xlu0 %1934
        %1936 = vrot.lane.b32.xlu0 %v1477, 23
        %v1937 = vpop.permute.xlu0 %1936
        %1938 = vrot.lane.b32.xlu0 %v1478, 23
        %v1939 = vpop.permute.xlu0 %1938
        %1940 = vrot.lane.b32.xlu0 %v1472, 23
        %v1941 = vpop.permute.xlu0 %1940
        %1942 = vrot.lane.b32.xlu0 %v481, 23
        %v1943 = vpop.permute.xlu0 %1942
        %1944 = vrot.lane.b32.xlu0 %v482, 23
        %v1945 = vpop.permute.xlu0 %1944
        %1946 = vrot.lane.b32.xlu0 %v483, 23
        %v1947 = vpop.permute.xlu0 %1946
        %1948 = vrot.lane.b32.xlu0 %v484, 23
        %v1949 = vpop.permute.xlu0 %1948
        %1950 = vrot.lane.b32.xlu0 %v485, 23
        %v1951 = vpop.permute.xlu0 %1950
        %1952 = vrot.lane.b32.xlu0 %v486, 23
        %v1953 = vpop.permute.xlu0 %1952
        %1954 = vrot.lane.b32.xlu0 %v1479, 23
        %v1955 = vpop.permute.xlu0 %1954
        %1956 = vrot.lane.b32.xlu0 %v1480, 23
        %v1957 = vpop.permute.xlu0 %1956
        %1958 = vrot.lane.b32.xlu0 %v1476, 23
        %v1959 = vpop.permute.xlu0 %1958
        %1960 = vrot.lane.b32.xlu0 %v1482, 23
        %v1961 = vpop.permute.xlu0 %1960
        %1962 = vrot.lane.b32.xlu0 %v1518, 23
        %v1963 = vpop.permute.xlu0 %1962
        %1964 = vrot.lane.b32.xlu0 %v1519, 23
        %v1965 = vpop.permute.xlu0 %1964
        %1966 = vrot.lane.b32.xlu0 %v1520, 23
        %v1967 = vpop.permute.xlu0 %1966
        %1968 = vrot.lane.b32.xlu0 %v1521, 23
        %v1969 = vpop.permute.xlu0 %1968
        %1970 = vrot.lane.b32.xlu0 %v1522, 23
        %v1971 = vpop.permute.xlu0 %1970
        %1972 = vrot.lane.b32.xlu0 %v1523, 23
        %v1973 = vpop.permute.xlu0 %1972
        %1974 = vrot.lane.b32.xlu0 %v1524, 23
        %v1975 = vpop.permute.xlu0 %1974
        %1976 = vrot.lane.b32.xlu0 %v1525, 23
        %v1977 = vpop.permute.xlu0 %1976
        %1978 = vrot.lane.b32.xlu0 %v1500, 23
        %v1979 = vpop.permute.xlu0 %1978
        %1980 = vrot.lane.b32.xlu0 %v1526, 23
        %v1981 = vpop.permute.xlu0 %1980
        %1982 = vrot.lane.b32.xlu0 %v1527, 23
        %v1983 = vpop.permute.xlu0 %1982
        %1984 = vrot.lane.b32.xlu0 %v1528, 23
        %v1985 = vpop.permute.xlu0 %1984
        %1986 = vrot.lane.b32.xlu0 %v1529, 23
        %v1987 = vpop.permute.xlu0 %1986
        %1988 = vrot.lane.b32.xlu0 %v1530, 23
        %v1989 = vpop.permute.xlu0 %1988
        %1990 = vrot.lane.b32.xlu0 %v1531, 23
        %v1991 = vpop.permute.xlu0 %1990
        %1992 = vrot.lane.b32.xlu0 %v1532, 23
        %v1993 = vpop.permute.xlu0 %1992
        %1994 = vrot.lane.b32.xlu0 %v1533, 23
        %v1995 = vpop.permute.xlu0 %1994
        %1996 = vrot.lane.b32.xlu0 %v1535, 23
        %v1997 = vpop.permute.xlu0 %1996
        %1998 = vrot.lane.b32.xlu0 %v1571, 23
        %v1999 = vpop.permute.xlu0 %1998
        %2000 = vrot.lane.b32.xlu0 %v1572, 23
        %v2001 = vpop.permute.xlu0 %2000
        %2002 = vrot.lane.b32.xlu0 %v1573, 23
        %v2003 = vpop.permute.xlu0 %2002
        %2004 = vrot.lane.b32.xlu0 %v1574, 23
        %v2005 = vpop.permute.xlu0 %2004
        %2006 = vrot.lane.b32.xlu0 %v1575, 23
        %v2007 = vpop.permute.xlu0 %2006
        %2008 = vrot.lane.b32.xlu0 %v1576, 23
        %v2009 = vpop.permute.xlu0 %2008
        %2010 = vrot.lane.b32.xlu0 %v1577, 23
        %v2011 = vpop.permute.xlu0 %2010
        %2012 = vrot.lane.b32.xlu0 %v1578, 23
        %v2013 = vpop.permute.xlu0 %2012
        %2014 = vrot.lane.b32.xlu0 %v1553, 23
        %v2015 = vpop.permute.xlu0 %2014
        %2016 = vrot.lane.b32.xlu0 %v1579, 23
        %v2017 = vpop.permute.xlu0 %2016
        %2018 = vrot.lane.b32.xlu0 %v1580, 23
        %v2019 = vpop.permute.xlu0 %2018
        %2020 = vrot.lane.b32.xlu0 %v1581, 23
        %v2021 = vpop.permute.xlu0 %2020
        %2022 = vrot.lane.b32.xlu0 %v1582, 23
        %v2023 = vpop.permute.xlu0 %2022
        %2024 = vrot.lane.b32.xlu0 %v1583, 23
        %v2025 = vpop.permute.xlu0 %2024
        %2026 = vrot.lane.b32.xlu0 %v1584, 23
        %v2027 = vpop.permute.xlu0 %2026
        %2028 = vrot.lane.b32.xlu0 %v1585, 23
        %v2029 = vpop.permute.xlu0 %2028
        %2030 = vrot.lane.b32.xlu0 %v1586, 23
        %v2031 = vpop.permute.xlu0 %2030
        %2032 = vrot.lane.b32.xlu0 %v1588, 23
        %v2033 = vpop.permute.xlu0 %2032
        %2034 = vrot.lane.b32.xlu0 %v1624, 23
        %v2035 = vpop.permute.xlu0 %2034
        %2036 = vrot.lane.b32.xlu0 %v1625, 23
        %v2037 = vpop.permute.xlu0 %2036
        %2038 = vrot.lane.b32.xlu0 %v1626, 23
        %v2039 = vpop.permute.xlu0 %2038
        %2040 = vrot.lane.b32.xlu0 %v1627, 23
        %v2041 = vpop.permute.xlu0 %2040
        %2042 = vrot.lane.b32.xlu0 %v1628, 23
        %v2043 = vpop.permute.xlu0 %2042
        %2044 = vrot.lane.b32.xlu0 %v1629, 23
        %v2045 = vpop.permute.xlu0 %2044
        %2046 = vrot.lane.b32.xlu0 %v1630, 23
        %v2047 = vpop.permute.xlu0 %2046
        %2048 = vrot.lane.b32.xlu0 %v1631, 23
        %v2049 = vpop.permute.xlu0 %2048
        %2050 = vrot.lane.b32.xlu0 %v1606, 23
        %v2051 = vpop.permute.xlu0 %2050
        %2052 = vrot.lane.b32.xlu0 %v1632, 23
        %v2053 = vpop.permute.xlu0 %2052
        %2054 = vrot.lane.b32.xlu0 %v1633, 23
        %v2055 = vpop.permute.xlu0 %2054
        %2056 = vrot.lane.b32.xlu0 %v1634, 23
        %v2057 = vpop.permute.xlu0 %2056
        %2058 = vrot.lane.b32.xlu0 %v1635, 23
        %v2059 = vpop.permute.xlu0 %2058
        %2060 = vrot.lane.b32.xlu0 %v1636, 23
        %v2061 = vpop.permute.xlu0 %2060
        %2062 = vrot.lane.b32.xlu0 %v1637, 23
        %v2063 = vpop.permute.xlu0 %2062
        %2064 = vrot.lane.b32.xlu0 %v1638, 23
        %v2065 = vpop.permute.xlu0 %2064
        %2066 = vrot.lane.b32.xlu0 %v1639, 23
        %v2067 = vpop.permute.xlu0 %2066
        %2068 = vrot.lane.b32.xlu0 %v1641, 23
        %v2069 = vpop.permute.xlu0 %2068
        %2070 = vrot.lane.b32.xlu0 %v1677, 23
        %v2071 = vpop.permute.xlu0 %2070
        %2072 = vrot.lane.b32.xlu0 %v1678, 23
        %v2073 = vpop.permute.xlu0 %2072
        %2074 = vrot.lane.b32.xlu0 %v1679, 23
        %v2075 = vpop.permute.xlu0 %2074
        %2076 = vrot.lane.b32.xlu0 %v1680, 23
        %v2077 = vpop.permute.xlu0 %2076
        %2078 = vrot.lane.b32.xlu0 %v1681, 23
        %v2079 = vpop.permute.xlu0 %2078
        %2080 = vrot.lane.b32.xlu0 %v1682, 23
        %v2081 = vpop.permute.xlu0 %2080
        %2082 = vrot.lane.b32.xlu0 %v1683, 23
        %v2083 = vpop.permute.xlu0 %2082
        %2084 = vrot.lane.b32.xlu0 %v1684, 23
        %v2085 = vpop.permute.xlu0 %2084
        %2086 = vrot.lane.b32.xlu0 %v1659, 23
        %v2087 = vpop.permute.xlu0 %2086
        %2088 = vrot.lane.b32.xlu0 %v1685, 23
        %v2089 = vpop.permute.xlu0 %2088
        %2090 = vrot.lane.b32.xlu0 %v1686, 23
        %v2091 = vpop.permute.xlu0 %2090
        %2092 = vrot.lane.b32.xlu0 %v1687, 23
        %v2093 = vpop.permute.xlu0 %2092
        %2094 = vrot.lane.b32.xlu0 %v1688, 23
        %v2095 = vpop.permute.xlu0 %2094
        %2096 = vrot.lane.b32.xlu0 %v1689, 23
        %v2097 = vpop.permute.xlu0 %2096
        %2098 = vrot.lane.b32.xlu0 %v1690, 23
        %v2099 = vpop.permute.xlu0 %2098
        %2100 = vrot.lane.b32.xlu0 %v1691, 23
        %v2101 = vpop.permute.xlu0 %2100
        %2102 = vrot.lane.b32.xlu0 %v1692, 23
        %v2103 = vpop.permute.xlu0 %2102
        %2104 = vrot.lane.b32.xlu0 %v1694, 23
        %v2105 = vpop.permute.xlu0 %2104
        %2106 = vrot.lane.b32.xlu0 %v1730, 23
        %v2107 = vpop.permute.xlu0 %2106
        %2108 = vrot.lane.b32.xlu0 %v1731, 23
        %v2109 = vpop.permute.xlu0 %2108
        %2110 = vrot.lane.b32.xlu0 %v1732, 23
        %v2111 = vpop.permute.xlu0 %2110
        %2112 = vrot.lane.b32.xlu0 %v1733, 23
        %v2113 = vpop.permute.xlu0 %2112
        %2114 = vrot.lane.b32.xlu0 %v1734, 23
        %v2115 = vpop.permute.xlu0 %2114
        %2116 = vrot.lane.b32.xlu0 %v1735, 23
        %v2117 = vpop.permute.xlu0 %2116
        %2118 = vrot.lane.b32.xlu0 %v1736, 23
        %v2119 = vpop.permute.xlu0 %2118
        %2120 = vrot.lane.b32.xlu0 %v1737, 23
        %v2121 = vpop.permute.xlu0 %2120
        %2122 = vrot.lane.b32.xlu0 %v1712, 23
        %v2123 = vpop.permute.xlu0 %2122
        %2124 = vrot.lane.b32.xlu0 %v1738, 23
        %v2125 = vpop.permute.xlu0 %2124
        %2126 = vrot.lane.b32.xlu0 %v1739, 23
        %v2127 = vpop.permute.xlu0 %2126
        %2128 = vrot.lane.b32.xlu0 %v1740, 23
        %v2129 = vpop.permute.xlu0 %2128
        %2130 = vrot.lane.b32.xlu0 %v1741, 23
        %v2131 = vpop.permute.xlu0 %2130
        %2132 = vrot.lane.b32.xlu0 %v1742, 23
        %v2133 = vpop.permute.xlu0 %2132
        %2134 = vrot.lane.b32.xlu0 %v1743, 23
        %v2135 = vpop.permute.xlu0 %2134
        %2136 = vrot.lane.b32.xlu0 %v1744, 23
        %v2137 = vpop.permute.xlu0 %2136
        %2138 = vrot.lane.b32.xlu0 %v1745, 23
        %v2139 = vpop.permute.xlu0 %2138
        %2140 = vrot.lane.b32.xlu0 %v1747, 23
        %v2141 = vpop.permute.xlu0 %2140
        %2142 = vrot.lane.b32.xlu0 %v1783, 23
        %v2143 = vpop.permute.xlu0 %2142
        %2144 = vrot.lane.b32.xlu0 %v1784, 23
        %v2145 = vpop.permute.xlu0 %2144
        %2146 = vrot.lane.b32.xlu0 %v1785, 23
        %v2147 = vpop.permute.xlu0 %2146
        %2148 = vrot.lane.b32.xlu0 %v1786, 23
        %v2149 = vpop.permute.xlu0 %2148
        %2150 = vrot.lane.b32.xlu0 %v1787, 23
        %v2151 = vpop.permute.xlu0 %2150
        %2152 = vrot.lane.b32.xlu0 %v1788, 23
        %v2153 = vpop.permute.xlu0 %2152
        %2154 = vrot.lane.b32.xlu0 %v1789, 23
        %v2155 = vpop.permute.xlu0 %2154
        %2156 = vrot.lane.b32.xlu0 %v1790, 23
        %v2157 = vpop.permute.xlu0 %2156
        %2158 = vrot.lane.b32.xlu0 %v1765, 23
        %v2159 = vpop.permute.xlu0 %2158
        %2160 = vrot.lane.b32.xlu0 %v1791, 23
        %v2161 = vpop.permute.xlu0 %2160
        %2162 = vrot.lane.b32.xlu0 %v1792, 23
        %v2163 = vpop.permute.xlu0 %2162
        %2164 = vrot.lane.b32.xlu0 %v1793, 23
        %v2165 = vpop.permute.xlu0 %2164
        %2166 = vrot.lane.b32.xlu0 %v1794, 23
        %v2167 = vpop.permute.xlu0 %2166
        %2168 = vrot.lane.b32.xlu0 %v1795, 23
        %v2169 = vpop.permute.xlu0 %2168
        %2170 = vrot.lane.b32.xlu0 %v1796, 23
        %v2171 = vpop.permute.xlu0 %2170
        %2172 = vrot.lane.b32.xlu0 %v1797, 23
        %v2173 = vpop.permute.xlu0 %2172
        %2174 = vrot.lane.b32.xlu0 %v1798, 23
        %v2175 = vpop.permute.xlu0 %2174
        %2176 = vrot.lane.b32.xlu0 %v1800, 23
        %v2177 = vpop.permute.xlu0 %2176
        %2178 = vrot.lane.b32.xlu0 %v1836, 23
        %v2179 = vpop.permute.xlu0 %2178
        %2180 = vrot.lane.b32.xlu0 %v1837, 23
        %v2181 = vpop.permute.xlu0 %2180
        %2182 = vrot.lane.b32.xlu0 %v1838, 23
        %v2183 = vpop.permute.xlu0 %2182
        %2184 = vrot.lane.b32.xlu0 %v1839, 23
        %v2185 = vpop.permute.xlu0 %2184
        %2186 = vrot.lane.b32.xlu0 %v1840, 23
        %v2187 = vpop.permute.xlu0 %2186
        %2188 = vrot.lane.b32.xlu0 %v1841, 23
        %v2189 = vpop.permute.xlu0 %2188
        %2190 = vrot.lane.b32.xlu0 %v1842, 23
        %v2191 = vpop.permute.xlu0 %2190
        %2192 = vrot.lane.b32.xlu0 %v1843, 23
        %v2193 = vpop.permute.xlu0 %2192
        %2194 = vrot.lane.b32.xlu0 %v1818, 23
        %v2195 = vpop.permute.xlu0 %2194
        %2196 = vrot.lane.b32.xlu0 %v1844, 23
        %v2197 = vpop.permute.xlu0 %2196
        %2198 = vrot.lane.b32.xlu0 %v1845, 23
        %v2199 = vpop.permute.xlu0 %2198
        %2200 = vrot.lane.b32.xlu0 %v1846, 23
        %v2201 = vpop.permute.xlu0 %2200
        %2202 = vrot.lane.b32.xlu0 %v1847, 23
        %v2203 = vpop.permute.xlu0 %2202
        %2204 = vrot.lane.b32.xlu0 %v1848, 23
        %v2205 = vpop.permute.xlu0 %2204
        %2206 = vrot.lane.b32.xlu0 %v1849, 23
        %v2207 = vpop.permute.xlu0 %2206
        %2208 = vrot.lane.b32.xlu0 %v1850, 23
        %v2209 = vpop.permute.xlu0 %2208
        %2210 = vrot.lane.b32.xlu0 %v1851, 23
        %v2211 = vpop.permute.xlu0 %2210
        %2212 = vrot.lane.b32.xlu0 %v993, 23
        %v2213 = vpop.permute.xlu0 %2212
        %2214 = vrot.lane.b32.xlu0 %v1026, 23
        %v2215 = vpop.permute.xlu0 %2214
        %2216 = vrot.lane.b32.xlu0 %v1027, 23
        %v2217 = vpop.permute.xlu0 %2216
        %2218 = vrot.lane.b32.xlu0 %v1028, 23
        %v2219 = vpop.permute.xlu0 %2218
        %2220 = vrot.lane.b32.xlu0 %v1029, 23
        %v2221 = vpop.permute.xlu0 %2220
        %2222 = vrot.lane.b32.xlu0 %v1030, 23
        %v2223 = vpop.permute.xlu0 %2222
        %2224 = vrot.lane.b32.xlu0 %v1864, 23
        %v2225 = vpop.permute.xlu0 %2224
        %2226 = vrot.lane.b32.xlu0 %v1865, 23
        %v2227 = vpop.permute.xlu0 %2226
        %2228 = vrot.lane.b32.xlu0 %v1866, 23
        %v2229 = vpop.permute.xlu0 %2228
        %2230 = vrot.lane.b32.xlu0 %v1011, 23
        %v2231 = vpop.permute.xlu0 %2230
        %2232 = vrot.lane.b32.xlu0 %v1034, 23
        %v2233 = vpop.permute.xlu0 %2232
        %2234 = vrot.lane.b32.xlu0 %v1035, 23
        %v2235 = vpop.permute.xlu0 %2234
        %2236 = vrot.lane.b32.xlu0 %v1036, 23
        %v2237 = vpop.permute.xlu0 %2236
        %2238 = vrot.lane.b32.xlu0 %v1037, 23
        %v2239 = vpop.permute.xlu0 %2238
        %2240 = vrot.lane.b32.xlu0 %v1038, 23
        %v2241 = vpop.permute.xlu0 %2240
        %2242 = vrot.lane.b32.xlu0 %v1867, 23
        %v2243 = vpop.permute.xlu0 %2242
        %2244 = vrot.lane.b32.xlu0 %v1868, 23
        %v2245 = vpop.permute.xlu0 %2244
        %2246 = vrot.lane.b32.xlu0 %v1869, 23
        %v2247 = vpop.permute.xlu0 %2246
        %2248 = vrot.lane.b32.xlu0 %v1062, 23
        %v2249 = vpop.permute.xlu0 %2248
        %2250 = vrot.lane.b32.xlu0 %v1095, 23
        %v2251 = vpop.permute.xlu0 %2250
        %2252 = vrot.lane.b32.xlu0 %v1096, 23
        %v2253 = vpop.permute.xlu0 %2252
        %2254 = vrot.lane.b32.xlu0 %v1097, 23
        %v2255 = vpop.permute.xlu0 %2254
        %2256 = vrot.lane.b32.xlu0 %v1098, 23
        %v2257 = vpop.permute.xlu0 %2256
        %2258 = vrot.lane.b32.xlu0 %v1099, 23
        %v2259 = vpop.permute.xlu0 %2258
        %2260 = vrot.lane.b32.xlu0 %v1882, 23
        %v2261 = vpop.permute.xlu0 %2260
        %2262 = vrot.lane.b32.xlu0 %v1883, 23
        %v2263 = vpop.permute.xlu0 %2262
        %2264 = vrot.lane.b32.xlu0 %v1884, 23
        %v2265 = vpop.permute.xlu0 %2264
        %2266 = vrot.lane.b32.xlu0 %v1080, 23
        %v2267 = vpop.permute.xlu0 %2266
        %2268 = vrot.lane.b32.xlu0 %v1103, 23
        %v2269 = vpop.permute.xlu0 %2268
        %2270 = vrot.lane.b32.xlu0 %v1104, 23
        %v2271 = vpop.permute.xlu0 %2270
        %2272 = vrot.lane.b32.xlu0 %v1105, 23
        %v2273 = vpop.permute.xlu0 %2272
        %2274 = vrot.lane.b32.xlu0 %v1106, 23
        %v2275 = vpop.permute.xlu0 %2274
        %2276 = vrot.lane.b32.xlu0 %v1107, 23
        %v2277 = vpop.permute.xlu0 %2276
        %2278 = vrot.lane.b32.xlu0 %v1885, 23
        %v2279 = vpop.permute.xlu0 %2278
        %2280 = vrot.lane.b32.xlu0 %v1886, 23
        %v2281 = vpop.permute.xlu0 %2280
        %2282 = vrot.lane.b32.xlu0 %v1887, 23
        %v2283 = vpop.permute.xlu0 %2282
        %vm2284 = vcmask 187392
        %v2285 = vsel %vm2284, %v1889, %v1891
        %v2286 = vsel %vm2284, %v1891, %v1893
        %v2287 = vsel %vm2284, %v1893, %v1895
        %v2288 = vsel %vm2284, %v1895, %v1897
        %v2289 = vsel %vm2284, %v1897, %v1899
        %v2290 = vsel %vm2284, %v1899, %v1901
        %v2291 = vsel %vm2284, %v1901, %v1903
        %v2292 = vsel %vm2284, %v1903, %v1905
        %v2293 = vsel %vm2284, %v1907, %v1909
        %v2294 = vsel %vm2284, %v1909, %v1911
        %v2295 = vsel %vm2284, %v1911, %v1913
        %v2296 = vsel %vm2284, %v1913, %v1915
        %v2297 = vsel %vm2284, %v1915, %v1917
        %v2298 = vsel %vm2284, %v1917, %v1919
        %v2299 = vsel %vm2284, %v1919, %v1921
        %v2300 = vsel %vm2284, %v1921, %v1923
        %v2301 = vsel %vm2284, %v1925, %v1927
        %v2302 = vsel %vm2284, %v1927, %v1929
        %v2303 = vsel %vm2284, %v1929, %v1931
        %v2304 = vsel %vm2284, %v1931, %v1933
        %v2305 = vsel %vm2284, %v1933, %v1935
        %v2306 = vsel %vm2284, %v1935, %v1937
        %v2307 = vsel %vm2284, %v1937, %v1939
        %v2308 = vsel %vm2284, %v1939, %v1941
        %v2309 = vsel %vm2284, %v1943, %v1945
        %v2310 = vsel %vm2284, %v1945, %v1947
        %v2311 = vsel %vm2284, %v1947, %v1949
        %v2312 = vsel %vm2284, %v1949, %v1951
        %v2313 = vsel %vm2284, %v1951, %v1953
        %v2314 = vsel %vm2284, %v1953, %v1955
        %v2315 = vsel %vm2284, %v1955, %v1957
        %v2316 = vsel %vm2284, %v1957, %v1959
        %v2317 = vsel %vm2284, %v1961, %v1963
        %v2318 = vsel %vm2284, %v1963, %v1965
        %v2319 = vsel %vm2284, %v1965, %v1967
        %v2320 = vsel %vm2284, %v1967, %v1969
        %v2321 = vsel %vm2284, %v1969, %v1971
        %v2322 = vsel %vm2284, %v1971, %v1973
        %v2323 = vsel %vm2284, %v1973, %v1975
        %v2324 = vsel %vm2284, %v1975, %v1977
        %v2325 = vsel %vm2284, %v1979, %v1981
        %v2326 = vsel %vm2284, %v1981, %v1983
        %v2327 = vsel %vm2284, %v1983, %v1985
        %v2328 = vsel %vm2284, %v1985, %v1987
        %v2329 = vsel %vm2284, %v1987, %v1989
        %v2330 = vsel %vm2284, %v1989, %v1991
        %v2331 = vsel %vm2284, %v1991, %v1993
        %v2332 = vsel %vm2284, %v1993, %v1995
        %v2333 = vsel %vm2284, %v1997, %v1999
        %v2334 = vsel %vm2284, %v1999, %v2001
        %v2335 = vsel %vm2284, %v2001, %v2003
        %v2336 = vsel %vm2284, %v2003, %v2005
        %v2337 = vsel %vm2284, %v2005, %v2007
        %v2338 = vsel %vm2284, %v2007, %v2009
        %v2339 = vsel %vm2284, %v2009, %v2011
        %v2340 = vsel %vm2284, %v2011, %v2013
        %v2341 = vsel %vm2284, %v2015, %v2017
        %v2342 = vsel %vm2284, %v2017, %v2019
        %v2343 = vsel %vm2284, %v2019, %v2021
        %v2344 = vsel %vm2284, %v2021, %v2023
        %v2345 = vsel %vm2284, %v2023, %v2025
        %v2346 = vsel %vm2284, %v2025, %v2027
        %v2347 = vsel %vm2284, %v2027, %v2029
        %v2348 = vsel %vm2284, %v2029, %v2031
        %v2349 = vsel %vm2284, %v2033, %v2035
        %v2350 = vsel %vm2284, %v2035, %v2037
        %v2351 = vsel %vm2284, %v2037, %v2039
        %v2352 = vsel %vm2284, %v2039, %v2041
        %v2353 = vsel %vm2284, %v2041, %v2043
        %v2354 = vsel %vm2284, %v2043, %v2045
        %v2355 = vsel %vm2284, %v2045, %v2047
        %v2356 = vsel %vm2284, %v2047, %v2049
        %v2357 = vsel %vm2284, %v2051, %v2053
        %v2358 = vsel %vm2284, %v2053, %v2055
        %v2359 = vsel %vm2284, %v2055, %v2057
        %v2360 = vsel %vm2284, %v2057, %v2059
        %v2361 = vsel %vm2284, %v2059, %v2061
        %v2362 = vsel %vm2284, %v2061, %v2063
        %v2363 = vsel %vm2284, %v2063, %v2065
        %v2364 = vsel %vm2284, %v2065, %v2067
        %v2365 = vsel %vm2284, %v2069, %v2071
        %v2366 = vsel %vm2284, %v2071, %v2073
        %v2367 = vsel %vm2284, %v2073, %v2075
        %v2368 = vsel %vm2284, %v2075, %v2077
        %v2369 = vsel %vm2284, %v2077, %v2079
        %v2370 = vsel %vm2284, %v2079, %v2081
        %v2371 = vsel %vm2284, %v2081, %v2083
        %v2372 = vsel %vm2284, %v2083, %v2085
        %v2373 = vsel %vm2284, %v2087, %v2089
        %v2374 = vsel %vm2284, %v2089, %v2091
        %v2375 = vsel %vm2284, %v2091, %v2093
        %v2376 = vsel %vm2284, %v2093, %v2095
        %v2377 = vsel %vm2284, %v2095, %v2097
        %v2378 = vsel %vm2284, %v2097, %v2099
        %v2379 = vsel %vm2284, %v2099, %v2101
        %v2380 = vsel %vm2284, %v2101, %v2103
        %v2381 = vsel %vm2284, %v2105, %v2107
        %v2382 = vsel %vm2284, %v2107, %v2109
        %v2383 = vsel %vm2284, %v2109, %v2111
        %v2384 = vsel %vm2284, %v2111, %v2113
        %v2385 = vsel %vm2284, %v2113, %v2115
        %v2386 = vsel %vm2284, %v2115, %v2117
        %v2387 = vsel %vm2284, %v2117, %v2119
        %v2388 = vsel %vm2284, %v2119, %v2121
        %v2389 = vsel %vm2284, %v2123, %v2125
        %v2390 = vsel %vm2284, %v2125, %v2127
        %v2391 = vsel %vm2284, %v2127, %v2129
        %v2392 = vsel %vm2284, %v2129, %v2131
        %v2393 = vsel %vm2284, %v2131, %v2133
        %v2394 = vsel %vm2284, %v2133, %v2135
        %v2395 = vsel %vm2284, %v2135, %v2137
        %v2396 = vsel %vm2284, %v2137, %v2139
        %v2397 = vsel %vm2284, %v2141, %v2143
        %v2398 = vsel %vm2284, %v2143, %v2145
        %v2399 = vsel %vm2284, %v2145, %v2147
        %v2400 = vsel %vm2284, %v2147, %v2149
        %v2401 = vsel %vm2284, %v2149, %v2151
        %v2402 = vsel %vm2284, %v2151, %v2153
        %v2403 = vsel %vm2284, %v2153, %v2155
        %v2404 = vsel %vm2284, %v2155, %v2157
        %v2405 = vsel %vm2284, %v2159, %v2161
        %v2406 = vsel %vm2284, %v2161, %v2163
        %v2407 = vsel %vm2284, %v2163, %v2165
        %v2408 = vsel %vm2284, %v2165, %v2167
        %v2409 = vsel %vm2284, %v2167, %v2169
        %v2410 = vsel %vm2284, %v2169, %v2171
        %v2411 = vsel %vm2284, %v2171, %v2173
        %v2412 = vsel %vm2284, %v2173, %v2175
        %v2413 = vsel %vm2284, %v2177, %v2179
        %v2414 = vsel %vm2284, %v2179, %v2181
        %v2415 = vsel %vm2284, %v2181, %v2183
        %v2416 = vsel %vm2284, %v2183, %v2185
        %v2417 = vsel %vm2284, %v2185, %v2187
        %v2418 = vsel %vm2284, %v2187, %v2189
        %v2419 = vsel %vm2284, %v2189, %v2191
        %v2420 = vsel %vm2284, %v2191, %v2193
        %v2421 = vsel %vm2284, %v2195, %v2197
        %v2422 = vsel %vm2284, %v2197, %v2199
        %v2423 = vsel %vm2284, %v2199, %v2201
        %v2424 = vsel %vm2284, %v2201, %v2203
        %v2425 = vsel %vm2284, %v2203, %v2205
        %v2426 = vsel %vm2284, %v2205, %v2207
        %v2427 = vsel %vm2284, %v2207, %v2209
        %v2428 = vsel %vm2284, %v2209, %v2211
        %v2429 = vsel %vm2284, %v2213, %v2215
        %v2430 = vsel %vm2284, %v2215, %v2217
        %v2431 = vsel %vm2284, %v2217, %v2219
        %v2432 = vsel %vm2284, %v2219, %v2221
        %v2433 = vsel %vm2284, %v2221, %v2223
        %v2434 = vsel %vm2284, %v2223, %v2225
        %v2435 = vsel %vm2284, %v2225, %v2227
        %v2436 = vsel %vm2284, %v2227, %v2229
        %v2437 = vsel %vm2284, %v2231, %v2233
        %v2438 = vsel %vm2284, %v2233, %v2235
        %v2439 = vsel %vm2284, %v2235, %v2237
        %v2440 = vsel %vm2284, %v2237, %v2239
        %v2441 = vsel %vm2284, %v2239, %v2241
        %v2442 = vsel %vm2284, %v2241, %v2243
        %v2443 = vsel %vm2284, %v2243, %v2245
        %v2444 = vsel %vm2284, %v2245, %v2247
        %v2445 = vsel %vm2284, %v2249, %v2251
        %v2446 = vsel %vm2284, %v2251, %v2253
        %v2447 = vsel %vm2284, %v2253, %v2255
        %v2448 = vsel %vm2284, %v2255, %v2257
        %v2449 = vsel %vm2284, %v2257, %v2259
        %v2450 = vsel %vm2284, %v2259, %v2261
        %v2451 = vsel %vm2284, %v2261, %v2263
        %v2452 = vsel %vm2284, %v2263, %v2265
        %v2453 = vsel %vm2284, %v2267, %v2269
        %v2454 = vsel %vm2284, %v2269, %v2271
        %v2455 = vsel %vm2284, %v2271, %v2273
        %v2456 = vsel %vm2284, %v2273, %v2275
        %v2457 = vsel %vm2284, %v2275, %v2277
        %v2458 = vsel %vm2284, %v2277, %v2279
        %v2459 = vsel %vm2284, %v2279, %v2281
        %v2460 = vsel %vm2284, %v2281, %v2283
        %v2637 = vld [vmem:[#allocation7] sm:$0xff]
        %v2638 = vld [vmem:[#allocation7 + $0x8] sm:$0xff]
        %v2639 = vld [vmem:[#allocation7 + $0x10] sm:$0xff]
        %v2640 = vld [vmem:[#allocation7 + $0x18] sm:$0xf]
        %v2641 = vld [vmem:[#allocation7 + $0x1c] sm:$0xff]
        %v2642 = vld [vmem:[#allocation7 + $0x24] sm:$0xff]
        %v2643 = vld [vmem:[#allocation7 + $0x2c] sm:$0xff]
        %v2644 = vld [vmem:[#allocation7 + $0x34] sm:$0xf]
        %v2645 = vld [vmem:[%s3] sm:$0xff]
        %v2646 = vld [vmem:[%s3 + $0x8] sm:$0xff]
        %2648 = vset.pattern.permute.xlu0 0
        %2649 = vperm.xlu0 %2648, %v2645
        %v2650 = vpop.permute.xlu0 %2649
        %2653 = vset.pattern.permute.xlu0 0
        %2654 = vperm.xlu0 %2653, %v2646
        %v2655 = vpop.permute.xlu0 %2654
        %v2665 = vunpack.c.l.b16 %v2637
        %v2666 = vunpack.c.h.b16 %v2637
        %v2667 = vunpack.c.l.b16 %v2638
        %v2668 = vunpack.c.h.b16 %v2638
        %v2669 = vunpack.c.l.b16 %v2639
        %v2670 = vunpack.c.h.b16 %v2639
        %v2671 = vunpack.c.l.b16 %v2640
        %v2672 = vunpack.c.l.b16 %v2641
        %v2673 = vunpack.c.h.b16 %v2641
        %v2674 = vunpack.c.l.b16 %v2642
        %v2675 = vunpack.c.h.b16 %v2642
        %v2676 = vunpack.c.l.b16 %v2643
        %v2677 = vunpack.c.h.b16 %v2643
        %v2678 = vunpack.c.l.b16 %v2644
        %v2679 = vpack.c.b16 %v2672, %v2665
        %v2680 = vpack.c.b16 %v2673, %v2666
        %v2681 = vpack.c.b16 %v2674, %v2667
        %v2682 = vpack.c.b16 %v2675, %v2668
        %v2683 = vpack.c.b16 %v2676, %v2669
        %v2684 = vpack.c.b16 %v2677, %v2670
        %v2685 = vpack.c.b16 %v2678, %v2671
        %vm2692 = vcmask 785408
        %v2694 = vsel %vm2692, %v2685, 0
        %2696 = vmatprep.subr.bf16.mxu0 %v355
        %2697 = vmatpush1.bf16.msra.mxu0 %v354
        %2698 = vmatprep.subr.bf16.mxu0 %v363
        %2699 = vmatpush1.bf16.msra.mxu0 %v362
        %2700 = vmatprep.subr.bf16.mxu0 %v472
        %2701 = vmatpush1.bf16.msra.mxu0 %v471
        %2702 = vmatprep.subr.bf16.mxu0 %v480
        %2703 = vmatpush1.bf16.msra.mxu0 %v479
        %2704 = vmatprep.subr.bf16.mxu0 %v541
        %2705 = vmatpush1.bf16.msra.mxu0 %v540
        %2706 = vmatprep.subr.bf16.mxu0 %v549
        %2707 = vmatpush1.bf16.msra.mxu0 %v548
        %2708 = vmatprep.subr.bf16.mxu0 %v610
        %2709 = vmatpush1.bf16.msra.mxu0 %v609
        %2710 = vmatprep.subr.bf16.mxu0 %v618
        %2711 = vmatpush1.bf16.msra.mxu0 %v617
        %2712 = vmatprep.subr.bf16.mxu0 %v679
        %2713 = vmatpush1.bf16.msra.mxu0 %v678
        %2714 = vmatprep.subr.bf16.mxu0 %v687
        %2715 = vmatpush1.bf16.msra.mxu0 %v686
        %2716 = vmatprep.subr.bf16.mxu0 %v748
        %2717 = vmatpush1.bf16.msra.mxu0 %v747
        %2718 = vmatprep.subr.bf16.mxu0 %v756
        %2719 = vmatpush1.bf16.msra.mxu0 %v755
        %2720 = vmatprep.subr.bf16.mxu0 %v817
        %2721 = vmatpush1.bf16.msra.mxu0 %v816
        %2722 = vmatprep.subr.bf16.mxu0 %v825
        %2723 = vmatpush1.bf16.msra.mxu0 %v824
        %2724 = vmatprep.subr.bf16.mxu0 %v886
        %2725 = vmatpush1.bf16.msra.mxu0 %v885
        %2726 = vmatprep.subr.bf16.mxu0 %v894
        %2727 = vmatpush1.bf16.msra.mxu0 %v893
        %2728 = vmatprep.mubr.bf16.mxu0 %v2680
        %2729 = vmatmul.mubr.bf16.gmra.mrb[0].mxu0 %v2679
        %v2730 = vpop.f32.mrb[0].mxu0
        %v2731 = vadd.f32 %v2650, %v2730
        %v2732 = vpop.f32.mrb[0].mxu0
        %v2733 = vadd.f32 %v2650, %v2732
        %v2734 = vpop.f32.mrb[0].mxu0
        %v2735 = vadd.f32 %v2655, %v2734
        %v2736 = vpop.f32.mrb[0].mxu0
        %v2737 = vadd.f32 %v2655, %v2736
        %2738 = vdwg.mxu0
        %2739 = vmatprep.subr.bf16.mxu0 %v955
        %2740 = vmatpush1.bf16.msra.mxu0 %v954
        %2741 = vmatprep.subr.bf16.mxu0 %v963
        %2742 = vmatpush1.bf16.msra.mxu0 %v962
        %2743 = vmatprep.subr.bf16.mxu0 %v1024
        %2744 = vmatpush1.bf16.msra.mxu0 %v1023
        %2745 = vmatprep.subr.bf16.mxu0 %v1032
        %2746 = vmatpush1.bf16.msra.mxu0 %v1031
        %2747 = vmatprep.subr.bf16.mxu0 %v1093
        %2748 = vmatpush1.bf16.msra.mxu0 %v1092
        %2749 = vmatprep.subr.bf16.mxu0 %v1101
        %2750 = vmatpush1.bf16.msra.mxu0 %v1100
        %2751 = vmatprep.subr.bf16.mxu0 %v1162
        %2752 = vmatpush1.bf16.msra.mxu0 %v1161
        %2753 = vmatprep.subr.bf16.mxu0 %v1170
        %2754 = vmatpush1.bf16.msra.mxu0 %v1169
        %2755 = vmatprep.subr.bf16.mxu0 %v1231
        %2756 = vmatpush1.bf16.msra.mxu0 %v1230
        %2757 = vmatprep.subr.bf16.mxu0 %v1239
        %2758 = vmatpush1.bf16.msra.mxu0 %v1238
        %2759 = vmatprep.subr.bf16.mxu0 %v1300
        %2760 = vmatpush1.bf16.msra.mxu0 %v1299
        %2761 = vmatprep.subr.bf16.mxu0 %v1308
        %2762 = vmatpush1.bf16.msra.mxu0 %v1307
        %2763 = vmatprep.subr.bf16.mxu0 %v1369
        %2764 = vmatpush1.bf16.msra.mxu0 %v1368
        %2765 = vmatprep.subr.bf16.mxu0 %v1377
        %2766 = vmatpush1.bf16.msra.mxu0 %v1376
        %2767 = vmatprep.subr.bf16.mxu0 %v1438
        %2768 = vmatpush1.bf16.msra.mxu0 %v1437
        %2769 = vmatprep.subr.bf16.mxu0 %v1446
        %2770 = vmatpush1.bf16.msra.mxu0 %v1445
        %2771 = vmatprep.mubr.bf16.mxu0 %v2682
        %2772 = vmatmul.mubr.bf16.gmra.mrb[0].mxu0 %v2681
        %v2773 = vpop.f32.mrb[0].mxu0
        %v2774 = vadd.f32 %v2731, %v2773
        %v2775 = vpop.f32.mrb[0].mxu0
        %v2776 = vadd.f32 %v2733, %v2775
        %v2777 = vpop.f32.mrb[0].mxu0
        %v2778 = vadd.f32 %v2735, %v2777
        %v2779 = vpop.f32.mrb[0].mxu0
        %v2780 = vadd.f32 %v2737, %v2779
        %2781 = vdwg.mxu0
        %2782 = vmatprep.subr.bf16.mxu0 %v2286
        %2783 = vmatpush1.bf16.msra.mxu0 %v2285
        %2784 = vmatprep.subr.bf16.mxu0 %v2294
        %2785 = vmatpush1.bf16.msra.mxu0 %v2293
        %2786 = vmatprep.subr.bf16.mxu0 %v2302
        %2787 = vmatpush1.bf16.msra.mxu0 %v2301
        %2788 = vmatprep.subr.bf16.mxu0 %v2310
        %2789 = vmatpush1.bf16.msra.mxu0 %v2309
        %2790 = vmatprep.subr.bf16.mxu0 %v2318
        %2791 = vmatpush1.bf16.msra.mxu0 %v2317
        %2792 = vmatprep.subr.bf16.mxu0 %v2326
        %2793 = vmatpush1.bf16.msra.mxu0 %v2325
        %2794 = vmatprep.subr.bf16.mxu0 %v2334
        %2795 = vmatpush1.bf16.msra.mxu0 %v2333
        %2796 = vmatprep.subr.bf16.mxu0 %v2342
        %2797 = vmatpush1.bf16.msra.mxu0 %v2341
        %2798 = vmatprep.subr.bf16.mxu0 %v2350
        %2799 = vmatpush1.bf16.msra.mxu0 %v2349
        %2800 = vmatprep.subr.bf16.mxu0 %v2358
        %2801 = vmatpush1.bf16.msra.mxu0 %v2357
        %2802 = vmatprep.subr.bf16.mxu0 %v2366
        %2803 = vmatpush1.bf16.msra.mxu0 %v2365
        %2804 = vmatprep.subr.bf16.mxu0 %v2374
        %2805 = vmatpush1.bf16.msra.mxu0 %v2373
        %2806 = vmatprep.subr.bf16.mxu0 %v2382
        %2807 = vmatpush1.bf16.msra.mxu0 %v2381
        %2808 = vmatprep.subr.bf16.mxu0 %v2390
        %2809 = vmatpush1.bf16.msra.mxu0 %v2389
        %2810 = vmatprep.subr.bf16.mxu0 %v2398
        %2811 = vmatpush1.bf16.msra.mxu0 %v2397
        %2812 = vmatprep.subr.bf16.mxu0 %v2406
        %2813 = vmatpush1.bf16.msra.mxu0 %v2405
        %2814 = vmatprep.mubr.bf16.mxu0 %v2684
        %2815 = vmatmul.mubr.bf16.gmra.mrb[0].mxu0 %v2683
        %v2816 = vpop.f32.mrb[0].mxu0
        %v2817 = vadd.f32 %v2774, %v2816
        %v2818 = vpop.f32.mrb[0].mxu0
        %v2819 = vadd.f32 %v2776, %v2818
        %v2820 = vpop.f32.mrb[0].mxu0
        %v2821 = vadd.f32 %v2778, %v2820
        %v2822 = vpop.f32.mrb[0].mxu0
        %v2823 = vadd.f32 %v2780, %v2822
        %2824 = vdwg.mxu0
        %2825 = vmatprep.subr.bf16.mxu0 %v2414
        %2826 = vmatpush1.bf16.msra.mxu0 %v2413
        %2827 = vmatprep.subr.bf16.mxu0 %v2422
        %2828 = vmatpush1.bf16.msra.mxu0 %v2421
        %2829 = vmatprep.subr.bf16.mxu0 %v2430
        %2830 = vmatpush1.bf16.msra.mxu0 %v2429
        %2831 = vmatprep.subr.bf16.mxu0 %v2438
        %2832 = vmatpush1.bf16.msra.mxu0 %v2437
        %2833 = vmatprep.subr.bf16.mxu0 %v2446
        %2834 = vmatpush1.bf16.msra.mxu0 %v2445
        %2835 = vmatprep.subr.bf16.mxu0 %v2454
        %2836 = vmatpush1.bf16.msra.mxu0 %v2453
        %2837 = vmatprep.subr.bf16.mxu0 0
        %2838 = vmatpush1.bf16.msra.mxu0 0
        %2839 = vmatprep.subr.bf16.mxu0 0
        %2840 = vmatpush1.bf16.msra.mxu0 0
        %2841 = vmatprep.subr.bf16.mxu0 0
        %2842 = vmatpush1.bf16.msra.mxu0 0
        %2843 = vmatprep.subr.bf16.mxu0 0
        %2844 = vmatpush1.bf16.msra.mxu0 0
        %2845 = vmatprep.subr.bf16.mxu0 0
        %2846 = vmatpush1.bf16.msra.mxu0 0
        %2847 = vmatprep.subr.bf16.mxu0 0
        %2848 = vmatpush1.bf16.msra.mxu0 0
        %2849 = vmatprep.subr.bf16.mxu0 0
        %2850 = vmatpush1.bf16.msra.mxu0 0
        %2851 = vmatprep.subr.bf16.mxu0 0
        %2852 = vmatpush1.bf16.msra.mxu0 0
        %2853 = vmatprep.subr.bf16.mxu0 0
        %2854 = vmatpush1.bf16.msra.mxu0 0
        %2855 = vmatprep.subr.bf16.mxu0 0
        %2856 = vmatpush1.bf16.msra.mxu0 0
        %2857 = vmatprep.mubr.bf16.mxu0 0
        %2858 = vmatmul.mubr.bf16.gmra.mrb[0].mxu0 %v2694
        %v2859 = vpop.f32.mrb[0].mxu0
        %v2860 = vadd.f32 %v2817, %v2859
        %v2861 = vpop.f32.mrb[0].mxu0
        %v2862 = vadd.f32 %v2819, %v2861
        %v2863 = vpop.f32.mrb[0].mxu0
        %v2864 = vadd.f32 %v2821, %v2863
        %v2865 = vpop.f32.mrb[0].mxu0
        %v2866 = vadd.f32 %v2823, %v2865
        %2867 = vdwg.mxu0
        %2868 = vmatprep.subr.bf16.mxu0 %v357
        %2869 = vmatpush1.bf16.msra.mxu0 %v356
        %2870 = vmatprep.subr.bf16.mxu0 %v365
        %2871 = vmatpush1.bf16.msra.mxu0 %v364
        %2872 = vmatprep.subr.bf16.mxu0 %v474
        %2873 = vmatpush1.bf16.msra.mxu0 %v473
        %2874 = vmatprep.subr.bf16.mxu0 %v482
        %2875 = vmatpush1.bf16.msra.mxu0 %v481
        %2876 = vmatprep.subr.bf16.mxu0 %v543
        %2877 = vmatpush1.bf16.msra.mxu0 %v542
        %2878 = vmatprep.subr.bf16.mxu0 %v551
        %2879 = vmatpush1.bf16.msra.mxu0 %v550
        %2880 = vmatprep.subr.bf16.mxu0 %v612
        %2881 = vmatpush1.bf16.msra.mxu0 %v611
        %2882 = vmatprep.subr.bf16.mxu0 %v620
        %2883 = vmatpush1.bf16.msra.mxu0 %v619
        %2884 = vmatprep.subr.bf16.mxu0 %v681
        %2885 = vmatpush1.bf16.msra.mxu0 %v680
        %2886 = vmatprep.subr.bf16.mxu0 %v689
        %2887 = vmatpush1.bf16.msra.mxu0 %v688
        %2888 = vmatprep.subr.bf16.mxu0 %v750
        %2889 = vmatpush1.bf16.msra.mxu0 %v749
        %2890 = vmatprep.subr.bf16.mxu0 %v758
        %2891 = vmatpush1.bf16.msra.mxu0 %v757
        %2892 = vmatprep.subr.bf16.mxu0 %v819
        %2893 = vmatpush1.bf16.msra.mxu0 %v818
        %2894 = vmatprep.subr.bf16.mxu0 %v827
        %2895 = vmatpush1.bf16.msra.mxu0 %v826
        %2896 = vmatprep.subr.bf16.mxu0 %v888
        %2897 = vmatpush1.bf16.msra.mxu0 %v887
        %2898 = vmatprep.subr.bf16.mxu0 %v896
        %2899 = vmatpush1.bf16.msra.mxu0 %v895
        %2900 = vmatprep.mubr.bf16.mxu0 %v2680
        %2901 = vmatmul.mubr.bf16.gmra.mrb[0].mxu0 %v2679
        %v2902 = vpop.f32.mrb[0].mxu0
        %v2903 = vadd.f32 %v2650, %v2902
        %v2904 = vpop.f32.mrb[0].mxu0
        %v2905 = vadd.f32 %v2650, %v2904
        %v2906 = vpop.f32.mrb[0].mxu0
        %v2907 = vadd.f32 %v2655, %v2906
        %v2908 = vpop.f32.mrb[0].mxu0
        %v2909 = vadd.f32 %v2655, %v2908
        %2910 = vdwg.mxu0
        %2911 = vmatprep.subr.bf16.mxu0 %v957
        %2912 = vmatpush1.bf16.msra.mxu0 %v956
        %2913 = vmatprep.subr.bf16.mxu0 %v965
        %2914 = vmatpush1.bf16.msra.mxu0 %v964
        %2915 = vmatprep.subr.bf16.mxu0 %v1026
        %2916 = vmatpush1.bf16.msra.mxu0 %v1025
        %2917 = vmatprep.subr.bf16.mxu0 %v1034
        %2918 = vmatpush1.bf16.msra.mxu0 %v1033
        %2919 = vmatprep.subr.bf16.mxu0 %v1095
        %2920 = vmatpush1.bf16.msra.mxu0 %v1094
        %2921 = vmatprep.subr.bf16.mxu0 %v1103
        %2922 = vmatpush1.bf16.msra.mxu0 %v1102
        %2923 = vmatprep.subr.bf16.mxu0 %v1164
        %2924 = vmatpush1.bf16.msra.mxu0 %v1163
        %2925 = vmatprep.subr.bf16.mxu0 %v1172
        %2926 = vmatpush1.bf16.msra.mxu0 %v1171
        %2927 = vmatprep.subr.bf16.mxu0 %v1233
        %2928 = vmatpush1.bf16.msra.mxu0 %v1232
        %2929 = vmatprep.subr.bf16.mxu0 %v1241
        %2930 = vmatpush1.bf16.msra.mxu0 %v1240
        %2931 = vmatprep.subr.bf16.mxu0 %v1302
        %2932 = vmatpush1.bf16.msra.mxu0 %v1301
        %2933 = vmatprep.subr.bf16.mxu0 %v1310
        %2934 = vmatpush1.bf16.msra.mxu0 %v1309
        %2935 = vmatprep.subr.bf16.mxu0 %v1371
        %2936 = vmatpush1.bf16.msra.mxu0 %v1370
        %2937 = vmatprep.subr.bf16.mxu0 %v1379
        %2938 = vmatpush1.bf16.msra.mxu0 %v1378
        %2939 = vmatprep.subr.bf16.mxu0 %v1440
        %2940 = vmatpush1.bf16.msra.mxu0 %v1439
        %2941 = vmatprep.subr.bf16.mxu0 %v1448
        %2942 = vmatpush1.bf16.msra.mxu0 %v1447
        %2943 = vmatprep.mubr.bf16.mxu0 %v2682
        %2944 = vmatmul.mubr.bf16.gmra.mrb[0].mxu0 %v2681
        %v2945 = vpop.f32.mrb[0].mxu0
        %v2946 = vadd.f32 %v2903, %v2945
        %v2947 = vpop.f32.mrb[0].mxu0
        %v2948 = vadd.f32 %v2905, %v2947
        %v2949 = vpop.f32.mrb[0].mxu0
        %v2950 = vadd.f32 %v2907, %v2949
        %v2951 = vpop.f32.mrb[0].mxu0
        %v2952 = vadd.f32 %v2909, %v2951
        %2953 = vdwg.mxu0
        %2954 = vmatprep.subr.bf16.mxu0 %v2288
        %2955 = vmatpush1.bf16.msra.mxu0 %v2287
        %2956 = vmatprep.subr.bf16.mxu0 %v2296
        %2957 = vmatpush1.bf16.msra.mxu0 %v2295
        %2958 = vmatprep.subr.bf16.mxu0 %v2304
        %2959 = vmatpush1.bf16.msra.mxu0 %v2303
        %2960 = vmatprep.subr.bf16.mxu0 %v2312
        %2961 = vmatpush1.bf16.msra.mxu0 %v2311
        %2962 = vmatprep.subr.bf16.mxu0 %v2320
        %2963 = vmatpush1.bf16.msra.mxu0 %v2319
        %2964 = vmatprep.subr.bf16.mxu0 %v2328
        %2965 = vmatpush1.bf16.msra.mxu0 %v2327
        %2966 = vmatprep.subr.bf16.mxu0 %v2336
        %2967 = vmatpush1.bf16.msra.mxu0 %v2335
        %2968 = vmatprep.subr.bf16.mxu0 %v2344
        %2969 = vmatpush1.bf16.msra.mxu0 %v2343
        %2970 = vmatprep.subr.bf16.mxu0 %v2352
        %2971 = vmatpush1.bf16.msra.mxu0 %v2351
        %2972 = vmatprep.subr.bf16.mxu0 %v2360
        %2973 = vmatpush1.bf16.msra.mxu0 %v2359
        %2974 = vmatprep.subr.bf16.mxu0 %v2368
        %2975 = vmatpush1.bf16.msra.mxu0 %v2367
        %2976 = vmatprep.subr.bf16.mxu0 %v2376
        %2977 = vmatpush1.bf16.msra.mxu0 %v2375
        %2978 = vmatprep.subr.bf16.mxu0 %v2384
        %2979 = vmatpush1.bf16.msra.mxu0 %v2383
        %2980 = vmatprep.subr.bf16.mxu0 %v2392
        %2981 = vmatpush1.bf16.msra.mxu0 %v2391
        %2982 = vmatprep.subr.bf16.mxu0 %v2400
        %2983 = vmatpush1.bf16.msra.mxu0 %v2399
        %2984 = vmatprep.subr.bf16.mxu0 %v2408
        %2985 = vmatpush1.bf16.msra.mxu0 %v2407
        %2986 = vmatprep.mubr.bf16.mxu0 %v2684
        %2987 = vmatmul.mubr.bf16.gmra.mrb[0].mxu0 %v2683
        %v2988 = vpop.f32.mrb[0].mxu0
        %v2989 = vadd.f32 %v2946, %v2988
        %v2990 = vpop.f32.mrb[0].mxu0
        %v2991 = vadd.f32 %v2948, %v2990
        %v2992 = vpop.f32.mrb[0].mxu0
        %v2993 = vadd.f32 %v2950, %v2992
        %v2994 = vpop.f32.mrb[0].mxu0
        %v2995 = vadd.f32 %v2952, %v2994
        %2996 = vdwg.mxu0
        %2997 = vmatprep.subr.bf16.mxu0 %v2416
        %2998 = vmatpush1.bf16.msra.mxu0 %v2415
        %2999 = vmatprep.subr.bf16.mxu0 %v2424
        %3000 = vmatpush1.bf16.msra.mxu0 %v2423
        %3001 = vmatprep.subr.bf16.mxu0 %v2432
        %3002 = vmatpush1.bf16.msra.mxu0 %v2431
        %3003 = vmatprep.subr.bf16.mxu0 %v2440
        %3004 = vmatpush1.bf16.msra.mxu0 %v2439
        %3005 = vmatprep.subr.bf16.mxu0 %v2448
        %3006 = vmatpush1.bf16.msra.mxu0 %v2447
        %3007 = vmatprep.subr.bf16.mxu0 %v2456
        %3008 = vmatpush1.bf16.msra.mxu0 %v2455
        %3009 = vmatprep.subr.bf16.mxu0 0
        %3010 = vmatpush1.bf16.msra.mxu0 0
        %3011 = vmatprep.subr.bf16.mxu0 0
        %3012 = vmatpush1.bf16.msra.mxu0 0
        %3013 = vmatprep.subr.bf16.mxu0 0
        %3014 = vmatpush1.bf16.msra.mxu0 0
        %3015 = vmatprep.subr.bf16.mxu0 0
        %3016 = vmatpush1.bf16.msra.mxu0 0
        %3017 = vmatprep.subr.bf16.mxu0 0
        %3018 = vmatpush1.bf16.msra.mxu0 0
        %3019 = vmatprep.subr.bf16.mxu0 0
        %3020 = vmatpush1.bf16.msra.mxu0 0
        %3021 = vmatprep.subr.bf16.mxu0 0
        %3022 = vmatpush1.bf16.msra.mxu0 0
        %3023 = vmatprep.subr.bf16.mxu0 0
        %3024 = vmatpush1.bf16.msra.mxu0 0
        %3025 = vmatprep.subr.bf16.mxu0 0
        %3026 = vmatpush1.bf16.msra.mxu0 0
        %3027 = vmatprep.subr.bf16.mxu0 0
        %3028 = vmatpush1.bf16.msra.mxu0 0
        %3029 = vmatprep.mubr.bf16.mxu0 0
        %3030 = vmatmul.mubr.bf16.gmra.mrb[0].mxu0 %v2694
        %v3031 = vpop.f32.mrb[0].mxu0
        %v3032 = vadd.f32 %v2989, %v3031
        %v3033 = vpop.f32.mrb[0].mxu0
        %v3034 = vadd.f32 %v2991, %v3033
        %v3035 = vpop.f32.mrb[0].mxu0
        %v3036 = vadd.f32 %v2993, %v3035
        %v3037 = vpop.f32.mrb[0].mxu0
        %v3038 = vadd.f32 %v2995, %v3037
        %3039 = vdwg.mxu0
        %3040 = vmatprep.subr.bf16.mxu0 %v359
        %3041 = vmatpush1.bf16.msra.mxu0 %v358
        %3042 = vmatprep.subr.bf16.mxu0 %v367
        %3043 = vmatpush1.bf16.msra.mxu0 %v366
        %3044 = vmatprep.subr.bf16.mxu0 %v476
        %3045 = vmatpush1.bf16.msra.mxu0 %v475
        %3046 = vmatprep.subr.bf16.mxu0 %v484
        %3047 = vmatpush1.bf16.msra.mxu0 %v483
        %3048 = vmatprep.subr.bf16.mxu0 %v545
        %3049 = vmatpush1.bf16.msra.mxu0 %v544
        %3050 = vmatprep.subr.bf16.mxu0 %v553
        %3051 = vmatpush1.bf16.msra.mxu0 %v552
        %3052 = vmatprep.subr.bf16.mxu0 %v614
        %3053 = vmatpush1.bf16.msra.mxu0 %v613
        %3054 = vmatprep.subr.bf16.mxu0 %v622
        %3055 = vmatpush1.bf16.msra.mxu0 %v621
        %3056 = vmatprep.subr.bf16.mxu0 %v683
        %3057 = vmatpush1.bf16.msra.mxu0 %v682
        %3058 = vmatprep.subr.bf16.mxu0 %v691
        %3059 = vmatpush1.bf16.msra.mxu0 %v690
        %3060 = vmatprep.subr.bf16.mxu0 %v752
        %3061 = vmatpush1.bf16.msra.mxu0 %v751
        %3062 = vmatprep.subr.bf16.mxu0 %v760
        %3063 = vmatpush1.bf16.msra.mxu0 %v759
        %3064 = vmatprep.subr.bf16.mxu0 %v821
        %3065 = vmatpush1.bf16.msra.mxu0 %v820
        %3066 = vmatprep.subr.bf16.mxu0 %v829
        %3067 = vmatpush1.bf16.msra.mxu0 %v828
        %3068 = vmatprep.subr.bf16.mxu0 %v890
        %3069 = vmatpush1.bf16.msra.mxu0 %v889
        %3070 = vmatprep.subr.bf16.mxu0 %v898
        %3071 = vmatpush1.bf16.msra.mxu0 %v897
        %3072 = vmatprep.mubr.bf16.mxu0 %v2680
        %3073 = vmatmul.mubr.bf16.gmra.mrb[0].mxu0 %v2679
        %v3074 = vpop.f32.mrb[0].mxu0
        %v3075 = vadd.f32 %v2650, %v3074
        %v3076 = vpop.f32.mrb[0].mxu0
        %v3077 = vadd.f32 %v2650, %v3076
        %v3078 = vpop.f32.mrb[0].mxu0
        %v3079 = vadd.f32 %v2655, %v3078
        %v3080 = vpop.f32.mrb[0].mxu0
        %v3081 = vadd.f32 %v2655, %v3080
        %3082 = vdwg.mxu0
        %3083 = vmatprep.subr.bf16.mxu0 %v959
        %3084 = vmatpush1.bf16.msra.mxu0 %v958
        %3085 = vmatprep.subr.bf16.mxu0 %v967
        %3086 = vmatpush1.bf16.msra.mxu0 %v966
        %3087 = vmatprep.subr.bf16.mxu0 %v1028
        %3088 = vmatpush1.bf16.msra.mxu0 %v1027
        %3089 = vmatprep.subr.bf16.mxu0 %v1036
        %3090 = vmatpush1.bf16.msra.mxu0 %v1035
        %3091 = vmatprep.subr.bf16.mxu0 %v1097
        %3092 = vmatpush1.bf16.msra.mxu0 %v1096
        %3093 = vmatprep.subr.bf16.mxu0 %v1105
        %3094 = vmatpush1.bf16.msra.mxu0 %v1104
        %3095 = vmatprep.subr.bf16.mxu0 %v1166
        %3096 = vmatpush1.bf16.msra.mxu0 %v1165
        %3097 = vmatprep.subr.bf16.mxu0 %v1174
        %3098 = vmatpush1.bf16.msra.mxu0 %v1173
        %3099 = vmatprep.subr.bf16.mxu0 %v1235
        %3100 = vmatpush1.bf16.msra.mxu0 %v1234
        %3101 = vmatprep.subr.bf16.mxu0 %v1243
        %3102 = vmatpush1.bf16.msra.mxu0 %v1242
        %3103 = vmatprep.subr.bf16.mxu0 %v1304
        %3104 = vmatpush1.bf16.msra.mxu0 %v1303
        %3105 = vmatprep.subr.bf16.mxu0 %v1312
        %3106 = vmatpush1.bf16.msra.mxu0 %v1311
        %3107 = vmatprep.subr.bf16.mxu0 %v1373
        %3108 = vmatpush1.bf16.msra.mxu0 %v1372
        %3109 = vmatprep.subr.bf16.mxu0 %v1381
        %3110 = vmatpush1.bf16.msra.mxu0 %v1380
        %3111 = vmatprep.subr.bf16.mxu0 %v1442
        %3112 = vmatpush1.bf16.msra.mxu0 %v1441
        %3113 = vmatprep.subr.bf16.mxu0 %v1450
        %3114 = vmatpush1.bf16.msra.mxu0 %v1449
        %3115 = vmatprep.mubr.bf16.mxu0 %v2682
        %3116 = vmatmul.mubr.bf16.gmra.mrb[0].mxu0 %v2681
        %v3117 = vpop.f32.mrb[0].mxu0
        %v3118 = vadd.f32 %v3075, %v3117
        %v3119 = vpop.f32.mrb[0].mxu0
        %v3120 = vadd.f32 %v3077, %v3119
        %v3121 = vpop.f32.mrb[0].mxu0
        %v3122 = vadd.f32 %v3079, %v3121
        %v3123 = vpop.f32.mrb[0].mxu0
        %v3124 = vadd.f32 %v3081, %v3123
        %3125 = vdwg.mxu0
        %3126 = vmatprep.subr.bf16.mxu0 %v2290
        %3127 = vmatpush1.bf16.msra.mxu0 %v2289
        %3128 = vmatprep.subr.bf16.mxu0 %v2298
        %3129 = vmatpush1.bf16.msra.mxu0 %v2297
        %3130 = vmatprep.subr.bf16.mxu0 %v2306
        %3131 = vmatpush1.bf16.msra.mxu0 %v2305
        %3132 = vmatprep.subr.bf16.mxu0 %v2314
        %3133 = vmatpush1.bf16.msra.mxu0 %v2313
        %3134 = vmatprep.subr.bf16.mxu0 %v2322
        %3135 = vmatpush1.bf16.msra.mxu0 %v2321
        %3136 = vmatprep.subr.bf16.mxu0 %v2330
        %3137 = vmatpush1.bf16.msra.mxu0 %v2329
        %3138 = vmatprep.subr.bf16.mxu0 %v2338
        %3139 = vmatpush1.bf16.msra.mxu0 %v2337
        %3140 = vmatprep.subr.bf16.mxu0 %v2346
        %3141 = vmatpush1.bf16.msra.mxu0 %v2345
        %3142 = vmatprep.subr.bf16.mxu0 %v2354
        %3143 = vmatpush1.bf16.msra.mxu0 %v2353
        %3144 = vmatprep.subr.bf16.mxu0 %v2362
        %3145 = vmatpush1.bf16.msra.mxu0 %v2361
        %3146 = vmatprep.subr.bf16.mxu0 %v2370
        %3147 = vmatpush1.bf16.msra.mxu0 %v2369
        %3148 = vmatprep.subr.bf16.mxu0 %v2378
        %3149 = vmatpush1.bf16.msra.mxu0 %v2377
        %3150 = vmatprep.subr.bf16.mxu0 %v2386
        %3151 = vmatpush1.bf16.msra.mxu0 %v2385
        %3152 = vmatprep.subr.bf16.mxu0 %v2394
        %3153 = vmatpush1.bf16.msra.mxu0 %v2393
        %3154 = vmatprep.subr.bf16.mxu0 %v2402
        %3155 = vmatpush1.bf16.msra.mxu0 %v2401
        %3156 = vmatprep.subr.bf16.mxu0 %v2410
        %3157 = vmatpush1.bf16.msra.mxu0 %v2409
        %3158 = vmatprep.mubr.bf16.mxu0 %v2684
        %3159 = vmatmul.mubr.bf16.gmra.mrb[0].mxu0 %v2683
        %v3160 = vpop.f32.mrb[0].mxu0
        %v3161 = vadd.f32 %v3118, %v3160
        %v3162 = vpop.f32.mrb[0].mxu0
        %v3163 = vadd.f32 %v3120, %v3162
        %v3164 = vpop.f32.mrb[0].mxu0
        %v3165 = vadd.f32 %v3122, %v3164
        %v3166 = vpop.f32.mrb[0].mxu0
        %v3167 = vadd.f32 %v3124, %v3166
        %3168 = vdwg.mxu0
        %3169 = vmatprep.subr.bf16.mxu0 %v2418
        %3170 = vmatpush1.bf16.msra.mxu0 %v2417
        %3171 = vmatprep.subr.bf16.mxu0 %v2426
        %3172 = vmatpush1.bf16.msra.mxu0 %v2425
        %3173 = vmatprep.subr.bf16.mxu0 %v2434
        %3174 = vmatpush1.bf16.msra.mxu0 %v2433
        %3175 = vmatprep.subr.bf16.mxu0 %v2442
        %3176 = vmatpush1.bf16.msra.mxu0 %v2441
        %3177 = vmatprep.subr.bf16.mxu0 %v2450
        %3178 = vmatpush1.bf16.msra.mxu0 %v2449
        %3179 = vmatprep.subr.bf16.mxu0 %v2458
        %3180 = vmatpush1.bf16.msra.mxu0 %v2457
        %3181 = vmatprep.subr.bf16.mxu0 0
        %3182 = vmatpush1.bf16.msra.mxu0 0
        %3183 = vmatprep.subr.bf16.mxu0 0
        %3184 = vmatpush1.bf16.msra.mxu0 0
        %3185 = vmatprep.subr.bf16.mxu0 0
        %3186 = vmatpush1.bf16.msra.mxu0 0
        %3187 = vmatprep.subr.bf16.mxu0 0
        %3188 = vmatpush1.bf16.msra.mxu0 0
        %3189 = vmatprep.subr.bf16.mxu0 0
        %3190 = vmatpush1.bf16.msra.mxu0 0
        %3191 = vmatprep.subr.bf16.mxu0 0
        %3192 = vmatpush1.bf16.msra.mxu0 0
        %3193 = vmatprep.subr.bf16.mxu0 0
        %3194 = vmatpush1.bf16.msra.mxu0 0
        %3195 = vmatprep.subr.bf16.mxu0 0
        %3196 = vmatpush1.bf16.msra.mxu0 0
        %3197 = vmatprep.subr.bf16.mxu0 0
        %3198 = vmatpush1.bf16.msra.mxu0 0
        %3199 = vmatprep.subr.bf16.mxu0 0
        %3200 = vmatpush1.bf16.msra.mxu0 0
        %3201 = vmatprep.mubr.bf16.mxu0 0
        %3202 = vmatmul.mubr.bf16.gmra.mrb[0].mxu0 %v2694
        %v3203 = vpop.f32.mrb[0].mxu0
        %v3204 = vadd.f32 %v3161, %v3203
        %v3205 = vpop.f32.mrb[0].mxu0
        %v3206 = vadd.f32 %v3163, %v3205
        %v3207 = vpop.f32.mrb[0].mxu0
        %v3208 = vadd.f32 %v3165, %v3207
        %v3209 = vpop.f32.mrb[0].mxu0
        %v3210 = vadd.f32 %v3167, %v3209
        %3211 = vdwg.mxu0
        %3212 = vmatprep.subr.bf16.mxu0 %v361
        %3213 = vmatpush1.bf16.msra.mxu0 %v360
        %3214 = vmatprep.subr.bf16.mxu0 %v369
        %3215 = vmatpush1.bf16.msra.mxu0 %v368
        %3216 = vmatprep.subr.bf16.mxu0 %v478
        %3217 = vmatpush1.bf16.msra.mxu0 %v477
        %3218 = vmatprep.subr.bf16.mxu0 %v486
        %3219 = vmatpush1.bf16.msra.mxu0 %v485
        %3220 = vmatprep.subr.bf16.mxu0 %v547
        %3221 = vmatpush1.bf16.msra.mxu0 %v546
        %3222 = vmatprep.subr.bf16.mxu0 %v555
        %3223 = vmatpush1.bf16.msra.mxu0 %v554
        %3224 = vmatprep.subr.bf16.mxu0 %v616
        %3225 = vmatpush1.bf16.msra.mxu0 %v615
        %3226 = vmatprep.subr.bf16.mxu0 %v624
        %3227 = vmatpush1.bf16.msra.mxu0 %v623
        %3228 = vmatprep.subr.bf16.mxu0 %v685
        %3229 = vmatpush1.bf16.msra.mxu0 %v684
        %3230 = vmatprep.subr.bf16.mxu0 %v693
        %3231 = vmatpush1.bf16.msra.mxu0 %v692
        %3232 = vmatprep.subr.bf16.mxu0 %v754
        %3233 = vmatpush1.bf16.msra.mxu0 %v753
        %3234 = vmatprep.subr.bf16.mxu0 %v762
        %3235 = vmatpush1.bf16.msra.mxu0 %v761
        %3236 = vmatprep.subr.bf16.mxu0 %v823
        %3237 = vmatpush1.bf16.msra.mxu0 %v822
        %3238 = vmatprep.subr.bf16.mxu0 %v831
        %3239 = vmatpush1.bf16.msra.mxu0 %v830
        %3240 = vmatprep.subr.bf16.mxu0 %v892
        %3241 = vmatpush1.bf16.msra.mxu0 %v891
        %3242 = vmatprep.subr.bf16.mxu0 %v900
        %3243 = vmatpush1.bf16.msra.mxu0 %v899
        %3244 = vmatprep.mubr.bf16.mxu0 %v2680
        %3245 = vmatmul.mubr.bf16.gmra.mrb[0].mxu0 %v2679
        %v3246 = vpop.f32.mrb[0].mxu0
        %v3247 = vadd.f32 %v2650, %v3246
        %v3248 = vpop.f32.mrb[0].mxu0
        %v3249 = vadd.f32 %v2650, %v3248
        %v3250 = vpop.f32.mrb[0].mxu0
        %v3251 = vadd.f32 %v2655, %v3250
        %v3252 = vpop.f32.mrb[0].mxu0
        %v3253 = vadd.f32 %v2655, %v3252
        %3254 = vdwg.mxu0
        %3255 = vmatprep.subr.bf16.mxu0 %v961
        %3256 = vmatpush1.bf16.msra.mxu0 %v960
        %3257 = vmatprep.subr.bf16.mxu0 %v969
        %3258 = vmatpush1.bf16.msra.mxu0 %v968
        %3259 = vmatprep.subr.bf16.mxu0 %v1030
        %3260 = vmatpush1.bf16.msra.mxu0 %v1029
        %3261 = vmatprep.subr.bf16.mxu0 %v1038
        %3262 = vmatpush1.bf16.msra.mxu0 %v1037
        %3263 = vmatprep.subr.bf16.mxu0 %v1099
        %3264 = vmatpush1.bf16.msra.mxu0 %v1098
        %3265 = vmatprep.subr.bf16.mxu0 %v1107
        %3266 = vmatpush1.bf16.msra.mxu0 %v1106
        %3267 = vmatprep.subr.bf16.mxu0 %v1168
        %3268 = vmatpush1.bf16.msra.mxu0 %v1167
        %3269 = vmatprep.subr.bf16.mxu0 %v1176
        %3270 = vmatpush1.bf16.msra.mxu0 %v1175
        %3271 = vmatprep.subr.bf16.mxu0 %v1237
        %3272 = vmatpush1.bf16.msra.mxu0 %v1236
        %3273 = vmatprep.subr.bf16.mxu0 %v1245
        %3274 = vmatpush1.bf16.msra.mxu0 %v1244
        %3275 = vmatprep.subr.bf16.mxu0 %v1306
        %3276 = vmatpush1.bf16.msra.mxu0 %v1305
        %3277 = vmatprep.subr.bf16.mxu0 %v1314
        %3278 = vmatpush1.bf16.msra.mxu0 %v1313
        %3279 = vmatprep.subr.bf16.mxu0 %v1375
        %3280 = vmatpush1.bf16.msra.mxu0 %v1374
        %3281 = vmatprep.subr.bf16.mxu0 %v1383
        %3282 = vmatpush1.bf16.msra.mxu0 %v1382
        %3283 = vmatprep.subr.bf16.mxu0 %v1444
        %3284 = vmatpush1.bf16.msra.mxu0 %v1443
        %3285 = vmatprep.subr.bf16.mxu0 %v1452
        %3286 = vmatpush1.bf16.msra.mxu0 %v1451
        %3287 = vmatprep.mubr.bf16.mxu0 %v2682
        %3288 = vmatmul.mubr.bf16.gmra.mrb[0].mxu0 %v2681
        %v3289 = vpop.f32.mrb[0].mxu0
        %v3290 = vadd.f32 %v3247, %v3289
        %v3291 = vpop.f32.mrb[0].mxu0
        %v3292 = vadd.f32 %v3249, %v3291
        %v3293 = vpop.f32.mrb[0].mxu0
        %v3294 = vadd.f32 %v3251, %v3293
        %v3295 = vpop.f32.mrb[0].mxu0
        %v3296 = vadd.f32 %v3253, %v3295
        %3297 = vdwg.mxu0
        %3298 = vmatprep.subr.bf16.mxu0 %v2292
        %3299 = vmatpush1.bf16.msra.mxu0 %v2291
        %3300 = vmatprep.subr.bf16.mxu0 %v2300
        %3301 = vmatpush1.bf16.msra.mxu0 %v2299
        %3302 = vmatprep.subr.bf16.mxu0 %v2308
        %3303 = vmatpush1.bf16.msra.mxu0 %v2307
        %3304 = vmatprep.subr.bf16.mxu0 %v2316
        %3305 = vmatpush1.bf16.msra.mxu0 %v2315
        %3306 = vmatprep.subr.bf16.mxu0 %v2324
        %3307 = vmatpush1.bf16.msra.mxu0 %v2323
        %3308 = vmatprep.subr.bf16.mxu0 %v2332
        %3309 = vmatpush1.bf16.msra.mxu0 %v2331
        %3310 = vmatprep.subr.bf16.mxu0 %v2340
        %3311 = vmatpush1.bf16.msra.mxu0 %v2339
        %3312 = vmatprep.subr.bf16.mxu0 %v2348
        %3313 = vmatpush1.bf16.msra.mxu0 %v2347
        %3314 = vmatprep.subr.bf16.mxu0 %v2356
        %3315 = vmatpush1.bf16.msra.mxu0 %v2355
        %3316 = vmatprep.subr.bf16.mxu0 %v2364
        %3317 = vmatpush1.bf16.msra.mxu0 %v2363
        %3318 = vmatprep.subr.bf16.mxu0 %v2372
        %3319 = vmatpush1.bf16.msra.mxu0 %v2371
        %3320 = vmatprep.subr.bf16.mxu0 %v2380
        %3321 = vmatpush1.bf16.msra.mxu0 %v2379
        %3322 = vmatprep.subr.bf16.mxu0 %v2388
        %3323 = vmatpush1.bf16.msra.mxu0 %v2387
        %3324 = vmatprep.subr.bf16.mxu0 %v2396
        %3325 = vmatpush1.bf16.msra.mxu0 %v2395
        %3326 = vmatprep.subr.bf16.mxu0 %v2404
        %3327 = vmatpush1.bf16.msra.mxu0 %v2403
        %3328 = vmatprep.subr.bf16.mxu0 %v2412
        %3329 = vmatpush1.bf16.msra.mxu0 %v2411
        %3330 = vmatprep.mubr.bf16.mxu0 %v2684
        %3331 = vmatmul.mubr.bf16.gmra.mrb[0].mxu0 %v2683
        %v3332 = vpop.f32.mrb[0].mxu0
        %v3333 = vadd.f32 %v3290, %v3332
        %v3334 = vpop.f32.mrb[0].mxu0
        %v3335 = vadd.f32 %v3292, %v3334
        %v3336 = vpop.f32.mrb[0].mxu0
        %v3337 = vadd.f32 %v3294, %v3336
        %v3338 = vpop.f32.mrb[0].mxu0
        %v3339 = vadd.f32 %v3296, %v3338
        %3340 = vdwg.mxu0
        %3341 = vmatprep.subr.bf16.mxu0 %v2420
        %3342 = vmatpush1.bf16.msra.mxu0 %v2419
        %3343 = vmatprep.subr.bf16.mxu0 %v2428
        %3344 = vmatpush1.bf16.msra.mxu0 %v2427
        %3345 = vmatprep.subr.bf16.mxu0 %v2436
        %3346 = vmatpush1.bf16.msra.mxu0 %v2435
        %3347 = vmatprep.subr.bf16.mxu0 %v2444
        %3348 = vmatpush1.bf16.msra.mxu0 %v2443
        %3349 = vmatprep.subr.bf16.mxu0 %v2452
        %3350 = vmatpush1.bf16.msra.mxu0 %v2451
        %3351 = vmatprep.subr.bf16.mxu0 %v2460
        %3352 = vmatpush1.bf16.msra.mxu0 %v2459
        %3353 = vmatprep.subr.bf16.mxu0 0
        %3354 = vmatpush1.bf16.msra.mxu0 0
        %3355 = vmatprep.subr.bf16.mxu0 0
        %3356 = vmatpush1.bf16.msra.mxu0 0
        %3357 = vmatprep.subr.bf16.mxu0 0
        %3358 = vmatpush1.bf16.msra.mxu0 0
        %3359 = vmatprep.subr.bf16.mxu0 0
        %3360 = vmatpush1.bf16.msra.mxu0 0
        %3361 = vmatprep.subr.bf16.mxu0 0
        %3362 = vmatpush1.bf16.msra.mxu0 0
        %3363 = vmatprep.subr.bf16.mxu0 0
        %3364 = vmatpush1.bf16.msra.mxu0 0
        %3365 = vmatprep.subr.bf16.mxu0 0
        %3366 = vmatpush1.bf16.msra.mxu0 0
        %3367 = vmatprep.subr.bf16.mxu0 0
        %3368 = vmatpush1.bf16.msra.mxu0 0
        %3369 = vmatprep.subr.bf16.mxu0 0
        %3370 = vmatpush1.bf16.msra.mxu0 0
        %3371 = vmatprep.subr.bf16.mxu0 0
        %3372 = vmatpush1.bf16.msra.mxu0 0
        %3373 = vmatprep.mubr.bf16.mxu0 0
        %3374 = vmatmul.mubr.bf16.gmra.mrb[0].mxu0 %v2694
        %v3375 = vpop.f32.mrb[0].mxu0
        %v3376 = vadd.f32 %v3333, %v3375
        %v3377 = vpop.f32.mrb[0].mxu0
        %v3378 = vadd.f32 %v3335, %v3377
        %v3379 = vpop.f32.mrb[0].mxu0
        %v3380 = vadd.f32 %v3337, %v3379
        %v3381 = vpop.f32.mrb[0].mxu0
        %v3382 = vadd.f32 %v3339, %v3381
        %3383 = vdwg.mxu0
        %v3384 = vmax.f32 %v2860, 0.0
        %v3385 = vmax.f32 %v2862, 0.0
        %v3386 = vmax.f32 %v3032, 0.0
        %v3387 = vmax.f32 %v3034, 0.0
        %v3388 = vmax.f32 %v3204, 0.0
        %v3389 = vmax.f32 %v3206, 0.0
        %v3390 = vmax.f32 %v3376, 0.0
        %v3391 = vmax.f32 %v3378, 0.0
        %v3392 = vmax.f32 %v2864, 0.0
        %v3393 = vmax.f32 %v2866, 0.0
        %v3394 = vmax.f32 %v3036, 0.0
        %v3395 = vmax.f32 %v3038, 0.0
        %v3396 = vmax.f32 %v3208, 0.0
        %v3397 = vmax.f32 %v3210, 0.0
        %v3398 = vmax.f32 %v3380, 0.0
        %v3399 = vmax.f32 %v3382, 0.0
        %v3400 = vpack.c.bf16 %v3392, %v3384
        %v3401 = vpack.c.bf16 %v3393, %v3385
        %v3402 = vpack.c.bf16 %v3394, %v3386
        %v3403 = vpack.c.bf16 %v3395, %v3387
        %v3404 = vpack.c.bf16 %v3396, %v3388
        %v3405 = vpack.c.bf16 %v3397, %v3389
        %v3406 = vpack.c.bf16 %v3398, %v3390
        %v3407 = vpack.c.bf16 %v3399, %v3391
        %v3416 = vunpack.c.l.b16 %v3400
        %v3417 = vunpack.c.l.b16 %v3401
        %v3418 = vunpack.c.l.b16 %v3402
        %v3419 = vunpack.c.l.b16 %v3403
        %v3420 = vunpack.c.l.b16 %v3404
        %v3421 = vunpack.c.l.b16 %v3405
        %v3422 = vunpack.c.l.b16 %v3406
        %v3423 = vunpack.c.l.b16 %v3407
        %v3424 = vunpack.c.h.b16 %v3400
        %v3425 = vunpack.c.h.b16 %v3401
        %v3426 = vunpack.c.h.b16 %v3402
        %v3427 = vunpack.c.h.b16 %v3403
        %v3428 = vunpack.c.h.b16 %v3404
        %v3429 = vunpack.c.h.b16 %v3405
        %v3430 = vunpack.c.h.b16 %v3406
        %v3431 = vunpack.c.h.b16 %v3407
        %v3432 = vpack.c.b16 %v3417, %v3416
        %v3433 = vpack.c.b16 %v3419, %v3418
        %v3434 = vpack.c.b16 %v3421, %v3420
        %v3435 = vpack.c.b16 %v3423, %v3422
        %v3436 = vpack.c.b16 %v3425, %v3424
        %v3437 = vpack.c.b16 %v3427, %v3426
        %v3438 = vpack.c.b16 %v3429, %v3428
        %v3439 = vpack.c.b16 %v3431, %v3430
        %3448 = vst [vmem:[%s272] sm:$0xff] %v3432
        %3449 = vst [vmem:[%s272 + $0x8] sm:$0xff] %v3433
        %3450 = vst [vmem:[%s272 + $0x10] sm:$0xff] %v3434
        %3451 = vst [vmem:[%s272 + $0x18] sm:$0xff] %v3435
        %3452 = vst [vmem:[%s272 + $0x20] sm:$0xff] %v3436
        %3453 = vst [vmem:[%s272 + $0x28] sm:$0xff] %v3437
        %3454 = vst [vmem:[%s272 + $0x30] sm:$0xff] %v3438
        %3455 = vst [vmem:[%s272 + $0x38] sm:$0xff] %v3439
        %s3456 = sand.u32 %s128, 1
        %s3457 = scalar_lea.sflag [#allocation4], %s3456
        %s3458 = sand.u32 %s128, 1
        %s3459 = smul.addr %s3458, 64
        %s3460 = scalar_lea.vmem [#allocation8], %s3459
        // Predicated region
        $region49: #{tpu_custom_call.1} parent=35 // pred_check
          %p3461 = pneg %p138
        $region50: #{tpu_custom_call.1} parent=35 // pred_check_branch
          %3463 = sbr.rel (%p3461) target = $region52
        $region51: #{tpu_custom_call.1} parent=35 // pred_region
          %s3464 = smul.u32 8, %s24
          %s3466 = ssub.s32 1024, 1024
          %3467 = vsyncadd %s3457, %s3466
          %s3468 = smul.addr %s3464, 64
          %s3469 = scalar_lea.hbm %s4, %s3468
          %s3470 = sshll.u32 %s3460, 4
          %s3471 = int_to_ptr.vmem [resolvable:$true] %s3470
          %3476 = dma.vmem_to_hbm [thread:$0]  %s3471, 1024, %s3469, %s3457, 512, 2560, 32
        $region52: #{tpu_custom_call.1} parent=35 // pred_fallthru
          _
      $region36: #{tpu_custom_call.1} parent=5 // pred_fallthru
        _
      %p3477 = scmp.le.s32.totalorder 2, %s19
      // Predicated region
      $region53: #{tpu_custom_call.1} parent=5 // pred_check
        %p3478 = pneg %p3477
      $region54: #{tpu_custom_call.1} parent=5 // pred_check_branch
        %3480 = sbr.rel (%p3478) target = $region56
      $region55: #{tpu_custom_call.1} parent=5 // pred_region
        %s3481 = ssub.s32 %s19, 2
        // Predicated region
        $region57: #{tpu_custom_call.1} parent=55 // pred_check
          %p3482 = pneg %p144
        $region58: #{tpu_custom_call.1} parent=55 // pred_check_branch
          %3484 = sbr.rel (%p3482) target = $region60
        $region59: #{tpu_custom_call.1} parent=55 // pred_region
          %s3485 = sand.u32 %s129, 1
          %s3486 = scalar_lea.sflag [#allocation4], %s3485
          %s3487 = sand.u32 %s129, 1
          %s3488 = smul.addr %s3487, 64
          %s3489 = scalar_lea.vmem [#allocation8], %s3488
          %3490 = dma.done %s3486, 1024
        $region60: #{tpu_custom_call.1} parent=55 // pred_fallthru
          _
      $region56: #{tpu_custom_call.1} parent=5 // pred_fallthru
        _
    $region6: #{tpu_custom_call.1} parent=1 // loop_footer
      %s23 = sadd.s32 1, %s19
    $region7: #{tpu_custom_call.1} parent=1 // loop_footer_branch
      %18 = sbr.rel target = $region3
    $region8: #{tpu_custom_call.1} parent=1 // loop_exit
      _
    %3491 = vsyncpa [#allocation3], 1
    %s3492 = scalar_lea.sflag [#allocation3], 1
    %3493 = vsyncpa %s3492, 1
    %3494 = vsyncpa [#allocation6], 1
    %s3495 = scalar_lea.sflag [#allocation6], 1
    %3496 = vsyncpa %s3495, 1
    %3497 = vsyncpa [#allocation4], 1
    %s3498 = scalar_lea.sflag [#allocation4], 1
    %3499 = vsyncpa %s3498, 1

</llo_original>
